<compile_context>
chip_gen: v5e
topology: v5e:2x2
jax: 0.10.0
libtpu: 0.0.40
codegen_flags: <defaults>
</compile_context>

<pallas_src>
from typing import Dict, Tuple

import jax
import jax.numpy as jnp
from jax.experimental import pallas as pl
from jax.experimental.pallas import tpu as pltpu

LANE = 128  # TPU lane width; output channels are padded to this for dense stores.


# ----------------------------------------------------------------------------
# Pallas kernel: fused 3x3 / stride-2 / pad-1 conv + bias + ReLU for one image
# ----------------------------------------------------------------------------
def _conv3x3_s2_bias_relu_kernel(p00, p01, p10, p11, w_ref, b_ref, o_ref):
    """One batch element per grid step.

    p{i}{j}: (1, Hout+1, Wout+1, Cin) bf16 parity plane of the padded input,
             p[i][j][n, r, s, c] == x_pad[n, 2r+i, 2s+j, c].
    w_ref  : (9, Cin, 128) bf16, tap-major (kh*3+kw), Cout zero-padded to 128.
    b_ref  : (1, 128) f32 bias (zero-padded).
    o_ref  : (1, Hout*Wout, 128) output (lane-dense).
    """
    Hout = p00.shape[1] - 1
    Wout = p00.shape[2] - 1
    Cin = w_ref.shape[1]
    M2 = Hout * Wout
    planes = (p00, p01, p10, p11)

    acc = jnp.zeros((M2, LANE), jnp.float32)
    # out[r, s] needs x_pad[2r+kh, 2s+kw] == planes[kh%2][kw%2][r+kh//2, s+kw//2]
    for kh in range(3):
        for kw in range(3):
            pref = planes[(kh % 2) * 2 + (kw % 2)]
            dh, dw = kh // 2, kw // 2
            tap = pref[0, dh:dh + Hout, dw:dw + Wout, :].reshape(M2, Cin)
            acc = acc + jnp.dot(tap, w_ref[kh * 3 + kw],
                                preferred_element_type=jnp.float32)
    acc = jnp.maximum(acc + b_ref[...], 0.0)
    o_ref[0] = acc.astype(o_ref.dtype)


# ----------------------------------------------------------------------------
# Wrappers
# ----------------------------------------------------------------------------
def conv2d_3x3_s2_bias_relu(x_nhwc: jnp.ndarray, w: jnp.ndarray, b: jnp.ndarray,
                            *, out_dtype=jnp.bfloat16) -> jnp.ndarray:
    """3x3 conv, stride 2, pad 1, + bias + ReLU. x: (N,H,W,Cin), w: (3,3,Cin,Cout)."""
    N, H, W, Cin = x_nhwc.shape
    KH, KW, _, Cout = w.shape
    assert (KH, KW) == (3, 3) and H % 2 == 0 and W % 2 == 0
    assert Cout <= LANE
    Hout, Wout = H // 2, W // 2
    M2 = Hout * Wout

    # Parity (space-to-depth) split of the zero-padded input: each of the 9
    # taps becomes a contiguous window of one plane, so the im2col is fused
    # into the kernel (~1x input bytes instead of a 9-wide patch slab).
    xp = jnp.pad(x_nhwc.astype(jnp.bfloat16), ((0, 0), (1, 1), (1, 1), (0, 0)))
    p00 = xp[:, 0::2, 0::2, :]
    p01 = xp[:, 0::2, 1::2, :]
    p10 = xp[:, 1::2, 0::2, :]
    p11 = xp[:, 1::2, 1::2, :]          # each (N, Hout+1, Wout+1, Cin)

    # Lane-dense weights / bias: pad Cout to 128 so every output store is a
    # full unmasked vst; real channels are sliced off outside the kernel.
    wk = jnp.pad(w.reshape(9, Cin, Cout).astype(jnp.bfloat16),
                 ((0, 0), (0, 0), (0, LANE - Cout)))
    bk = jnp.pad(b.reshape(1, Cout).astype(jnp.float32),
                 ((0, 0), (0, LANE - Cout)))

    # TODO(synk): grid is over batch only (whole image per step) -- ample at
    # these small demo shapes; DETR-scale inputs would need a row-tiled grid
    # (halo rows via manual DMA) to stay inside per-core VMEM on v7x.
    plane_spec = pl.BlockSpec((1, Hout + 1, Wout + 1, Cin), lambda n: (n, 0, 0, 0))

    out = pl.pallas_call(
        _conv3x3_s2_bias_relu_kernel,
        out_shape=jax.ShapeDtypeStruct((N, M2, LANE), out_dtype),
        grid=(N,),
        in_specs=[plane_spec, plane_spec, plane_spec, plane_spec,
                  pl.BlockSpec((9, Cin, LANE), lambda n: (0, 0, 0)),
                  pl.BlockSpec((1, LANE), lambda n: (0, 0))],
        out_specs=pl.BlockSpec((1, M2, LANE), lambda n: (n, 0, 0)),
        compiler_params=pltpu.CompilerParams(
            dimension_semantics=("parallel",),
            vmem_limit_bytes=32 * 1024 * 1024),
    )(p00, p01, p10, p11, wk, bk)

    return out[:, :, :Cout].reshape(N, Hout, Wout, Cout)


def interpolate_mask_nearest(mask_bool: jnp.ndarray, hf: int, wf: int) -> jnp.ndarray:
    """F.interpolate(m[None].float(), size=(hf,wf), mode='nearest').to(bool)[0].

    Nearest-neighbour resize of a 0/1 mask is a pure gather; per the perf
    review this is plain-JAX indexing (no kernel launch / MXU matmuls needed).
    """
    N, H, W = mask_bool.shape
    rows = (jnp.arange(hf) * H) // hf      # exact integer floor(i * H / hf)
    cols = (jnp.arange(wf) * W) // wf
    return mask_bool[:, rows][:, :, cols]


# ----------------------------------------------------------------------------
# BackboneBase equivalent
# ----------------------------------------------------------------------------
class BackboneBasePallas:
    """Synthetic backbone + mask-interpolation, mirroring BackboneBase.forward."""

    def __init__(self, key, return_interm_layers: bool = False):
        # channel plan: 3 -> 8 -> 16 -> 32 -> 64, each stage stride 2
        chans = [3, 8, 16, 32, 64]
        self.weights = []
        self.biases = []
        for li in range(4):
            key, kw, kb = jax.random.split(key, 3)
            cin, cout = chans[li], chans[li + 1]
            self.weights.append(
                jax.random.normal(kw, (3, 3, cin, cout), jnp.float32) * 0.1)
            self.biases.append(
                jax.random.normal(kb, (cout,), jnp.float32) * 0.01)
        if return_interm_layers:
            self.return_layers = {"layer1": "0", "layer2": "1", "layer3": "2", "layer4": "3"}
        else:
            self.return_layers = {"layer4": "0"}
        self.num_channels = chans[-1]
        # requires_grad_(False) freezing is training-time only; nothing to do
        # for a forward-only Pallas implementation.

    def __call__(self, tensors_nchw: jnp.ndarray, mask: jnp.ndarray
                 ) -> Dict[str, Tuple[jnp.ndarray, jnp.ndarray]]:
        # PyTorch input is NCHW; convert to NHWC once for the kernels and keep
        # feature maps NHWC/bf16 between layers (no per-layer relayouts).
        x = jnp.transpose(tensors_nchw, (0, 2, 3, 1))
        feats = {}
        for li, name in enumerate(["layer1", "layer2", "layer3", "layer4"]):
            x = conv2d_3x3_s2_bias_relu(x, self.weights[li], self.biases[li])
            if name in self.return_layers:
                feats[self.return_layers[name]] = x

        out: Dict[str, Tuple[jnp.ndarray, jnp.ndarray]] = {}
        for name, f in feats.items():
            hf, wf = f.shape[1], f.shape[2]
            m = interpolate_mask_nearest(mask, hf, wf)
            # Only returned maps are transposed back to NCHW (f32) to match
            # the PyTorch module's convention.
            out[name] = (jnp.transpose(f, (0, 3, 1, 2)).astype(jnp.float32), m)
        return out


# ----------------------------------------------------------------------------
if __name__ == "__main__":
    key = jax.random.PRNGKey(0)
    key, k_img = jax.random.split(key)

    N, C, H, W = 2, 3, 32, 32
    tensors = jax.random.normal(k_img, (N, C, H, W), jnp.float32)
    # padding mask: True where padded (right-side padding, different per image)
    col = jnp.arange(W)[None, None, :]                      # (1, 1, W)
    valid = jnp.array([28, 20], jnp.int32)[:, None, None]   # (N, 1, 1)
    mask = jnp.broadcast_to(col >= valid, (N, H, W))        # (N, H, W) bool

    backbone = BackboneBasePallas(key, return_interm_layers=False)
    out = backbone(tensors, mask)

    for name, (feat, msk) in out.items():
        jax.block_until_ready(feat)
        jax.block_until_ready(msk)
        assert feat.shape == (N, backbone.num_channels, 2, 2), feat.shape
        assert msk.shape == (N, 2, 2) and msk.dtype == jnp.bool_, (msk.shape, msk.dtype)

    print("KERNEL_OK")
</pallas_src>

<mosaic_0001>
module attributes {stable_mosaic.version = 11 : i64} {
  func.func @_conv3x3_s2_bias_relu_kernel(%arg0: i32, %arg1: memref<1x17x17x3xbf16, #tpu.memory_space<vmem>>, %arg2: memref<1x17x17x3xbf16, #tpu.memory_space<vmem>>, %arg3: memref<1x17x17x3xbf16, #tpu.memory_space<vmem>>, %arg4: memref<1x17x17x3xbf16, #tpu.memory_space<vmem>>, %arg5: memref<9x3x128xbf16, #tpu.memory_space<vmem>>, %arg6: memref<1x128xf32, #tpu.memory_space<vmem>>, %arg7: memref<1x256x128xbf16, #tpu.memory_space<vmem>>) attributes {dimension_semantics = [#tpu.dimension_semantics<parallel>], iteration_bounds = array<i64: 2>, scalar_prefetch = 0 : i64, scratch_operands = 0 : i64, tpu.core_type = #tpu.core_type<tc>, window_params = [{transform_indices = @transform_0, window_bounds = array<i64: 1, 17, 17, 3>}, {transform_indices = @transform_1, window_bounds = array<i64: 1, 17, 17, 3>}, {transform_indices = @transform_2, window_bounds = array<i64: 1, 17, 17, 3>}, {transform_indices = @transform_3, window_bounds = array<i64: 1, 17, 17, 3>}, {pipeline_mode = #tpu.pipeline_mode<synchronous>, transform_indices = @transform_4, window_bounds = array<i64: 9, 3, 128>}, {pipeline_mode = #tpu.pipeline_mode<synchronous>, transform_indices = @transform_5, window_bounds = array<i64: 1, 128>}, {transform_indices = @transform_6, window_bounds = array<i64: 1, 256, 128>}]} {
    %cst = arith.constant 0.000000e+00 : f32
    %0 = vector.broadcast %cst : f32 to vector<256x128xf32>
    %c0 = arith.constant 0 : index
    %c0_0 = arith.constant 0 : index
    %c0_1 = arith.constant 0 : index
    %c0_2 = arith.constant 0 : index
    %1 = vector.load %arg1[%c0, %c0_0, %c0_1, %c0_2] : memref<1x17x17x3xbf16, #tpu.memory_space<vmem>>, vector<1x16x16x3xbf16>
    %2 = vector.shape_cast %1 : vector<1x16x16x3xbf16> to vector<16x16x3xbf16>
    %3 = vector.shape_cast %2 : vector<16x16x3xbf16> to vector<256x3xbf16>
    %c0_3 = arith.constant 0 : index
    %c0_4 = arith.constant 0 : index
    %c0_5 = arith.constant 0 : index
    %4 = vector.load %arg5[%c0_3, %c0_4, %c0_5] : memref<9x3x128xbf16, #tpu.memory_space<vmem>>, vector<1x3x128xbf16>
    %5 = vector.shape_cast %4 : vector<1x3x128xbf16> to vector<3x128xbf16>
    %cst_6 = arith.constant dense<0.000000e+00> : vector<256x128xf32>
    %6 = tpu.matmul %3, %5, %cst_6 {dimension_numbers = #tpu.dot_dimension_numbers<[1], [0], [0], [1], [0, 0, 1, 1], [], []>} : vector<256x3xbf16>, vector<3x128xbf16>, vector<256x128xf32> -> vector<256x128xf32>
    %7 = arith.addf %0, %6 : vector<256x128xf32>
    %c0_7 = arith.constant 0 : index
    %c0_8 = arith.constant 0 : index
    %c0_9 = arith.constant 0 : index
    %c0_10 = arith.constant 0 : index
    %8 = vector.load %arg2[%c0_7, %c0_8, %c0_9, %c0_10] : memref<1x17x17x3xbf16, #tpu.memory_space<vmem>>, vector<1x16x16x3xbf16>
    %9 = vector.shape_cast %8 : vector<1x16x16x3xbf16> to vector<16x16x3xbf16>
    %10 = vector.shape_cast %9 : vector<16x16x3xbf16> to vector<256x3xbf16>
    %c1 = arith.constant 1 : index
    %c0_11 = arith.constant 0 : index
    %c0_12 = arith.constant 0 : index
    %11 = vector.load %arg5[%c1, %c0_11, %c0_12] : memref<9x3x128xbf16, #tpu.memory_space<vmem>>, vector<1x3x128xbf16>
    %12 = vector.shape_cast %11 : vector<1x3x128xbf16> to vector<3x128xbf16>
    %cst_13 = arith.constant dense<0.000000e+00> : vector<256x128xf32>
    %13 = tpu.matmul %10, %12, %cst_13 {dimension_numbers = #tpu.dot_dimension_numbers<[1], [0], [0], [1], [0, 0, 1, 1], [], []>} : vector<256x3xbf16>, vector<3x128xbf16>, vector<256x128xf32> -> vector<256x128xf32>
    %14 = arith.addf %7, %13 : vector<256x128xf32>
    %c0_14 = arith.constant 0 : index
    %c0_15 = arith.constant 0 : index
    %c1_16 = arith.constant 1 : index
    %c0_17 = arith.constant 0 : index
    %15 = vector.load %arg1[%c0_14, %c0_15, %c1_16, %c0_17] : memref<1x17x17x3xbf16, #tpu.memory_space<vmem>>, vector<1x16x16x3xbf16>
    %16 = vector.shape_cast %15 : vector<1x16x16x3xbf16> to vector<16x16x3xbf16>
    %17 = vector.shape_cast %16 : vector<16x16x3xbf16> to vector<256x3xbf16>
    %c2 = arith.constant 2 : index
    %c0_18 = arith.constant 0 : index
    %c0_19 = arith.constant 0 : index
    %18 = vector.load %arg5[%c2, %c0_18, %c0_19] : memref<9x3x128xbf16, #tpu.memory_space<vmem>>, vector<1x3x128xbf16>
    %19 = vector.shape_cast %18 : vector<1x3x128xbf16> to vector<3x128xbf16>
    %cst_20 = arith.constant dense<0.000000e+00> : vector<256x128xf32>
    %20 = tpu.matmul %17, %19, %cst_20 {dimension_numbers = #tpu.dot_dimension_numbers<[1], [0], [0], [1], [0, 0, 1, 1], [], []>} : vector<256x3xbf16>, vector<3x128xbf16>, vector<256x128xf32> -> vector<256x128xf32>
    %21 = arith.addf %14, %20 : vector<256x128xf32>
    %c0_21 = arith.constant 0 : index
    %c0_22 = arith.constant 0 : index
    %c0_23 = arith.constant 0 : index
    %c0_24 = arith.constant 0 : index
    %22 = vector.load %arg3[%c0_21, %c0_22, %c0_23, %c0_24] : memref<1x17x17x3xbf16, #tpu.memory_space<vmem>>, vector<1x16x16x3xbf16>
    %23 = vector.shape_cast %22 : vector<1x16x16x3xbf16> to vector<16x16x3xbf16>
    %24 = vector.shape_cast %23 : vector<16x16x3xbf16> to vector<256x3xbf16>
    %c3 = arith.constant 3 : index
    %c0_25 = arith.constant 0 : index
    %c0_26 = arith.constant 0 : index
    %25 = vector.load %arg5[%c3, %c0_25, %c0_26] : memref<9x3x128xbf16, #tpu.memory_space<vmem>>, vector<1x3x128xbf16>
    %26 = vector.shape_cast %25 : vector<1x3x128xbf16> to vector<3x128xbf16>
    %cst_27 = arith.constant dense<0.000000e+00> : vector<256x128xf32>
    %27 = tpu.matmul %24, %26, %cst_27 {dimension_numbers = #tpu.dot_dimension_numbers<[1], [0], [0], [1], [0, 0, 1, 1], [], []>} : vector<256x3xbf16>, vector<3x128xbf16>, vector<256x128xf32> -> vector<256x128xf32>
    %28 = arith.addf %21, %27 : vector<256x128xf32>
    %c0_28 = arith.constant 0 : index
    %c0_29 = arith.constant 0 : index
    %c0_30 = arith.constant 0 : index
    %c0_31 = arith.constant 0 : index
    %29 = vector.load %arg4[%c0_28, %c0_29, %c0_30, %c0_31] : memref<1x17x17x3xbf16, #tpu.memory_space<vmem>>, vector<1x16x16x3xbf16>
    %30 = vector.shape_cast %29 : vector<1x16x16x3xbf16> to vector<16x16x3xbf16>
    %31 = vector.shape_cast %30 : vector<16x16x3xbf16> to vector<256x3xbf16>
    %c4 = arith.constant 4 : index
    %c0_32 = arith.constant 0 : index
    %c0_33 = arith.constant 0 : index
    %32 = vector.load %arg5[%c4, %c0_32, %c0_33] : memref<9x3x128xbf16, #tpu.memory_space<vmem>>, vector<1x3x128xbf16>
    %33 = vector.shape_cast %32 : vector<1x3x128xbf16> to vector<3x128xbf16>
    %cst_34 = arith.constant dense<0.000000e+00> : vector<256x128xf32>
    %34 = tpu.matmul %31, %33, %cst_34 {dimension_numbers = #tpu.dot_dimension_numbers<[1], [0], [0], [1], [0, 0, 1, 1], [], []>} : vector<256x3xbf16>, vector<3x128xbf16>, vector<256x128xf32> -> vector<256x128xf32>
    %35 = arith.addf %28, %34 : vector<256x128xf32>
    %c0_35 = arith.constant 0 : index
    %c0_36 = arith.constant 0 : index
    %c1_37 = arith.constant 1 : index
    %c0_38 = arith.constant 0 : index
    %36 = vector.load %arg3[%c0_35, %c0_36, %c1_37, %c0_38] : memref<1x17x17x3xbf16, #tpu.memory_space<vmem>>, vector<1x16x16x3xbf16>
    %37 = vector.shape_cast %36 : vector<1x16x16x3xbf16> to vector<16x16x3xbf16>
    %38 = vector.shape_cast %37 : vector<16x16x3xbf16> to vector<256x3xbf16>
    %c5 = arith.constant 5 : index
    %c0_39 = arith.constant 0 : index
    %c0_40 = arith.constant 0 : index
    %39 = vector.load %arg5[%c5, %c0_39, %c0_40] : memref<9x3x128xbf16, #tpu.memory_space<vmem>>, vector<1x3x128xbf16>
    %40 = vector.shape_cast %39 : vector<1x3x128xbf16> to vector<3x128xbf16>
    %cst_41 = arith.constant dense<0.000000e+00> : vector<256x128xf32>
    %41 = tpu.matmul %38, %40, %cst_41 {dimension_numbers = #tpu.dot_dimension_numbers<[1], [0], [0], [1], [0, 0, 1, 1], [], []>} : vector<256x3xbf16>, vector<3x128xbf16>, vector<256x128xf32> -> vector<256x128xf32>
    %42 = arith.addf %35, %41 : vector<256x128xf32>
    %c0_42 = arith.constant 0 : index
    %c1_43 = arith.constant 1 : index
    %c0_44 = arith.constant 0 : index
    %c0_45 = arith.constant 0 : index
    %43 = vector.load %arg1[%c0_42, %c1_43, %c0_44, %c0_45] : memref<1x17x17x3xbf16, #tpu.memory_space<vmem>>, vector<1x16x16x3xbf16>
    %44 = vector.shape_cast %43 : vector<1x16x16x3xbf16> to vector<16x16x3xbf16>
    %45 = vector.shape_cast %44 : vector<16x16x3xbf16> to vector<256x3xbf16>
    %c6 = arith.constant 6 : index
    %c0_46 = arith.constant 0 : index
    %c0_47 = arith.constant 0 : index
    %46 = vector.load %arg5[%c6, %c0_46, %c0_47] : memref<9x3x128xbf16, #tpu.memory_space<vmem>>, vector<1x3x128xbf16>
    %47 = vector.shape_cast %46 : vector<1x3x128xbf16> to vector<3x128xbf16>
    %cst_48 = arith.constant dense<0.000000e+00> : vector<256x128xf32>
    %48 = tpu.matmul %45, %47, %cst_48 {dimension_numbers = #tpu.dot_dimension_numbers<[1], [0], [0], [1], [0, 0, 1, 1], [], []>} : vector<256x3xbf16>, vector<3x128xbf16>, vector<256x128xf32> -> vector<256x128xf32>
    %49 = arith.addf %42, %48 : vector<256x128xf32>
    %c0_49 = arith.constant 0 : index
    %c1_50 = arith.constant 1 : index
    %c0_51 = arith.constant 0 : index
    %c0_52 = arith.constant 0 : index
    %50 = vector.load %arg2[%c0_49, %c1_50, %c0_51, %c0_52] : memref<1x17x17x3xbf16, #tpu.memory_space<vmem>>, vector<1x16x16x3xbf16>
    %51 = vector.shape_cast %50 : vector<1x16x16x3xbf16> to vector<16x16x3xbf16>
    %52 = vector.shape_cast %51 : vector<16x16x3xbf16> to vector<256x3xbf16>
    %c7 = arith.constant 7 : index
    %c0_53 = arith.constant 0 : index
    %c0_54 = arith.constant 0 : index
    %53 = vector.load %arg5[%c7, %c0_53, %c0_54] : memref<9x3x128xbf16, #tpu.memory_space<vmem>>, vector<1x3x128xbf16>
    %54 = vector.shape_cast %53 : vector<1x3x128xbf16> to vector<3x128xbf16>
    %cst_55 = arith.constant dense<0.000000e+00> : vector<256x128xf32>
    %55 = tpu.matmul %52, %54, %cst_55 {dimension_numbers = #tpu.dot_dimension_numbers<[1], [0], [0], [1], [0, 0, 1, 1], [], []>} : vector<256x3xbf16>, vector<3x128xbf16>, vector<256x128xf32> -> vector<256x128xf32>
    %56 = arith.addf %49, %55 : vector<256x128xf32>
    %c0_56 = arith.constant 0 : index
    %c1_57 = arith.constant 1 : index
    %c1_58 = arith.constant 1 : index
    %c0_59 = arith.constant 0 : index
    %57 = vector.load %arg1[%c0_56, %c1_57, %c1_58, %c0_59] : memref<1x17x17x3xbf16, #tpu.memory_space<vmem>>, vector<1x16x16x3xbf16>
    %58 = vector.shape_cast %57 : vector<1x16x16x3xbf16> to vector<16x16x3xbf16>
    %59 = vector.shape_cast %58 : vector<16x16x3xbf16> to vector<256x3xbf16>
    %c8 = arith.constant 8 : index
    %c0_60 = arith.constant 0 : index
    %c0_61 = arith.constant 0 : index
    %60 = vector.load %arg5[%c8, %c0_60, %c0_61] : memref<9x3x128xbf16, #tpu.memory_space<vmem>>, vector<1x3x128xbf16>
    %61 = vector.shape_cast %60 : vector<1x3x128xbf16> to vector<3x128xbf16>
    %cst_62 = arith.constant dense<0.000000e+00> : vector<256x128xf32>
    %62 = tpu.matmul %59, %61, %cst_62 {dimension_numbers = #tpu.dot_dimension_numbers<[1], [0], [0], [1], [0, 0, 1, 1], [], []>} : vector<256x3xbf16>, vector<3x128xbf16>, vector<256x128xf32> -> vector<256x128xf32>
    %63 = arith.addf %56, %62 : vector<256x128xf32>
    %c0_63 = arith.constant 0 : index
    %c0_64 = arith.constant 0 : index
    %64 = vector.load %arg6[%c0_63, %c0_64] : memref<1x128xf32, #tpu.memory_space<vmem>>, vector<1x128xf32>
    %65 = vector.broadcast %64 : vector<1x128xf32> to vector<256x128xf32>
    %66 = arith.addf %63, %65 : vector<256x128xf32>
    %cst_65 = arith.constant 0.000000e+00 : f32
    %67 = vector.broadcast %cst_65 : f32 to vector<256x128xf32>
    %68 = arith.maximumf %66, %67 : vector<256x128xf32>
    %69 = arith.truncf %68 : vector<256x128xf32> to vector<256x128xbf16>
    %c0_66 = arith.constant 0 : index
    %c0_67 = arith.constant 0 : index
    %c0_68 = arith.constant 0 : index
    %70 = vector.load %arg7[%c0_66, %c0_67, %c0_68] : memref<1x256x128xbf16, #tpu.memory_space<vmem>>, vector<1x256x128xbf16>
    %71 = vector.shape_cast %70 : vector<1x256x128xbf16> to vector<256x128xbf16>
    %72 = vector.shape_cast %69 : vector<256x128xbf16> to vector<1x256x128xbf16>
    tpu.vector_store %arg7[%c0_66, %c0_67, %c0_68], %72 {strides = array<i32>} : memref<1x256x128xbf16, #tpu.memory_space<vmem>>, vector<1x256x128xbf16>,
    return
  }
  func.func @transform_0(%arg0: i32) -> (i32, i32, i32, i32) {
    %c0_i32 = arith.constant 0 : i32
    %c0_i32_0 = arith.constant 0 : i32
    %c0_i32_1 = arith.constant 0 : i32
    %c0_i32_2 = arith.constant 0 : i32
    return %arg0, %c0_i32, %c0_i32_0, %c0_i32_1 : i32, i32, i32, i32
  }
  func.func @transform_1(%arg0: i32) -> (i32, i32, i32, i32) {
    %c0_i32 = arith.constant 0 : i32
    %c0_i32_0 = arith.constant 0 : i32
    %c0_i32_1 = arith.constant 0 : i32
    %c0_i32_2 = arith.constant 0 : i32
    return %arg0, %c0_i32, %c0_i32_0, %c0_i32_1 : i32, i32, i32, i32
  }
  func.func @transform_2(%arg0: i32) -> (i32, i32, i32, i32) {
    %c0_i32 = arith.constant 0 : i32
    %c0_i32_0 = arith.constant 0 : i32
    %c0_i32_1 = arith.constant 0 : i32
    %c0_i32_2 = arith.constant 0 : i32
    return %arg0, %c0_i32, %c0_i32_0, %c0_i32_1 : i32, i32, i32, i32
  }
  func.func @transform_3(%arg0: i32) -> (i32, i32, i32, i32) {
    %c0_i32 = arith.constant 0 : i32
    %c0_i32_0 = arith.constant 0 : i32
    %c0_i32_1 = arith.constant 0 : i32
    %c0_i32_2 = arith.constant 0 : i32
    return %arg0, %c0_i32, %c0_i32_0, %c0_i32_1 : i32, i32, i32, i32
  }
  func.func @transform_4(%arg0: i32) -> (i32, i32, i32) {
    %c0_i32 = arith.constant 0 : i32
    %c0_i32_0 = arith.constant 0 : i32
    %c0_i32_1 = arith.constant 0 : i32
    %c0_i32_2 = arith.constant 0 : i32
    return %c0_i32, %c0_i32_0, %c0_i32_1 : i32, i32, i32
  }
  func.func @transform_5(%arg0: i32) -> (i32, i32) {
    %c0_i32 = arith.constant 0 : i32
    %c0_i32_0 = arith.constant 0 : i32
    %c0_i32_1 = arith.constant 0 : i32
    return %c0_i32, %c0_i32_0 : i32, i32
  }
  func.func @transform_6(%arg0: i32) -> (i32, i32, i32) {
    %c0_i32 = arith.constant 0 : i32
    %c0_i32_0 = arith.constant 0 : i32
    %c0_i32_1 = arith.constant 0 : i32
    return %arg0, %c0_i32, %c0_i32_0 : i32, i32, i32
  }
}

</mosaic_0001>

<llo_original>
// kernel: tpu_custom_call.1
$region0: #{tpu_custom_call.1}
  #allocation0 [shape = 'u32[]', space=smem, size = 0x4, offset = 0x4, fixed_abs, tag = 'smem constant byte address 0x4 - core index']
  #allocation1 [shape = 'u32[72,128]{1,0:T(1,128)}', space=vmem, size = 0x9000, scoped, tag = 'internal scratch']
  %s0 = inlined_call_operand.vmem [shape: bf16[2,17,17,3], index: 0, kind: input, shape index: {}]
  %s1 = inlined_call_operand.vmem [shape: bf16[2,17,17,3], index: 1, kind: input, shape index: {}]
  %s2 = inlined_call_operand.vmem [shape: bf16[2,17,17,3], index: 2, kind: input, shape index: {}]
  %s3 = inlined_call_operand.vmem [shape: bf16[2,17,17,3], index: 3, kind: input, shape index: {}]
  %s4 = inlined_call_operand.vmem [shape: bf16[9,3,128], index: 4, kind: input, shape index: {}]
  %s5 = inlined_call_operand.vmem [shape: f32[1,128], index: 5, kind: input, shape index: {}]
  %s6 = inlined_call_operand.hbm [shape: bf16[2,256,128], index: 6, kind: output, shape index: {}]
  %s7 = sld [smem:[#allocation0]]
  $region57: #{tpu_custom_call.1} parent=0
    _
  %s9 = ssub.s32 1, %s7
  %s10 = scalar_select 0, %s9, %s7
  $region1: #{tpu_custom_call.1} parent=0
    #allocation2 [shape = 'u8[131072]{0}', space=vmem, size = 0x20000, scoped, tag = 'output window, operand 0']
    #allocation3 [shape = 's32[2]{0}', space=sflag, size = 0x8, scoped, tag = 'scoped memory for tpu_custom_call.1']
    %11 = vsyncpa [#allocation3], 0
    %s12 = scalar_lea.sflag [#allocation3], 1
    %13 = vsyncpa %s12, 0
    loop: start=0, step=1, limit=4
    $region2: #{tpu_custom_call.1} parent=1 // loop_pre_header
      _
    $region3: #{tpu_custom_call.1} parent=1 // loop_header
      %s15 = sphi 0, %s19
      %p16 = scmp.ge.s32.totalorder %s15, 4
      %s25 = sphi 0, %s27
      %s28 = sphi 0, %s25
      %s29 = sphi 0, %s28
      %s45 = sphi 0, %s29
      %s51 = sphi 0, %s53
      %s54 = sphi 0, %s51
      %s55 = sphi 0, %s54
      %s71 = sphi 0, %s55
      %s77 = sphi 0, %s79
      %s80 = sphi 0, %s77
      %s81 = sphi 0, %s80
      %s97 = sphi 0, %s81
      %s103 = sphi 0, %s105
      %s106 = sphi 0, %s103
      %s107 = sphi 0, %s106
      %s123 = sphi 0, %s107
      %s127 = sphi 0, %s127
      %s129 = sphi 0, %s127
      %s130 = sphi 0, %s129
      %s144 = sphi 0, %s130
      %s148 = sphi 0, %s148
      %s150 = sphi 0, %s148
      %s151 = sphi 0, %s150
      %s165 = sphi 0, %s151
      %s171 = sphi 0, %s173
      %s174 = sphi 0, %s171
      %s175 = sphi 0, %s174
      %s191 = sphi 0, %s175
    $region4: #{tpu_custom_call.1} parent=1 // loop_header_branch
      %18 = sbr.rel (%p16) target = $region8
    $region5: #{tpu_custom_call.1} parent=1 // loop_body
      %s20 = ssub.s32 %s15, 1
      %s21 = ssub.s32 %s15, 2
      %s22 = sadd.s32 %s15, 1
      %s23 = ssub.s32 %s15, %s22
      %p24 = scmp.eq.s32.totalorder %s23, 0
      %s26 = sadd.s32 %s25, 1
      %s27 = scalar_select %p24, %s25, %s26
      %p30 = pneg %p24
      %p31 = scmp.eq.s32.totalorder %s15, 1
      %p32 = por %p30, %p31
      %p33 = scmp.ne.s32.totalorder %s25, %s28
      %p34 = scmp.eq.s32.totalorder %s15, 0
      %p35 = por %p33, %p34
      %p36 = scmp.ne.s32.totalorder %s25, %s28
      %p37 = scmp.eq.s32.totalorder %s20, 1
      %p38 = por %p36, %p37
      %p39 = scmp.ne.s32.totalorder %s28, %s29
      %p40 = scmp.eq.s32.totalorder %s20, 0
      %p41 = por %p39, %p40
      %p42 = scmp.ne.s32.totalorder %s28, %s29
      %p43 = scmp.eq.s32.totalorder %s21, 1
      %p44 = por %p42, %p43
      %p46 = scmp.ne.s32.totalorder %s29, %s45
      %p47 = scmp.eq.s32.totalorder %s21, 0
      %p48 = por %p46, %p47
      %s49 = ssub.s32 %s15, %s22
      %p50 = scmp.eq.s32.totalorder %s49, 0
      %s52 = sadd.s32 %s51, 1
      %s53 = scalar_select %p50, %s51, %s52
      %p56 = pneg %p50
      %p57 = scmp.eq.s32.totalorder %s15, 1
      %p58 = por %p56, %p57
      %p59 = scmp.ne.s32.totalorder %s51, %s54
      %p60 = scmp.eq.s32.totalorder %s15, 0
      %p61 = por %p59, %p60
      %p62 = scmp.ne.s32.totalorder %s51, %s54
      %p63 = scmp.eq.s32.totalorder %s20, 1
      %p64 = por %p62, %p63
      %p65 = scmp.ne.s32.totalorder %s54, %s55
      %p66 = scmp.eq.s32.totalorder %s20, 0
      %p67 = por %p65, %p66
      %p68 = scmp.ne.s32.totalorder %s54, %s55
      %p69 = scmp.eq.s32.totalorder %s21, 1
      %p70 = por %p68, %p69
      %p72 = scmp.ne.s32.totalorder %s55, %s71
      %p73 = scmp.eq.s32.totalorder %s21, 0
      %p74 = por %p72, %p73
      %s75 = ssub.s32 %s15, %s22
      %p76 = scmp.eq.s32.totalorder %s75, 0
      %s78 = sadd.s32 %s77, 1
      %s79 = scalar_select %p76, %s77, %s78
      %p82 = pneg %p76
      %p83 = scmp.eq.s32.totalorder %s15, 1
      %p84 = por %p82, %p83
      %p85 = scmp.ne.s32.totalorder %s77, %s80
      %p86 = scmp.eq.s32.totalorder %s15, 0
      %p87 = por %p85, %p86
      %p88 = scmp.ne.s32.totalorder %s77, %s80
      %p89 = scmp.eq.s32.totalorder %s20, 1
      %p90 = por %p88, %p89
      %p91 = scmp.ne.s32.totalorder %s80, %s81
      %p92 = scmp.eq.s32.totalorder %s20, 0
      %p93 = por %p91, %p92
      %p94 = scmp.ne.s32.totalorder %s80, %s81
      %p95 = scmp.eq.s32.totalorder %s21, 1
      %p96 = por %p94, %p95
      %p98 = scmp.ne.s32.totalorder %s81, %s97
      %p99 = scmp.eq.s32.totalorder %s21, 0
      %p100 = por %p98, %p99
      %s101 = ssub.s32 %s15, %s22
      %p102 = scmp.eq.s32.totalorder %s101, 0
      %s104 = sadd.s32 %s103, 1
      %s105 = scalar_select %p102, %s103, %s104
      %p108 = pneg %p102
      %p109 = scmp.eq.s32.totalorder %s15, 1
      %p110 = por %p108, %p109
      %p111 = scmp.ne.s32.totalorder %s103, %s106
      %p112 = scmp.eq.s32.totalorder %s15, 0
      %p113 = por %p111, %p112
      %p114 = scmp.ne.s32.totalorder %s103, %s106
      %p115 = scmp.eq.s32.totalorder %s20, 1
      %p116 = por %p114, %p115
      %p117 = scmp.ne.s32.totalorder %s106, %s107
      %p118 = scmp.eq.s32.totalorder %s20, 0
      %p119 = por %p117, %p118
      %p120 = scmp.ne.s32.totalorder %s106, %s107
      %p121 = scmp.eq.s32.totalorder %s21, 1
      %p122 = por %p120, %p121
      %p124 = scmp.ne.s32.totalorder %s107, %s123
      %p125 = scmp.eq.s32.totalorder %s21, 0
      %p126 = por %p124, %p125
      %s128 = sadd.s32 %s127, 1
      %p131 = scmp.eq.s32.totalorder %s15, 1
      %p132 = scmp.ne.s32.totalorder %s127, %s129
      %p133 = scmp.eq.s32.totalorder %s15, 0
      %p134 = por %p132, %p133
      %p135 = scmp.ne.s32.totalorder %s127, %s129
      %p136 = scmp.eq.s32.totalorder %s20, 1
      %p137 = por %p135, %p136
      %p138 = scmp.ne.s32.totalorder %s129, %s130
      %p139 = scmp.eq.s32.totalorder %s20, 0
      %p140 = por %p138, %p139
      %p141 = scmp.ne.s32.totalorder %s129, %s130
      %p142 = scmp.eq.s32.totalorder %s21, 1
      %p143 = por %p141, %p142
      %p145 = scmp.ne.s32.totalorder %s130, %s144
      %p146 = scmp.eq.s32.totalorder %s21, 0
      %p147 = por %p145, %p146
      %s149 = sadd.s32 %s148, 1
      %p152 = scmp.eq.s32.totalorder %s15, 1
      %p153 = scmp.ne.s32.totalorder %s148, %s150
      %p154 = scmp.eq.s32.totalorder %s15, 0
      %p155 = por %p153, %p154
      %p156 = scmp.ne.s32.totalorder %s148, %s150
      %p157 = scmp.eq.s32.totalorder %s20, 1
      %p158 = por %p156, %p157
      %p159 = scmp.ne.s32.totalorder %s150, %s151
      %p160 = scmp.eq.s32.totalorder %s20, 0
      %p161 = por %p159, %p160
      %p162 = scmp.ne.s32.totalorder %s150, %s151
      %p163 = scmp.eq.s32.totalorder %s21, 1
      %p164 = por %p162, %p163
      %p166 = scmp.ne.s32.totalorder %s151, %s165
      %p167 = scmp.eq.s32.totalorder %s21, 0
      %p168 = por %p166, %p167
      %s169 = ssub.s32 %s15, %s22
      %p170 = scmp.eq.s32.totalorder %s169, 0
      %s172 = sadd.s32 %s171, 1
      %s173 = scalar_select %p170, %s171, %s172
      %p176 = pneg %p170
      %p177 = scmp.eq.s32.totalorder %s15, 1
      %p178 = por %p176, %p177
      %p179 = scmp.ne.s32.totalorder %s171, %s174
      %p180 = scmp.eq.s32.totalorder %s15, 0
      %p181 = por %p179, %p180
      %p182 = scmp.ne.s32.totalorder %s171, %s174
      %p183 = scmp.eq.s32.totalorder %s20, 1
      %p184 = por %p182, %p183
      %p185 = scmp.ne.s32.totalorder %s174, %s175
      %p186 = scmp.eq.s32.totalorder %s20, 0
      %p187 = por %p185, %p186
      %p188 = scmp.ne.s32.totalorder %s174, %s175
      %p189 = scmp.eq.s32.totalorder %s21, 1
      %p190 = por %p188, %p189
      %p192 = scmp.ne.s32.totalorder %s175, %s191
      %p193 = scmp.eq.s32.totalorder %s21, 0
      %p194 = por %p192, %p193
      %p195 = scmp.le.s32.totalorder 1, %s15
      %p196 = scmp.lt.s32.totalorder %s15, 3
      %p197 = pnand %p195, %p196
      %p198 = pneg %p197
      // Predicated region
      $region9: #{tpu_custom_call.1} parent=5 // pred_check
        _
      $region10: #{tpu_custom_call.1} parent=5 // pred_check_branch
        %200 = sbr.rel (%p197) target = $region12
      $region11: #{tpu_custom_call.1} parent=5 // pred_region
        %s201 = ssub.s32 %s15, 1
        // Predicated region
        $region13: #{tpu_custom_call.1} parent=11 // pred_check
          %p202 = pneg %p140
        $region14: #{tpu_custom_call.1} parent=11 // pred_check_branch
          %204 = sbr.rel (%p202) target = $region16
        $region15: #{tpu_custom_call.1} parent=11 // pred_region
          _
        $region16: #{tpu_custom_call.1} parent=11 // pred_fallthru
          _
        // Predicated region
        $region17: #{tpu_custom_call.1} parent=11 // pred_check
          %p205 = pneg %p161
        $region18: #{tpu_custom_call.1} parent=11 // pred_check_branch
          %207 = sbr.rel (%p205) target = $region20
        $region19: #{tpu_custom_call.1} parent=11 // pred_region
          _
        $region20: #{tpu_custom_call.1} parent=11 // pred_fallthru
          _
      $region12: #{tpu_custom_call.1} parent=5 // pred_fallthru
        _
      %p208 = scmp.lt.s32.totalorder %s15, 2
      // Predicated region
      $region21: #{tpu_custom_call.1} parent=5 // pred_check
        %p209 = pneg %p208
      $region22: #{tpu_custom_call.1} parent=5 // pred_check_branch
        %211 = sbr.rel (%p209) target = $region24
      $region23: #{tpu_custom_call.1} parent=5 // pred_region
        // Predicated region
        $region25: #{tpu_custom_call.1} parent=23 // pred_check
          %p212 = pneg %p35
        $region26: #{tpu_custom_call.1} parent=23 // pred_check_branch
          %214 = sbr.rel (%p212) target = $region28
        $region27: #{tpu_custom_call.1} parent=23 // pred_region
          %p215 = scmp.lt.s32.totalorder %s15, 1
          %s216 = scalar_select %p215, %s15, 1
          %s217 = smul.addr %s216, 51
          %s218 = smul.addr %s217, 4
          %s219 = scalar_lea.vmem %s0, %s218
        $region28: #{tpu_custom_call.1} parent=23 // pred_fallthru
          _
        // Predicated region
        $region29: #{tpu_custom_call.1} parent=23 // pred_check
          %p220 = pneg %p61
        $region30: #{tpu_custom_call.1} parent=23 // pred_check_branch
          %222 = sbr.rel (%p220) target = $region32
        $region31: #{tpu_custom_call.1} parent=23 // pred_region
          %p223 = scmp.lt.s32.totalorder %s15, 1
          %s224 = scalar_select %p223, %s15, 1
          %s225 = smul.addr %s224, 51
          %s226 = smul.addr %s225, 4
          %s227 = scalar_lea.vmem %s1, %s226
        $region32: #{tpu_custom_call.1} parent=23 // pred_fallthru
          _
        // Predicated region
        $region33: #{tpu_custom_call.1} parent=23 // pred_check
          %p228 = pneg %p87
        $region34: #{tpu_custom_call.1} parent=23 // pred_check_branch
          %230 = sbr.rel (%p228) target = $region36
        $region35: #{tpu_custom_call.1} parent=23 // pred_region
          %p231 = scmp.lt.s32.totalorder %s15, 1
          %s232 = scalar_select %p231, %s15, 1
          %s233 = smul.addr %s232, 51
          %s234 = smul.addr %s233, 4
          %s235 = scalar_lea.vmem %s2, %s234
        $region36: #{tpu_custom_call.1} parent=23 // pred_fallthru
          _
        // Predicated region
        $region37: #{tpu_custom_call.1} parent=23 // pred_check
          %p236 = pneg %p113
        $region38: #{tpu_custom_call.1} parent=23 // pred_check_branch
          %238 = sbr.rel (%p236) target = $region40
        $region39: #{tpu_custom_call.1} parent=23 // pred_region
          %p239 = scmp.lt.s32.totalorder %s15, 1
          %s240 = scalar_select %p239, %s15, 1
          %s241 = smul.addr %s240, 51
          %s242 = smul.addr %s241, 4
          %s243 = scalar_lea.vmem %s3, %s242
        $region40: #{tpu_custom_call.1} parent=23 // pred_fallthru
          _
      $region24: #{tpu_custom_call.1} parent=5 // pred_fallthru
        _
      %p244 = scmp.le.s32.totalorder 1, %s15
      %p245 = scmp.lt.s32.totalorder %s15, 3
      %p246 = pnand %p244, %p245
      %p247 = pneg %p246
      // Predicated region
      $region41: #{tpu_custom_call.1} parent=5 // pred_check
        _
      $region42: #{tpu_custom_call.1} parent=5 // pred_check_branch
        %249 = sbr.rel (%p246) target = $region44
      $region43: #{tpu_custom_call.1} parent=5 // pred_region
        %s250 = ssub.s32 %s15, 1
        %p251 = scmp.lt.s32.totalorder %s20, 1
        %s252 = scalar_select %p251, %s20, 1
        %s253 = smul.addr %s252, 51
        %s254 = smul.addr %s253, 4
        %s255 = scalar_lea.vmem %s0, %s254
        %p256 = pneg %p41
        %p257 = pneg %p38
        %p258 = scmp.lt.s32.totalorder %s20, 1
        %s259 = scalar_select %p258, %s20, 1
        %s260 = smul.addr %s259, 51
        %s261 = smul.addr %s260, 4
        %s262 = scalar_lea.vmem %s1, %s261
        %p263 = pneg %p67
        %p264 = pneg %p64
        %p265 = scmp.lt.s32.totalorder %s20, 1
        %s266 = scalar_select %p265, %s20, 1
        %s267 = smul.addr %s266, 51
        %s268 = smul.addr %s267, 4
        %s269 = scalar_lea.vmem %s2, %s268
        %p270 = pneg %p93
        %p271 = pneg %p90
        %p272 = scmp.lt.s32.totalorder %s20, 1
        %s273 = scalar_select %p272, %s20, 1
        %s274 = smul.addr %s273, 51
        %s275 = smul.addr %s274, 4
        %s276 = scalar_lea.vmem %s3, %s275
        %p277 = pneg %p119
        %p278 = pneg %p116
        %p279 = pneg %p140
        %p280 = pneg %p137
        %p281 = pneg %p161
        %p282 = pneg %p158
        %p283 = pneg %p187
        %p284 = pneg %p184
        %s285 = sand.u32 %s174, 1
        %s286 = scalar_lea.sflag [#allocation3], %s285
        %s287 = sand.u32 %s174, 1
        %s288 = smul.addr %s287, 128
        %s289 = scalar_lea.vmem [#allocation2], %s288
        %p290 = scmp.lt.s32.totalorder %s20, 1
        %s291 = scalar_select %p290, %s20, 1
        %s292 = smul.addr %s291, 51
        %s293 = smul.addr %s292, 4
        %s294 = scalar_lea.vmem %s0, %s293
        %p295 = scmp.lt.s32.totalorder %s20, 1
        %s296 = scalar_select %p295, %s20, 1
        %s297 = smul.addr %s296, 51
        %s298 = smul.addr %s297, 4
        %s299 = scalar_lea.vmem %s1, %s298
        %p300 = scmp.lt.s32.totalorder %s20, 1
        %s301 = scalar_select %p300, %s20, 1
        %s302 = smul.addr %s301, 51
        %s303 = smul.addr %s302, 4
        %s304 = scalar_lea.vmem %s2, %s303
        %p305 = scmp.lt.s32.totalorder %s20, 1
        %s306 = scalar_select %p305, %s20, 1
        %s307 = smul.addr %s306, 51
        %s308 = smul.addr %s307, 4
        %s309 = scalar_lea.vmem %s3, %s308
        %v311 = vld [vmem:[%s294] sm:$0xf]
        %v312 = vld [vmem:[%s294 + $0x4] sm:$0xf]
        %v313 = vld [vmem:[%s294 + $0xc] sm:$0xf]
        %v314 = vld [vmem:[%s294 + $0x10] sm:$0xf]
        %v315 = vld [vmem:[%s294 + $0x18] sm:$0xf]
        %v316 = vld [vmem:[%s294 + $0x1c] sm:$0xf]
        %v317 = vld [vmem:[%s294 + $0x24] sm:$0xf]
        %v318 = vld [vmem:[%s294 + $0x28] sm:$0xf]
        %v319 = vld [vmem:[%s294 + $0x30] sm:$0xf]
        %v320 = vld [vmem:[%s294 + $0x34] sm:$0xf]
        %v321 = vld [vmem:[%s294 + $0x3c] sm:$0xf]
        %v322 = vld [vmem:[%s294 + $0x40] sm:$0xf]
        %v323 = vld [vmem:[%s294 + $0x48] sm:$0xf]
        %v324 = vld [vmem:[%s294 + $0x4c] sm:$0xf]
        %v325 = vld [vmem:[%s294 + $0x54] sm:$0xf]
        %v326 = vld [vmem:[%s294 + $0x58] sm:$0xf]
        %v327 = vld [vmem:[%s294 + $0x60] sm:$0xf]
        %v328 = vld [vmem:[%s294 + $0x64] sm:$0xf]
        %v329 = vld [vmem:[%s294 + $0x6c] sm:$0xf]
        %v330 = vld [vmem:[%s294 + $0x70] sm:$0xf]
        %v331 = vld [vmem:[%s294 + $0x78] sm:$0xf]
        %v332 = vld [vmem:[%s294 + $0x7c] sm:$0xf]
        %v333 = vld [vmem:[%s294 + $0x84] sm:$0xf]
        %v334 = vld [vmem:[%s294 + $0x88] sm:$0xf]
        %v335 = vld [vmem:[%s294 + $0x90] sm:$0xf]
        %v336 = vld [vmem:[%s294 + $0x94] sm:$0xf]
        %v337 = vld [vmem:[%s294 + $0x9c] sm:$0xf]
        %v338 = vld [vmem:[%s294 + $0xa0] sm:$0xf]
        %v339 = vld [vmem:[%s294 + $0xa8] sm:$0xf]
        %v340 = vld [vmem:[%s294 + $0xac] sm:$0xf]
        %v341 = vld [vmem:[%s294 + $0xb4] sm:$0xf]
        %v342 = vld [vmem:[%s294 + $0xb8] sm:$0xf]
        %v343 = vld [vmem:[%s4] sm:$0x3]
        %v344 = vld [vmem:[%s299] sm:$0xf]
        %v345 = vld [vmem:[%s299 + $0x4] sm:$0xf]
        %v346 = vld [vmem:[%s299 + $0xc] sm:$0xf]
        %v347 = vld [vmem:[%s299 + $0x10] sm:$0xf]
        %v348 = vld [vmem:[%s299 + $0x18] sm:$0xf]
        %v349 = vld [vmem:[%s299 + $0x1c] sm:$0xf]
        %v350 = vld [vmem:[%s299 + $0x24] sm:$0xf]
        %v351 = vld [vmem:[%s299 + $0x28] sm:$0xf]
        %v352 = vld [vmem:[%s299 + $0x30] sm:$0xf]
        %v353 = vld [vmem:[%s299 + $0x34] sm:$0xf]
        %v354 = vld [vmem:[%s299 + $0x3c] sm:$0xf]
        %v355 = vld [vmem:[%s299 + $0x40] sm:$0xf]
        %v356 = vld [vmem:[%s299 + $0x48] sm:$0xf]
        %v357 = vld [vmem:[%s299 + $0x4c] sm:$0xf]
        %v358 = vld [vmem:[%s299 + $0x54] sm:$0xf]
        %v359 = vld [vmem:[%s299 + $0x58] sm:$0xf]
        %v360 = vld [vmem:[%s299 + $0x60] sm:$0xf]
        %v361 = vld [vmem:[%s299 + $0x64] sm:$0xf]
        %v362 = vld [vmem:[%s299 + $0x6c] sm:$0xf]
        %v363 = vld [vmem:[%s299 + $0x70] sm:$0xf]
        %v364 = vld [vmem:[%s299 + $0x78] sm:$0xf]
        %v365 = vld [vmem:[%s299 + $0x7c] sm:$0xf]
        %v366 = vld [vmem:[%s299 + $0x84] sm:$0xf]
        %v367 = vld [vmem:[%s299 + $0x88] sm:$0xf]
        %v368 = vld [vmem:[%s299 + $0x90] sm:$0xf]
        %v369 = vld [vmem:[%s299 + $0x94] sm:$0xf]
        %v370 = vld [vmem:[%s299 + $0x9c] sm:$0xf]
        %v371 = vld [vmem:[%s299 + $0xa0] sm:$0xf]
        %v372 = vld [vmem:[%s299 + $0xa8] sm:$0xf]
        %v373 = vld [vmem:[%s299 + $0xac] sm:$0xf]
        %v374 = vld [vmem:[%s299 + $0xb4] sm:$0xf]
        %v375 = vld [vmem:[%s299 + $0xb8] sm:$0xf]
        %s376 = scalar_lea.vmem %s4, 2
        %v377 = vld [vmem:[%s376] sm:$0x3]
        %v410 = vunpack.c.l.b16 %v344
        %v411 = vunpack.c.l.b16 %v345
        %v412 = vunpack.c.l.b16 %v346
        %v413 = vunpack.c.l.b16 %v347
        %v414 = vunpack.c.l.b16 %v348
        %v415 = vunpack.c.l.b16 %v349
        %v416 = vunpack.c.l.b16 %v350
        %v417 = vunpack.c.l.b16 %v351
        %v418 = vunpack.c.l.b16 %v352
        %v419 = vunpack.c.l.b16 %v353
        %v420 = vunpack.c.l.b16 %v354
        %v421 = vunpack.c.l.b16 %v355
        %v422 = vunpack.c.l.b16 %v356
        %v423 = vunpack.c.l.b16 %v357
        %v424 = vunpack.c.l.b16 %v358
        %v425 = vunpack.c.l.b16 %v359
        %v426 = vunpack.c.l.b16 %v360
        %v427 = vunpack.c.l.b16 %v361
        %v428 = vunpack.c.l.b16 %v362
        %v429 = vunpack.c.l.b16 %v363
        %v430 = vunpack.c.l.b16 %v364
        %v431 = vunpack.c.l.b16 %v365
        %v432 = vunpack.c.l.b16 %v366
        %v433 = vunpack.c.l.b16 %v367
        %v434 = vunpack.c.l.b16 %v368
        %v435 = vunpack.c.l.b16 %v369
        %v436 = vunpack.c.l.b16 %v370
        %v437 = vunpack.c.l.b16 %v371
        %v438 = vunpack.c.l.b16 %v372
        %v439 = vunpack.c.l.b16 %v373
        %v440 = vunpack.c.l.b16 %v374
        %v441 = vunpack.c.l.b16 %v375
        %v442 = vpack.c.b16 %v411, %v410
        %v443 = vpack.c.b16 %v413, %v412
        %v444 = vpack.c.b16 %v415, %v414
        %v445 = vpack.c.b16 %v417, %v416
        %v446 = vpack.c.b16 %v419, %v418
        %v447 = vpack.c.b16 %v421, %v420
        %v448 = vpack.c.b16 %v423, %v422
        %v449 = vpack.c.b16 %v425, %v424
        %v450 = vpack.c.b16 %v427, %v426
        %v451 = vpack.c.b16 %v429, %v428
        %v452 = vpack.c.b16 %v431, %v430
        %v453 = vpack.c.b16 %v433, %v432
        %v454 = vpack.c.b16 %v435, %v434
        %v455 = vpack.c.b16 %v437, %v436
        %v456 = vpack.c.b16 %v439, %v438
        %v457 = vpack.c.b16 %v441, %v440
        %vm458 = vcmask 23552
        %v460 = vsel %vm458, %v442, 0
        %v463 = vsel %vm458, %v443, 0
        %v466 = vsel %vm458, %v444, 0
        %v469 = vsel %vm458, %v445, 0
        %v472 = vsel %vm458, %v446, 0
        %v475 = vsel %vm458, %v447, 0
        %v478 = vsel %vm458, %v448, 0
        %v481 = vsel %vm458, %v449, 0
        %v484 = vsel %vm458, %v450, 0
        %v487 = vsel %vm458, %v451, 0
        %v490 = vsel %vm458, %v452, 0
        %v493 = vsel %vm458, %v453, 0
        %v496 = vsel %vm458, %v454, 0
        %v499 = vsel %vm458, %v455, 0
        %v502 = vsel %vm458, %v456, 0
        %v505 = vsel %vm458, %v457, 0
        %vm507 = vcmask 1040384
        %vm508 = vcmask 1041408
        %v509 = vsel %vm507, 4294967295, 65535
        %v510 = vsel %vm508, %v509, 0
        %v512 = vand.u32 %v377, %v510
        %514 = vmatpush.bf16.msra.mxu0 0
        %515 = vmatpush.bf16.msra.mxu0 0
        %516 = vmatpush.bf16.msra.mxu0 0
        %517 = vmatpush.bf16.msra.mxu0 0
        %518 = vmatpush.bf16.msra.mxu0 0
        %519 = vmatpush.bf16.msra.mxu0 0
        %520 = vmatpush.bf16.msra.mxu0 0
        %521 = vmatpush.bf16.msra.mxu0 %v512
        %522 = vmatmul.bf16.gmra.mxu0 %v460
        %v523 = vpop.f32.mrf.mxu0
        %v524 = vadd.f32 0.0, %v523
        %v525 = vpop.f32.mrf.mxu0
        %v526 = vadd.f32 0.0, %v525
        %527 = vmatmul.bf16.gmra.mxu0 %v463
        %v528 = vpop.f32.mrf.mxu0
        %v529 = vadd.f32 0.0, %v528
        %v530 = vpop.f32.mrf.mxu0
        %v531 = vadd.f32 0.0, %v530
        %532 = vmatmul.bf16.gmra.mxu0 %v466
        %v533 = vpop.f32.mrf.mxu0
        %v534 = vadd.f32 0.0, %v533
        %v535 = vpop.f32.mrf.mxu0
        %v536 = vadd.f32 0.0, %v535
        %537 = vmatmul.bf16.gmra.mxu0 %v469
        %v538 = vpop.f32.mrf.mxu0
        %v539 = vadd.f32 0.0, %v538
        %v540 = vpop.f32.mrf.mxu0
        %v541 = vadd.f32 0.0, %v540
        %542 = vmatmul.bf16.gmra.mxu0 %v472
        %v543 = vpop.f32.mrf.mxu0
        %v544 = vadd.f32 0.0, %v543
        %v545 = vpop.f32.mrf.mxu0
        %v546 = vadd.f32 0.0, %v545
        %547 = vmatmul.bf16.gmra.mxu0 %v475
        %v548 = vpop.f32.mrf.mxu0
        %v549 = vadd.f32 0.0, %v548
        %v550 = vpop.f32.mrf.mxu0
        %v551 = vadd.f32 0.0, %v550
        %552 = vmatmul.bf16.gmra.mxu0 %v478
        %v553 = vpop.f32.mrf.mxu0
        %v554 = vadd.f32 0.0, %v553
        %v555 = vpop.f32.mrf.mxu0
        %v556 = vadd.f32 0.0, %v555
        %557 = vmatmul.bf16.gmra.mxu0 %v481
        %v558 = vpop.f32.mrf.mxu0
        %v559 = vadd.f32 0.0, %v558
        %v560 = vpop.f32.mrf.mxu0
        %v561 = vadd.f32 0.0, %v560
        %562 = vmatmul.bf16.gmra.mxu0 %v484
        %v563 = vpop.f32.mrf.mxu0
        %v564 = vadd.f32 0.0, %v563
        %v565 = vpop.f32.mrf.mxu0
        %v566 = vadd.f32 0.0, %v565
        %567 = vmatmul.bf16.gmra.mxu0 %v487
        %v568 = vpop.f32.mrf.mxu0
        %v569 = vadd.f32 0.0, %v568
        %v570 = vpop.f32.mrf.mxu0
        %v571 = vadd.f32 0.0, %v570
        %572 = vmatmul.bf16.gmra.mxu0 %v490
        %v573 = vpop.f32.mrf.mxu0
        %v574 = vadd.f32 0.0, %v573
        %v575 = vpop.f32.mrf.mxu0
        %v576 = vadd.f32 0.0, %v575
        %577 = vmatmul.bf16.gmra.mxu0 %v493
        %v578 = vpop.f32.mrf.mxu0
        %v579 = vadd.f32 0.0, %v578
        %v580 = vpop.f32.mrf.mxu0
        %v581 = vadd.f32 0.0, %v580
        %582 = vmatmul.bf16.gmra.mxu0 %v496
        %v583 = vpop.f32.mrf.mxu0
        %v584 = vadd.f32 0.0, %v583
        %v585 = vpop.f32.mrf.mxu0
        %v586 = vadd.f32 0.0, %v585
        %587 = vmatmul.bf16.gmra.mxu0 %v499
        %v588 = vpop.f32.mrf.mxu0
        %v589 = vadd.f32 0.0, %v588
        %v590 = vpop.f32.mrf.mxu0
        %v591 = vadd.f32 0.0, %v590
        %592 = vmatmul.bf16.gmra.mxu0 %v502
        %v593 = vpop.f32.mrf.mxu0
        %v594 = vadd.f32 0.0, %v593
        %v595 = vpop.f32.mrf.mxu0
        %v596 = vadd.f32 0.0, %v595
        %597 = vmatmul.bf16.gmra.mxu0 %v505
        %v598 = vpop.f32.mrf.mxu0
        %v599 = vadd.f32 0.0, %v598
        %v600 = vpop.f32.mrf.mxu0
        %v601 = vadd.f32 0.0, %v600
        %602 = vdwg.mxu0
        %v635 = vunpack.c.l.b16 %v311
        %v636 = vunpack.c.l.b16 %v312
        %v637 = vunpack.c.l.b16 %v313
        %v638 = vunpack.c.l.b16 %v314
        %v639 = vunpack.c.l.b16 %v315
        %v640 = vunpack.c.l.b16 %v316
        %v641 = vunpack.c.l.b16 %v317
        %v642 = vunpack.c.l.b16 %v318
        %v643 = vunpack.c.l.b16 %v319
        %v644 = vunpack.c.l.b16 %v320
        %v645 = vunpack.c.l.b16 %v321
        %v646 = vunpack.c.l.b16 %v322
        %v647 = vunpack.c.l.b16 %v323
        %v648 = vunpack.c.l.b16 %v324
        %v649 = vunpack.c.l.b16 %v325
        %v650 = vunpack.c.l.b16 %v326
        %v651 = vunpack.c.l.b16 %v327
        %v652 = vunpack.c.l.b16 %v328
        %v653 = vunpack.c.l.b16 %v329
        %v654 = vunpack.c.l.b16 %v330
        %v655 = vunpack.c.l.b16 %v331
        %v656 = vunpack.c.l.b16 %v332
        %v657 = vunpack.c.l.b16 %v333
        %v658 = vunpack.c.l.b16 %v334
        %v659 = vunpack.c.l.b16 %v335
        %v660 = vunpack.c.l.b16 %v336
        %v661 = vunpack.c.l.b16 %v337
        %v662 = vunpack.c.l.b16 %v338
        %v663 = vunpack.c.l.b16 %v339
        %v664 = vunpack.c.l.b16 %v340
        %v665 = vunpack.c.l.b16 %v341
        %v666 = vunpack.c.l.b16 %v342
        %v667 = vpack.c.b16 %v636, %v635
        %v668 = vpack.c.b16 %v638, %v637
        %v669 = vpack.c.b16 %v640, %v639
        %v670 = vpack.c.b16 %v642, %v641
        %v671 = vpack.c.b16 %v644, %v643
        %v672 = vpack.c.b16 %v646, %v645
        %v673 = vpack.c.b16 %v648, %v647
        %v674 = vpack.c.b16 %v650, %v649
        %v675 = vpack.c.b16 %v652, %v651
        %v676 = vpack.c.b16 %v654, %v653
        %v677 = vpack.c.b16 %v656, %v655
        %v678 = vpack.c.b16 %v658, %v657
        %v679 = vpack.c.b16 %v660, %v659
        %v680 = vpack.c.b16 %v662, %v661
        %v681 = vpack.c.b16 %v664, %v663
        %v682 = vpack.c.b16 %v666, %v665
        %v684 = vsel %vm458, %v667, 0
        %v687 = vsel %vm458, %v668, 0
        %v690 = vsel %vm458, %v669, 0
        %v693 = vsel %vm458, %v670, 0
        %v696 = vsel %vm458, %v671, 0
        %v699 = vsel %vm458, %v672, 0
        %v702 = vsel %vm458, %v673, 0
        %v705 = vsel %vm458, %v674, 0
        %v708 = vsel %vm458, %v675, 0
        %v711 = vsel %vm458, %v676, 0
        %v714 = vsel %vm458, %v677, 0
        %v717 = vsel %vm458, %v678, 0
        %v720 = vsel %vm458, %v679, 0
        %v723 = vsel %vm458, %v680, 0
        %v726 = vsel %vm458, %v681, 0
        %v729 = vsel %vm458, %v682, 0
        %v732 = vand.u32 %v343, %v510
        %734 = vmatpush.bf16.msra.mxu0 0
        %735 = vmatpush.bf16.msra.mxu0 0
        %736 = vmatpush.bf16.msra.mxu0 0
        %737 = vmatpush.bf16.msra.mxu0 0
        %738 = vmatpush.bf16.msra.mxu0 0
        %739 = vmatpush.bf16.msra.mxu0 0
        %740 = vmatpush.bf16.msra.mxu0 0
        %741 = vmatpush.bf16.msra.mxu0 %v732
        %742 = vmatmul.bf16.gmra.mxu0 %v684
        %v743 = vpop.f32.mrf.mxu0
        %v744 = vadd.f32 %v524, %v743
        %v745 = vpop.f32.mrf.mxu0
        %v746 = vadd.f32 %v526, %v745
        %747 = vmatmul.bf16.gmra.mxu0 %v687
        %v748 = vpop.f32.mrf.mxu0
        %v749 = vadd.f32 %v529, %v748
        %v750 = vpop.f32.mrf.mxu0
        %v751 = vadd.f32 %v531, %v750
        %752 = vmatmul.bf16.gmra.mxu0 %v690
        %v753 = vpop.f32.mrf.mxu0
        %v754 = vadd.f32 %v534, %v753
        %v755 = vpop.f32.mrf.mxu0
        %v756 = vadd.f32 %v536, %v755
        %757 = vmatmul.bf16.gmra.mxu0 %v693
        %v758 = vpop.f32.mrf.mxu0
        %v759 = vadd.f32 %v539, %v758
        %v760 = vpop.f32.mrf.mxu0
        %v761 = vadd.f32 %v541, %v760
        %762 = vmatmul.bf16.gmra.mxu0 %v696
        %v763 = vpop.f32.mrf.mxu0
        %v764 = vadd.f32 %v544, %v763
        %v765 = vpop.f32.mrf.mxu0
        %v766 = vadd.f32 %v546, %v765
        %767 = vmatmul.bf16.gmra.mxu0 %v699
        %v768 = vpop.f32.mrf.mxu0
        %v769 = vadd.f32 %v549, %v768
        %v770 = vpop.f32.mrf.mxu0
        %v771 = vadd.f32 %v551, %v770
        %772 = vmatmul.bf16.gmra.mxu0 %v702
        %v773 = vpop.f32.mrf.mxu0
        %v774 = vadd.f32 %v554, %v773
        %v775 = vpop.f32.mrf.mxu0
        %v776 = vadd.f32 %v556, %v775
        %777 = vmatmul.bf16.gmra.mxu0 %v705
        %v778 = vpop.f32.mrf.mxu0
        %v779 = vadd.f32 %v559, %v778
        %v780 = vpop.f32.mrf.mxu0
        %v781 = vadd.f32 %v561, %v780
        %782 = vmatmul.bf16.gmra.mxu0 %v708
        %v783 = vpop.f32.mrf.mxu0
        %v784 = vadd.f32 %v564, %v783
        %v785 = vpop.f32.mrf.mxu0
        %v786 = vadd.f32 %v566, %v785
        %787 = vmatmul.bf16.gmra.mxu0 %v711
        %v788 = vpop.f32.mrf.mxu0
        %v789 = vadd.f32 %v569, %v788
        %v790 = vpop.f32.mrf.mxu0
        %v791 = vadd.f32 %v571, %v790
        %792 = vmatmul.bf16.gmra.mxu0 %v714
        %v793 = vpop.f32.mrf.mxu0
        %v794 = vadd.f32 %v574, %v793
        %v795 = vpop.f32.mrf.mxu0
        %v796 = vadd.f32 %v576, %v795
        %797 = vmatmul.bf16.gmra.mxu0 %v717
        %v798 = vpop.f32.mrf.mxu0
        %v799 = vadd.f32 %v579, %v798
        %v800 = vpop.f32.mrf.mxu0
        %v801 = vadd.f32 %v581, %v800
        %802 = vmatmul.bf16.gmra.mxu0 %v720
        %v803 = vpop.f32.mrf.mxu0
        %v804 = vadd.f32 %v584, %v803
        %v805 = vpop.f32.mrf.mxu0
        %v806 = vadd.f32 %v586, %v805
        %807 = vmatmul.bf16.gmra.mxu0 %v723
        %v808 = vpop.f32.mrf.mxu0
        %v809 = vadd.f32 %v589, %v808
        %v810 = vpop.f32.mrf.mxu0
        %v811 = vadd.f32 %v591, %v810
        %812 = vmatmul.bf16.gmra.mxu0 %v726
        %v813 = vpop.f32.mrf.mxu0
        %v814 = vadd.f32 %v594, %v813
        %v815 = vpop.f32.mrf.mxu0
        %v816 = vadd.f32 %v596, %v815
        %817 = vmatmul.bf16.gmra.mxu0 %v729
        %v818 = vpop.f32.mrf.mxu0
        %v819 = vadd.f32 %v599, %v818
        %v820 = vpop.f32.mrf.mxu0
        %v821 = vadd.f32 %v601, %v820
        %822 = vdwg.mxu0
        %v823 = vld [vmem:[%s294] sm:$0xf]
        %v824 = vld [vmem:[%s294 + $0x4] sm:$0xf]
        %v825 = vld [vmem:[%s294 + $0x8] sm:$0x1]
        %v826 = vld [vmem:[%s294 + $0xc] sm:$0xf]
        %v827 = vld [vmem:[%s294 + $0x10] sm:$0xf]
        %v828 = vld [vmem:[%s294 + $0x14] sm:$0x1]
        %v829 = vld [vmem:[%s294 + $0x18] sm:$0xf]
        %v830 = vld [vmem:[%s294 + $0x1c] sm:$0xf]
        %v831 = vld [vmem:[%s294 + $0x20] sm:$0x1]
        %v832 = vld [vmem:[%s294 + $0x24] sm:$0xf]
        %v833 = vld [vmem:[%s294 + $0x28] sm:$0xf]
        %v834 = vld [vmem:[%s294 + $0x2c] sm:$0x1]
        %v835 = vld [vmem:[%s294 + $0x30] sm:$0xf]
        %v836 = vld [vmem:[%s294 + $0x34] sm:$0xf]
        %v837 = vld [vmem:[%s294 + $0x38] sm:$0x1]
        %v838 = vld [vmem:[%s294 + $0x3c] sm:$0xf]
        %v839 = vld [vmem:[%s294 + $0x40] sm:$0xf]
        %v840 = vld [vmem:[%s294 + $0x44] sm:$0x1]
        %v841 = vld [vmem:[%s294 + $0x48] sm:$0xf]
        %v842 = vld [vmem:[%s294 + $0x4c] sm:$0xf]
        %v843 = vld [vmem:[%s294 + $0x50] sm:$0x1]
        %v844 = vld [vmem:[%s294 + $0x54] sm:$0xf]
        %v845 = vld [vmem:[%s294 + $0x58] sm:$0xf]
        %v846 = vld [vmem:[%s294 + $0x5c] sm:$0x1]
        %v847 = vld [vmem:[%s294 + $0x60] sm:$0xf]
        %v848 = vld [vmem:[%s294 + $0x64] sm:$0xf]
        %v849 = vld [vmem:[%s294 + $0x68] sm:$0x1]
        %v850 = vld [vmem:[%s294 + $0x6c] sm:$0xf]
        %v851 = vld [vmem:[%s294 + $0x70] sm:$0xf]
        %v852 = vld [vmem:[%s294 + $0x74] sm:$0x1]
        %v853 = vld [vmem:[%s294 + $0x78] sm:$0xf]
        %v854 = vld [vmem:[%s294 + $0x7c] sm:$0xf]
        %v855 = vld [vmem:[%s294 + $0x80] sm:$0x1]
        %v856 = vld [vmem:[%s294 + $0x84] sm:$0xf]
        %v857 = vld [vmem:[%s294 + $0x88] sm:$0xf]
        %v858 = vld [vmem:[%s294 + $0x8c] sm:$0x1]
        %v859 = vld [vmem:[%s294 + $0x90] sm:$0xf]
        %v860 = vld [vmem:[%s294 + $0x94] sm:$0xf]
        %v861 = vld [vmem:[%s294 + $0x98] sm:$0x1]
        %v862 = vld [vmem:[%s294 + $0x9c] sm:$0xf]
        %v863 = vld [vmem:[%s294 + $0xa0] sm:$0xf]
        %v864 = vld [vmem:[%s294 + $0xa4] sm:$0x1]
        %v865 = vld [vmem:[%s294 + $0xa8] sm:$0xf]
        %v866 = vld [vmem:[%s294 + $0xac] sm:$0xf]
        %v867 = vld [vmem:[%s294 + $0xb0] sm:$0x1]
        %v868 = vld [vmem:[%s294 + $0xb4] sm:$0xf]
        %v869 = vld [vmem:[%s294 + $0xb8] sm:$0xf]
        %v870 = vld [vmem:[%s294 + $0xbc] sm:$0x1]
        %vm871 = vsmask.f32 3328
        %vm872 = vsmask.f32 7440
        %vm873 = vmor %vm871, %vm872
        %v875 = vshrl.u32 %v823, 16
        %v877 = vrot.slane %v875, 4
        %v878 = vshll.u32 %v823, 16
        %v880 = vrot.slane %v878, 5
        %v881 = vor.u32 %v877, %v880
        %v882 = vrot.slane %v881, 4
        %v884 = vshll.u32 %v824, 16
        %v886 = vrot.slane %v884, 5
        %v887 = vsel %vm873, %v882, %v886
        %v888 = vshrl.u32 %v824, 16
        %v890 = vrot.slane %v888, 4
        %v891 = vor.u32 %v890, %v886
        %v892 = vrot.slane %v891, 4
        %v894 = vshll.u32 %v825, 16
        %v896 = vrot.slane %v894, 5
        %v897 = vsel %vm873, %v892, %v896
        %v899 = vshrl.u32 %v826, 16
        %v901 = vrot.slane %v899, 4
        %v902 = vshll.u32 %v826, 16
        %v904 = vrot.slane %v902, 5
        %v905 = vor.u32 %v901, %v904
        %v906 = vrot.slane %v905, 4
        %v908 = vshll.u32 %v827, 16
        %v910 = vrot.slane %v908, 5
        %v911 = vsel %vm873, %v906, %v910
        %v912 = vshrl.u32 %v827, 16
        %v914 = vrot.slane %v912, 4
        %v915 = vor.u32 %v914, %v910
        %v916 = vrot.slane %v915, 4
        %v918 = vshll.u32 %v828, 16
        %v920 = vrot.slane %v918, 5
        %v921 = vsel %vm873, %v916, %v920
        %v923 = vshrl.u32 %v829, 16
        %v925 = vrot.slane %v923, 4
        %v926 = vshll.u32 %v829, 16
        %v928 = vrot.slane %v926, 5
        %v929 = vor.u32 %v925, %v928
        %v930 = vrot.slane %v929, 4
        %v932 = vshll.u32 %v830, 16
        %v934 = vrot.slane %v932, 5
        %v935 = vsel %vm873, %v930, %v934
        %v936 = vshrl.u32 %v830, 16
        %v938 = vrot.slane %v936, 4
        %v939 = vor.u32 %v938, %v934
        %v940 = vrot.slane %v939, 4
        %v942 = vshll.u32 %v831, 16
        %v944 = vrot.slane %v942, 5
        %v945 = vsel %vm873, %v940, %v944
        %v947 = vshrl.u32 %v832, 16
        %v949 = vrot.slane %v947, 4
        %v950 = vshll.u32 %v832, 16
        %v952 = vrot.slane %v950, 5
        %v953 = vor.u32 %v949, %v952
        %v954 = vrot.slane %v953, 4
        %v956 = vshll.u32 %v833, 16
        %v958 = vrot.slane %v956, 5
        %v959 = vsel %vm873, %v954, %v958
        %v960 = vshrl.u32 %v833, 16
        %v962 = vrot.slane %v960, 4
        %v963 = vor.u32 %v962, %v958
        %v964 = vrot.slane %v963, 4
        %v966 = vshll.u32 %v834, 16
        %v968 = vrot.slane %v966, 5
        %v969 = vsel %vm873, %v964, %v968
        %v971 = vshrl.u32 %v835, 16
        %v973 = vrot.slane %v971, 4
        %v974 = vshll.u32 %v835, 16
        %v976 = vrot.slane %v974, 5
        %v977 = vor.u32 %v973, %v976
        %v978 = vrot.slane %v977, 4
        %v980 = vshll.u32 %v836, 16
        %v982 = vrot.slane %v980, 5
        %v983 = vsel %vm873, %v978, %v982
        %v984 = vshrl.u32 %v836, 16
        %v986 = vrot.slane %v984, 4
        %v987 = vor.u32 %v986, %v982
        %v988 = vrot.slane %v987, 4
        %v990 = vshll.u32 %v837, 16
        %v992 = vrot.slane %v990, 5
        %v993 = vsel %vm873, %v988, %v992
        %v995 = vshrl.u32 %v838, 16
        %v997 = vrot.slane %v995, 4
        %v998 = vshll.u32 %v838, 16
        %v1000 = vrot.slane %v998, 5
        %v1001 = vor.u32 %v997, %v1000
        %v1002 = vrot.slane %v1001, 4
        %v1004 = vshll.u32 %v839, 16
        %v1006 = vrot.slane %v1004, 5
        %v1007 = vsel %vm873, %v1002, %v1006
        %v1008 = vshrl.u32 %v839, 16
        %v1010 = vrot.slane %v1008, 4
        %v1011 = vor.u32 %v1010, %v1006
        %v1012 = vrot.slane %v1011, 4
        %v1014 = vshll.u32 %v840, 16
        %v1016 = vrot.slane %v1014, 5
        %v1017 = vsel %vm873, %v1012, %v1016
        %v1019 = vshrl.u32 %v841, 16
        %v1021 = vrot.slane %v1019, 4
        %v1022 = vshll.u32 %v841, 16
        %v1024 = vrot.slane %v1022, 5
        %v1025 = vor.u32 %v1021, %v1024
        %v1026 = vrot.slane %v1025, 4
        %v1028 = vshll.u32 %v842, 16
        %v1030 = vrot.slane %v1028, 5
        %v1031 = vsel %vm873, %v1026, %v1030
        %v1032 = vshrl.u32 %v842, 16
        %v1034 = vrot.slane %v1032, 4
        %v1035 = vor.u32 %v1034, %v1030
        %v1036 = vrot.slane %v1035, 4
        %v1038 = vshll.u32 %v843, 16
        %v1040 = vrot.slane %v1038, 5
        %v1041 = vsel %vm873, %v1036, %v1040
        %v1043 = vshrl.u32 %v844, 16
        %v1045 = vrot.slane %v1043, 4
        %v1046 = vshll.u32 %v844, 16
        %v1048 = vrot.slane %v1046, 5
        %v1049 = vor.u32 %v1045, %v1048
        %v1050 = vrot.slane %v1049, 4
        %v1052 = vshll.u32 %v845, 16
        %v1054 = vrot.slane %v1052, 5
        %v1055 = vsel %vm873, %v1050, %v1054
        %v1056 = vshrl.u32 %v845, 16
        %v1058 = vrot.slane %v1056, 4
        %v1059 = vor.u32 %v1058, %v1054
        %v1060 = vrot.slane %v1059, 4
        %v1062 = vshll.u32 %v846, 16
        %v1064 = vrot.slane %v1062, 5
        %v1065 = vsel %vm873, %v1060, %v1064
        %v1067 = vshrl.u32 %v847, 16
        %v1069 = vrot.slane %v1067, 4
        %v1070 = vshll.u32 %v847, 16
        %v1072 = vrot.slane %v1070, 5
        %v1073 = vor.u32 %v1069, %v1072
        %v1074 = vrot.slane %v1073, 4
        %v1076 = vshll.u32 %v848, 16
        %v1078 = vrot.slane %v1076, 5
        %v1079 = vsel %vm873, %v1074, %v1078
        %v1080 = vshrl.u32 %v848, 16
        %v1082 = vrot.slane %v1080, 4
        %v1083 = vor.u32 %v1082, %v1078
        %v1084 = vrot.slane %v1083, 4
        %v1086 = vshll.u32 %v849, 16
        %v1088 = vrot.slane %v1086, 5
        %v1089 = vsel %vm873, %v1084, %v1088
        %v1091 = vshrl.u32 %v850, 16
        %v1093 = vrot.slane %v1091, 4
        %v1094 = vshll.u32 %v850, 16
        %v1096 = vrot.slane %v1094, 5
        %v1097 = vor.u32 %v1093, %v1096
        %v1098 = vrot.slane %v1097, 4
        %v1100 = vshll.u32 %v851, 16
        %v1102 = vrot.slane %v1100, 5
        %v1103 = vsel %vm873, %v1098, %v1102
        %v1104 = vshrl.u32 %v851, 16
        %v1106 = vrot.slane %v1104, 4
        %v1107 = vor.u32 %v1106, %v1102
        %v1108 = vrot.slane %v1107, 4
        %v1110 = vshll.u32 %v852, 16
        %v1112 = vrot.slane %v1110, 5
        %v1113 = vsel %vm873, %v1108, %v1112
        %v1115 = vshrl.u32 %v853, 16
        %v1117 = vrot.slane %v1115, 4
        %v1118 = vshll.u32 %v853, 16
        %v1120 = vrot.slane %v1118, 5
        %v1121 = vor.u32 %v1117, %v1120
        %v1122 = vrot.slane %v1121, 4
        %v1124 = vshll.u32 %v854, 16
        %v1126 = vrot.slane %v1124, 5
        %v1127 = vsel %vm873, %v1122, %v1126
        %v1128 = vshrl.u32 %v854, 16
        %v1130 = vrot.slane %v1128, 4
        %v1131 = vor.u32 %v1130, %v1126
        %v1132 = vrot.slane %v1131, 4
        %v1134 = vshll.u32 %v855, 16
        %v1136 = vrot.slane %v1134, 5
        %v1137 = vsel %vm873, %v1132, %v1136
        %v1139 = vshrl.u32 %v856, 16
        %v1141 = vrot.slane %v1139, 4
        %v1142 = vshll.u32 %v856, 16
        %v1144 = vrot.slane %v1142, 5
        %v1145 = vor.u32 %v1141, %v1144
        %v1146 = vrot.slane %v1145, 4
        %v1148 = vshll.u32 %v857, 16
        %v1150 = vrot.slane %v1148, 5
        %v1151 = vsel %vm873, %v1146, %v1150
        %v1152 = vshrl.u32 %v857, 16
        %v1154 = vrot.slane %v1152, 4
        %v1155 = vor.u32 %v1154, %v1150
        %v1156 = vrot.slane %v1155, 4
        %v1158 = vshll.u32 %v858, 16
        %v1160 = vrot.slane %v1158, 5
        %v1161 = vsel %vm873, %v1156, %v1160
        %v1163 = vshrl.u32 %v859, 16
        %v1165 = vrot.slane %v1163, 4
        %v1166 = vshll.u32 %v859, 16
        %v1168 = vrot.slane %v1166, 5
        %v1169 = vor.u32 %v1165, %v1168
        %v1170 = vrot.slane %v1169, 4
        %v1172 = vshll.u32 %v860, 16
        %v1174 = vrot.slane %v1172, 5
        %v1175 = vsel %vm873, %v1170, %v1174
        %v1176 = vshrl.u32 %v860, 16
        %v1178 = vrot.slane %v1176, 4
        %v1179 = vor.u32 %v1178, %v1174
        %v1180 = vrot.slane %v1179, 4
        %v1182 = vshll.u32 %v861, 16
        %v1184 = vrot.slane %v1182, 5
        %v1185 = vsel %vm873, %v1180, %v1184
        %v1187 = vshrl.u32 %v862, 16
        %v1189 = vrot.slane %v1187, 4
        %v1190 = vshll.u32 %v862, 16
        %v1192 = vrot.slane %v1190, 5
        %v1193 = vor.u32 %v1189, %v1192
        %v1194 = vrot.slane %v1193, 4
        %v1196 = vshll.u32 %v863, 16
        %v1198 = vrot.slane %v1196, 5
        %v1199 = vsel %vm873, %v1194, %v1198
        %v1200 = vshrl.u32 %v863, 16
        %v1202 = vrot.slane %v1200, 4
        %v1203 = vor.u32 %v1202, %v1198
        %v1204 = vrot.slane %v1203, 4
        %v1206 = vshll.u32 %v864, 16
        %v1208 = vrot.slane %v1206, 5
        %v1209 = vsel %vm873, %v1204, %v1208
        %v1211 = vshrl.u32 %v865, 16
        %v1213 = vrot.slane %v1211, 4
        %v1214 = vshll.u32 %v865, 16
        %v1216 = vrot.slane %v1214, 5
        %v1217 = vor.u32 %v1213, %v1216
        %v1218 = vrot.slane %v1217, 4
        %v1220 = vshll.u32 %v866, 16
        %v1222 = vrot.slane %v1220, 5
        %v1223 = vsel %vm873, %v1218, %v1222
        %v1224 = vshrl.u32 %v866, 16
        %v1226 = vrot.slane %v1224, 4
        %v1227 = vor.u32 %v1226, %v1222
        %v1228 = vrot.slane %v1227, 4
        %v1230 = vshll.u32 %v867, 16
        %v1232 = vrot.slane %v1230, 5
        %v1233 = vsel %vm873, %v1228, %v1232
        %v1235 = vshrl.u32 %v868, 16
        %v1237 = vrot.slane %v1235, 4
        %v1238 = vshll.u32 %v868, 16
        %v1240 = vrot.slane %v1238, 5
        %v1241 = vor.u32 %v1237, %v1240
        %v1242 = vrot.slane %v1241, 4
        %v1244 = vshll.u32 %v869, 16
        %v1246 = vrot.slane %v1244, 5
        %v1247 = vsel %vm873, %v1242, %v1246
        %v1248 = vshrl.u32 %v869, 16
        %v1250 = vrot.slane %v1248, 4
        %v1251 = vor.u32 %v1250, %v1246
        %v1252 = vrot.slane %v1251, 4
        %v1254 = vshll.u32 %v870, 16
        %v1256 = vrot.slane %v1254, 5
        %v1257 = vsel %vm873, %v1252, %v1256
        %s1258 = scalar_lea.vmem %s4, 4
        %v1259 = vld [vmem:[%s1258] sm:$0x3]
        %v1260 = vunpack.c.l.b16 %v887
        %v1261 = vunpack.c.l.b16 %v897
        %v1262 = vunpack.c.l.b16 %v911
        %v1263 = vunpack.c.l.b16 %v921
        %v1264 = vunpack.c.l.b16 %v935
        %v1265 = vunpack.c.l.b16 %v945
        %v1266 = vunpack.c.l.b16 %v959
        %v1267 = vunpack.c.l.b16 %v969
        %v1268 = vunpack.c.l.b16 %v983
        %v1269 = vunpack.c.l.b16 %v993
        %v1270 = vunpack.c.l.b16 %v1007
        %v1271 = vunpack.c.l.b16 %v1017
        %v1272 = vunpack.c.l.b16 %v1031
        %v1273 = vunpack.c.l.b16 %v1041
        %v1274 = vunpack.c.l.b16 %v1055
        %v1275 = vunpack.c.l.b16 %v1065
        %v1276 = vunpack.c.l.b16 %v1079
        %v1277 = vunpack.c.l.b16 %v1089
        %v1278 = vunpack.c.l.b16 %v1103
        %v1279 = vunpack.c.l.b16 %v1113
        %v1280 = vunpack.c.l.b16 %v1127
        %v1281 = vunpack.c.l.b16 %v1137
        %v1282 = vunpack.c.l.b16 %v1151
        %v1283 = vunpack.c.l.b16 %v1161
        %v1284 = vunpack.c.l.b16 %v1175
        %v1285 = vunpack.c.l.b16 %v1185
        %v1286 = vunpack.c.l.b16 %v1199
        %v1287 = vunpack.c.l.b16 %v1209
        %v1288 = vunpack.c.l.b16 %v1223
        %v1289 = vunpack.c.l.b16 %v1233
        %v1290 = vunpack.c.l.b16 %v1247
        %v1291 = vunpack.c.l.b16 %v1257
        %v1292 = vpack.c.b16 %v1261, %v1260
        %v1293 = vpack.c.b16 %v1263, %v1262
        %v1294 = vpack.c.b16 %v1265, %v1264
        %v1295 = vpack.c.b16 %v1267, %v1266
        %v1296 = vpack.c.b16 %v1269, %v1268
        %v1297 = vpack.c.b16 %v1271, %v1270
        %v1298 = vpack.c.b16 %v1273, %v1272
        %v1299 = vpack.c.b16 %v1275, %v1274
        %v1300 = vpack.c.b16 %v1277, %v1276
        %v1301 = vpack.c.b16 %v1279, %v1278
        %v1302 = vpack.c.b16 %v1281, %v1280
        %v1303 = vpack.c.b16 %v1283, %v1282
        %v1304 = vpack.c.b16 %v1285, %v1284
        %v1305 = vpack.c.b16 %v1287, %v1286
        %v1306 = vpack.c.b16 %v1289, %v1288
        %v1307 = vpack.c.b16 %v1291, %v1290
        %v1309 = vsel %vm458, %v1292, 0
        %v1312 = vsel %vm458, %v1293, 0
        %v1315 = vsel %vm458, %v1294, 0
        %v1318 = vsel %vm458, %v1295, 0
        %v1321 = vsel %vm458, %v1296, 0
        %v1324 = vsel %vm458, %v1297, 0
        %v1327 = vsel %vm458, %v1298, 0
        %v1330 = vsel %vm458, %v1299, 0
        %v1333 = vsel %vm458, %v1300, 0
        %v1336 = vsel %vm458, %v1301, 0
        %v1339 = vsel %vm458, %v1302, 0
        %v1342 = vsel %vm458, %v1303, 0
        %v1345 = vsel %vm458, %v1304, 0
        %v1348 = vsel %vm458, %v1305, 0
        %v1351 = vsel %vm458, %v1306, 0
        %v1354 = vsel %vm458, %v1307, 0
        %v1357 = vand.u32 %v1259, %v510
        %1359 = vmatpush.bf16.msra.mxu0 0
        %1360 = vmatpush.bf16.msra.mxu0 0
        %1361 = vmatpush.bf16.msra.mxu0 0
        %1362 = vmatpush.bf16.msra.mxu0 0
        %1363 = vmatpush.bf16.msra.mxu0 0
        %1364 = vmatpush.bf16.msra.mxu0 0
        %1365 = vmatpush.bf16.msra.mxu0 0
        %1366 = vmatpush.bf16.msra.mxu0 %v1357
        %1367 = vmatmul.bf16.gmra.mxu0 %v1309
        %v1368 = vpop.f32.mrf.mxu0
        %v1369 = vadd.f32 0.0, %v1368
        %v1370 = vpop.f32.mrf.mxu0
        %v1371 = vadd.f32 0.0, %v1370
        %1372 = vmatmul.bf16.gmra.mxu0 %v1312
        %v1373 = vpop.f32.mrf.mxu0
        %v1374 = vadd.f32 0.0, %v1373
        %v1375 = vpop.f32.mrf.mxu0
        %v1376 = vadd.f32 0.0, %v1375
        %1377 = vmatmul.bf16.gmra.mxu0 %v1315
        %v1378 = vpop.f32.mrf.mxu0
        %v1379 = vadd.f32 0.0, %v1378
        %v1380 = vpop.f32.mrf.mxu0
        %v1381 = vadd.f32 0.0, %v1380
        %1382 = vmatmul.bf16.gmra.mxu0 %v1318
        %v1383 = vpop.f32.mrf.mxu0
        %v1384 = vadd.f32 0.0, %v1383
        %v1385 = vpop.f32.mrf.mxu0
        %v1386 = vadd.f32 0.0, %v1385
        %1387 = vmatmul.bf16.gmra.mxu0 %v1321
        %v1388 = vpop.f32.mrf.mxu0
        %v1389 = vadd.f32 0.0, %v1388
        %v1390 = vpop.f32.mrf.mxu0
        %v1391 = vadd.f32 0.0, %v1390
        %1392 = vmatmul.bf16.gmra.mxu0 %v1324
        %v1393 = vpop.f32.mrf.mxu0
        %v1394 = vadd.f32 0.0, %v1393
        %v1395 = vpop.f32.mrf.mxu0
        %v1396 = vadd.f32 0.0, %v1395
        %1397 = vmatmul.bf16.gmra.mxu0 %v1327
        %v1398 = vpop.f32.mrf.mxu0
        %v1399 = vadd.f32 0.0, %v1398
        %v1400 = vpop.f32.mrf.mxu0
        %v1401 = vadd.f32 0.0, %v1400
        %1402 = vmatmul.bf16.gmra.mxu0 %v1330
        %v1403 = vpop.f32.mrf.mxu0
        %v1404 = vadd.f32 0.0, %v1403
        %v1405 = vpop.f32.mrf.mxu0
        %v1406 = vadd.f32 0.0, %v1405
        %1407 = vmatmul.bf16.gmra.mxu0 %v1333
        %v1408 = vpop.f32.mrf.mxu0
        %v1409 = vadd.f32 0.0, %v1408
        %v1410 = vpop.f32.mrf.mxu0
        %v1411 = vadd.f32 0.0, %v1410
        %1412 = vmatmul.bf16.gmra.mxu0 %v1336
        %v1413 = vpop.f32.mrf.mxu0
        %v1414 = vadd.f32 0.0, %v1413
        %v1415 = vpop.f32.mrf.mxu0
        %v1416 = vadd.f32 0.0, %v1415
        %1417 = vmatmul.bf16.gmra.mxu0 %v1339
        %v1418 = vpop.f32.mrf.mxu0
        %v1419 = vadd.f32 0.0, %v1418
        %v1420 = vpop.f32.mrf.mxu0
        %v1421 = vadd.f32 0.0, %v1420
        %1422 = vmatmul.bf16.gmra.mxu0 %v1342
        %v1423 = vpop.f32.mrf.mxu0
        %v1424 = vadd.f32 0.0, %v1423
        %v1425 = vpop.f32.mrf.mxu0
        %v1426 = vadd.f32 0.0, %v1425
        %1427 = vmatmul.bf16.gmra.mxu0 %v1345
        %v1428 = vpop.f32.mrf.mxu0
        %v1429 = vadd.f32 0.0, %v1428
        %v1430 = vpop.f32.mrf.mxu0
        %v1431 = vadd.f32 0.0, %v1430
        %1432 = vmatmul.bf16.gmra.mxu0 %v1348
        %v1433 = vpop.f32.mrf.mxu0
        %v1434 = vadd.f32 0.0, %v1433
        %v1435 = vpop.f32.mrf.mxu0
        %v1436 = vadd.f32 0.0, %v1435
        %1437 = vmatmul.bf16.gmra.mxu0 %v1351
        %v1438 = vpop.f32.mrf.mxu0
        %v1439 = vadd.f32 0.0, %v1438
        %v1440 = vpop.f32.mrf.mxu0
        %v1441 = vadd.f32 0.0, %v1440
        %1442 = vmatmul.bf16.gmra.mxu0 %v1354
        %v1443 = vpop.f32.mrf.mxu0
        %v1444 = vadd.f32 0.0, %v1443
        %v1445 = vpop.f32.mrf.mxu0
        %v1446 = vadd.f32 0.0, %v1445
        %1447 = vdwg.mxu0
        %v1448 = vadd.f32 %v744, %v1369
        %v1449 = vadd.f32 %v746, %v1371
        %v1450 = vadd.f32 %v749, %v1374
        %v1451 = vadd.f32 %v751, %v1376
        %v1452 = vadd.f32 %v754, %v1379
        %v1453 = vadd.f32 %v756, %v1381
        %v1454 = vadd.f32 %v759, %v1384
        %v1455 = vadd.f32 %v761, %v1386
        %v1456 = vadd.f32 %v764, %v1389
        %v1457 = vadd.f32 %v766, %v1391
        %v1458 = vadd.f32 %v769, %v1394
        %v1459 = vadd.f32 %v771, %v1396
        %v1460 = vadd.f32 %v774, %v1399
        %v1461 = vadd.f32 %v776, %v1401
        %v1462 = vadd.f32 %v779, %v1404
        %v1463 = vadd.f32 %v781, %v1406
        %v1464 = vadd.f32 %v784, %v1409
        %v1465 = vadd.f32 %v786, %v1411
        %v1466 = vadd.f32 %v789, %v1414
        %v1467 = vadd.f32 %v791, %v1416
        %v1468 = vadd.f32 %v794, %v1419
        %v1469 = vadd.f32 %v796, %v1421
        %v1470 = vadd.f32 %v799, %v1424
        %v1471 = vadd.f32 %v801, %v1426
        %v1472 = vadd.f32 %v804, %v1429
        %v1473 = vadd.f32 %v806, %v1431
        %v1474 = vadd.f32 %v809, %v1434
        %v1475 = vadd.f32 %v811, %v1436
        %v1476 = vadd.f32 %v814, %v1439
        %v1477 = vadd.f32 %v816, %v1441
        %v1478 = vadd.f32 %v819, %v1444
        %v1479 = vadd.f32 %v821, %v1446
        %v1480 = vld [vmem:[%s304] sm:$0xf]
        %v1481 = vld [vmem:[%s304 + $0x4] sm:$0xf]
        %v1482 = vld [vmem:[%s304 + $0xc] sm:$0xf]
        %v1483 = vld [vmem:[%s304 + $0x10] sm:$0xf]
        %v1484 = vld [vmem:[%s304 + $0x18] sm:$0xf]
        %v1485 = vld [vmem:[%s304 + $0x1c] sm:$0xf]
        %v1486 = vld [vmem:[%s304 + $0x24] sm:$0xf]
        %v1487 = vld [vmem:[%s304 + $0x28] sm:$0xf]
        %v1488 = vld [vmem:[%s304 + $0x30] sm:$0xf]
        %v1489 = vld [vmem:[%s304 + $0x34] sm:$0xf]
        %v1490 = vld [vmem:[%s304 + $0x3c] sm:$0xf]
        %v1491 = vld [vmem:[%s304 + $0x40] sm:$0xf]
        %v1492 = vld [vmem:[%s304 + $0x48] sm:$0xf]
        %v1493 = vld [vmem:[%s304 + $0x4c] sm:$0xf]
        %v1494 = vld [vmem:[%s304 + $0x54] sm:$0xf]
        %v1495 = vld [vmem:[%s304 + $0x58] sm:$0xf]
        %v1496 = vld [vmem:[%s304 + $0x60] sm:$0xf]
        %v1497 = vld [vmem:[%s304 + $0x64] sm:$0xf]
        %v1498 = vld [vmem:[%s304 + $0x6c] sm:$0xf]
        %v1499 = vld [vmem:[%s304 + $0x70] sm:$0xf]
        %v1500 = vld [vmem:[%s304 + $0x78] sm:$0xf]
        %v1501 = vld [vmem:[%s304 + $0x7c] sm:$0xf]
        %v1502 = vld [vmem:[%s304 + $0x84] sm:$0xf]
        %v1503 = vld [vmem:[%s304 + $0x88] sm:$0xf]
        %v1504 = vld [vmem:[%s304 + $0x90] sm:$0xf]
        %v1505 = vld [vmem:[%s304 + $0x94] sm:$0xf]
        %v1506 = vld [vmem:[%s304 + $0x9c] sm:$0xf]
        %v1507 = vld [vmem:[%s304 + $0xa0] sm:$0xf]
        %v1508 = vld [vmem:[%s304 + $0xa8] sm:$0xf]
        %v1509 = vld [vmem:[%s304 + $0xac] sm:$0xf]
        %v1510 = vld [vmem:[%s304 + $0xb4] sm:$0xf]
        %v1511 = vld [vmem:[%s304 + $0xb8] sm:$0xf]
        %s1512 = scalar_lea.vmem %s4, 6
        %v1513 = vld [vmem:[%s1512] sm:$0x3]
        %v1546 = vunpack.c.l.b16 %v1480
        %v1547 = vunpack.c.l.b16 %v1481
        %v1548 = vunpack.c.l.b16 %v1482
        %v1549 = vunpack.c.l.b16 %v1483
        %v1550 = vunpack.c.l.b16 %v1484
        %v1551 = vunpack.c.l.b16 %v1485
        %v1552 = vunpack.c.l.b16 %v1486
        %v1553 = vunpack.c.l.b16 %v1487
        %v1554 = vunpack.c.l.b16 %v1488
        %v1555 = vunpack.c.l.b16 %v1489
        %v1556 = vunpack.c.l.b16 %v1490
        %v1557 = vunpack.c.l.b16 %v1491
        %v1558 = vunpack.c.l.b16 %v1492
        %v1559 = vunpack.c.l.b16 %v1493
        %v1560 = vunpack.c.l.b16 %v1494
        %v1561 = vunpack.c.l.b16 %v1495
        %v1562 = vunpack.c.l.b16 %v1496
        %v1563 = vunpack.c.l.b16 %v1497
        %v1564 = vunpack.c.l.b16 %v1498
        %v1565 = vunpack.c.l.b16 %v1499
        %v1566 = vunpack.c.l.b16 %v1500
        %v1567 = vunpack.c.l.b16 %v1501
        %v1568 = vunpack.c.l.b16 %v1502
        %v1569 = vunpack.c.l.b16 %v1503
        %v1570 = vunpack.c.l.b16 %v1504
        %v1571 = vunpack.c.l.b16 %v1505
        %v1572 = vunpack.c.l.b16 %v1506
        %v1573 = vunpack.c.l.b16 %v1507
        %v1574 = vunpack.c.l.b16 %v1508
        %v1575 = vunpack.c.l.b16 %v1509
        %v1576 = vunpack.c.l.b16 %v1510
        %v1577 = vunpack.c.l.b16 %v1511
        %v1578 = vpack.c.b16 %v1547, %v1546
        %v1579 = vpack.c.b16 %v1549, %v1548
        %v1580 = vpack.c.b16 %v1551, %v1550
        %v1581 = vpack.c.b16 %v1553, %v1552
        %v1582 = vpack.c.b16 %v1555, %v1554
        %v1583 = vpack.c.b16 %v1557, %v1556
        %v1584 = vpack.c.b16 %v1559, %v1558
        %v1585 = vpack.c.b16 %v1561, %v1560
        %v1586 = vpack.c.b16 %v1563, %v1562
        %v1587 = vpack.c.b16 %v1565, %v1564
        %v1588 = vpack.c.b16 %v1567, %v1566
        %v1589 = vpack.c.b16 %v1569, %v1568
        %v1590 = vpack.c.b16 %v1571, %v1570
        %v1591 = vpack.c.b16 %v1573, %v1572
        %v1592 = vpack.c.b16 %v1575, %v1574
        %v1593 = vpack.c.b16 %v1577, %v1576
        %v1595 = vsel %vm458, %v1578, 0
        %v1598 = vsel %vm458, %v1579, 0
        %v1601 = vsel %vm458, %v1580, 0
        %v1604 = vsel %vm458, %v1581, 0
        %v1607 = vsel %vm458, %v1582, 0
        %v1610 = vsel %vm458, %v1583, 0
        %v1613 = vsel %vm458, %v1584, 0
        %v1616 = vsel %vm458, %v1585, 0
        %v1619 = vsel %vm458, %v1586, 0
        %v1622 = vsel %vm458, %v1587, 0
        %v1625 = vsel %vm458, %v1588, 0
        %v1628 = vsel %vm458, %v1589, 0
        %v1631 = vsel %vm458, %v1590, 0
        %v1634 = vsel %vm458, %v1591, 0
        %v1637 = vsel %vm458, %v1592, 0
        %v1640 = vsel %vm458, %v1593, 0
        %v1643 = vand.u32 %v1513, %v510
        %1645 = vmatpush.bf16.msra.mxu0 0
        %1646 = vmatpush.bf16.msra.mxu0 0
        %1647 = vmatpush.bf16.msra.mxu0 0
        %1648 = vmatpush.bf16.msra.mxu0 0
        %1649 = vmatpush.bf16.msra.mxu0 0
        %1650 = vmatpush.bf16.msra.mxu0 0
        %1651 = vmatpush.bf16.msra.mxu0 0
        %1652 = vmatpush.bf16.msra.mxu0 %v1643
        %1653 = vmatmul.bf16.gmra.mxu0 %v1595
        %v1654 = vpop.f32.mrf.mxu0
        %v1655 = vadd.f32 0.0, %v1654
        %v1656 = vpop.f32.mrf.mxu0
        %v1657 = vadd.f32 0.0, %v1656
        %1658 = vmatmul.bf16.gmra.mxu0 %v1598
        %v1659 = vpop.f32.mrf.mxu0
        %v1660 = vadd.f32 0.0, %v1659
        %v1661 = vpop.f32.mrf.mxu0
        %v1662 = vadd.f32 0.0, %v1661
        %1663 = vmatmul.bf16.gmra.mxu0 %v1601
        %v1664 = vpop.f32.mrf.mxu0
        %v1665 = vadd.f32 0.0, %v1664
        %v1666 = vpop.f32.mrf.mxu0
        %v1667 = vadd.f32 0.0, %v1666
        %1668 = vmatmul.bf16.gmra.mxu0 %v1604
        %v1669 = vpop.f32.mrf.mxu0
        %v1670 = vadd.f32 0.0, %v1669
        %v1671 = vpop.f32.mrf.mxu0
        %v1672 = vadd.f32 0.0, %v1671
        %1673 = vmatmul.bf16.gmra.mxu0 %v1607
        %v1674 = vpop.f32.mrf.mxu0
        %v1675 = vadd.f32 0.0, %v1674
        %v1676 = vpop.f32.mrf.mxu0
        %v1677 = vadd.f32 0.0, %v1676
        %1678 = vmatmul.bf16.gmra.mxu0 %v1610
        %v1679 = vpop.f32.mrf.mxu0
        %v1680 = vadd.f32 0.0, %v1679
        %v1681 = vpop.f32.mrf.mxu0
        %v1682 = vadd.f32 0.0, %v1681
        %1683 = vmatmul.bf16.gmra.mxu0 %v1613
        %v1684 = vpop.f32.mrf.mxu0
        %v1685 = vadd.f32 0.0, %v1684
        %v1686 = vpop.f32.mrf.mxu0
        %v1687 = vadd.f32 0.0, %v1686
        %1688 = vmatmul.bf16.gmra.mxu0 %v1616
        %v1689 = vpop.f32.mrf.mxu0
        %v1690 = vadd.f32 0.0, %v1689
        %v1691 = vpop.f32.mrf.mxu0
        %v1692 = vadd.f32 0.0, %v1691
        %1693 = vmatmul.bf16.gmra.mxu0 %v1619
        %v1694 = vpop.f32.mrf.mxu0
        %v1695 = vadd.f32 0.0, %v1694
        %v1696 = vpop.f32.mrf.mxu0
        %v1697 = vadd.f32 0.0, %v1696
        %1698 = vmatmul.bf16.gmra.mxu0 %v1622
        %v1699 = vpop.f32.mrf.mxu0
        %v1700 = vadd.f32 0.0, %v1699
        %v1701 = vpop.f32.mrf.mxu0
        %v1702 = vadd.f32 0.0, %v1701
        %1703 = vmatmul.bf16.gmra.mxu0 %v1625
        %v1704 = vpop.f32.mrf.mxu0
        %v1705 = vadd.f32 0.0, %v1704
        %v1706 = vpop.f32.mrf.mxu0
        %v1707 = vadd.f32 0.0, %v1706
        %1708 = vmatmul.bf16.gmra.mxu0 %v1628
        %v1709 = vpop.f32.mrf.mxu0
        %v1710 = vadd.f32 0.0, %v1709
        %v1711 = vpop.f32.mrf.mxu0
        %v1712 = vadd.f32 0.0, %v1711
        %1713 = vmatmul.bf16.gmra.mxu0 %v1631
        %v1714 = vpop.f32.mrf.mxu0
        %v1715 = vadd.f32 0.0, %v1714
        %v1716 = vpop.f32.mrf.mxu0
        %v1717 = vadd.f32 0.0, %v1716
        %1718 = vmatmul.bf16.gmra.mxu0 %v1634
        %v1719 = vpop.f32.mrf.mxu0
        %v1720 = vadd.f32 0.0, %v1719
        %v1721 = vpop.f32.mrf.mxu0
        %v1722 = vadd.f32 0.0, %v1721
        %1723 = vmatmul.bf16.gmra.mxu0 %v1637
        %v1724 = vpop.f32.mrf.mxu0
        %v1725 = vadd.f32 0.0, %v1724
        %v1726 = vpop.f32.mrf.mxu0
        %v1727 = vadd.f32 0.0, %v1726
        %1728 = vmatmul.bf16.gmra.mxu0 %v1640
        %v1729 = vpop.f32.mrf.mxu0
        %v1730 = vadd.f32 0.0, %v1729
        %v1731 = vpop.f32.mrf.mxu0
        %v1732 = vadd.f32 0.0, %v1731
        %1733 = vdwg.mxu0
        %v1734 = vadd.f32 %v1448, %v1655
        %v1735 = vadd.f32 %v1449, %v1657
        %v1736 = vadd.f32 %v1450, %v1660
        %v1737 = vadd.f32 %v1451, %v1662
        %v1738 = vadd.f32 %v1452, %v1665
        %v1739 = vadd.f32 %v1453, %v1667
        %v1740 = vadd.f32 %v1454, %v1670
        %v1741 = vadd.f32 %v1455, %v1672
        %v1742 = vadd.f32 %v1456, %v1675
        %v1743 = vadd.f32 %v1457, %v1677
        %v1744 = vadd.f32 %v1458, %v1680
        %v1745 = vadd.f32 %v1459, %v1682
        %v1746 = vadd.f32 %v1460, %v1685
        %v1747 = vadd.f32 %v1461, %v1687
        %v1748 = vadd.f32 %v1462, %v1690
        %v1749 = vadd.f32 %v1463, %v1692
        %v1750 = vadd.f32 %v1464, %v1695
        %v1751 = vadd.f32 %v1465, %v1697
        %v1752 = vadd.f32 %v1466, %v1700
        %v1753 = vadd.f32 %v1467, %v1702
        %v1754 = vadd.f32 %v1468, %v1705
        %v1755 = vadd.f32 %v1469, %v1707
        %v1756 = vadd.f32 %v1470, %v1710
        %v1757 = vadd.f32 %v1471, %v1712
        %v1758 = vadd.f32 %v1472, %v1715
        %v1759 = vadd.f32 %v1473, %v1717
        %v1760 = vadd.f32 %v1474, %v1720
        %v1761 = vadd.f32 %v1475, %v1722
        %v1762 = vadd.f32 %v1476, %v1725
        %v1763 = vadd.f32 %v1477, %v1727
        %v1764 = vadd.f32 %v1478, %v1730
        %v1765 = vadd.f32 %v1479, %v1732
        %v1766 = vld [vmem:[%s309] sm:$0xf]
        %v1767 = vld [vmem:[%s309 + $0x4] sm:$0xf]
        %v1768 = vld [vmem:[%s309 + $0xc] sm:$0xf]
        %v1769 = vld [vmem:[%s309 + $0x10] sm:$0xf]
        %v1770 = vld [vmem:[%s309 + $0x18] sm:$0xf]
        %v1771 = vld [vmem:[%s309 + $0x1c] sm:$0xf]
        %v1772 = vld [vmem:[%s309 + $0x24] sm:$0xf]
        %v1773 = vld [vmem:[%s309 + $0x28] sm:$0xf]
        %v1774 = vld [vmem:[%s309 + $0x30] sm:$0xf]
        %v1775 = vld [vmem:[%s309 + $0x34] sm:$0xf]
        %v1776 = vld [vmem:[%s309 + $0x3c] sm:$0xf]
        %v1777 = vld [vmem:[%s309 + $0x40] sm:$0xf]
        %v1778 = vld [vmem:[%s309 + $0x48] sm:$0xf]
        %v1779 = vld [vmem:[%s309 + $0x4c] sm:$0xf]
        %v1780 = vld [vmem:[%s309 + $0x54] sm:$0xf]
        %v1781 = vld [vmem:[%s309 + $0x58] sm:$0xf]
        %v1782 = vld [vmem:[%s309 + $0x60] sm:$0xf]
        %v1783 = vld [vmem:[%s309 + $0x64] sm:$0xf]
        %v1784 = vld [vmem:[%s309 + $0x6c] sm:$0xf]
        %v1785 = vld [vmem:[%s309 + $0x70] sm:$0xf]
        %v1786 = vld [vmem:[%s309 + $0x78] sm:$0xf]
        %v1787 = vld [vmem:[%s309 + $0x7c] sm:$0xf]
        %v1788 = vld [vmem:[%s309 + $0x84] sm:$0xf]
        %v1789 = vld [vmem:[%s309 + $0x88] sm:$0xf]
        %v1790 = vld [vmem:[%s309 + $0x90] sm:$0xf]
        %v1791 = vld [vmem:[%s309 + $0x94] sm:$0xf]
        %v1792 = vld [vmem:[%s309 + $0x9c] sm:$0xf]
        %v1793 = vld [vmem:[%s309 + $0xa0] sm:$0xf]
        %v1794 = vld [vmem:[%s309 + $0xa8] sm:$0xf]
        %v1795 = vld [vmem:[%s309 + $0xac] sm:$0xf]
        %v1796 = vld [vmem:[%s309 + $0xb4] sm:$0xf]
        %v1797 = vld [vmem:[%s309 + $0xb8] sm:$0xf]
        %s1798 = scalar_lea.vmem %s4, 8
        %v1799 = vld [vmem:[%s1798] sm:$0x3]
        %v1832 = vunpack.c.l.b16 %v1766
        %v1833 = vunpack.c.l.b16 %v1767
        %v1834 = vunpack.c.l.b16 %v1768
        %v1835 = vunpack.c.l.b16 %v1769
        %v1836 = vunpack.c.l.b16 %v1770
        %v1837 = vunpack.c.l.b16 %v1771
        %v1838 = vunpack.c.l.b16 %v1772
        %v1839 = vunpack.c.l.b16 %v1773
        %v1840 = vunpack.c.l.b16 %v1774
        %v1841 = vunpack.c.l.b16 %v1775
        %v1842 = vunpack.c.l.b16 %v1776
        %v1843 = vunpack.c.l.b16 %v1777
        %v1844 = vunpack.c.l.b16 %v1778
        %v1845 = vunpack.c.l.b16 %v1779
        %v1846 = vunpack.c.l.b16 %v1780
        %v1847 = vunpack.c.l.b16 %v1781
        %v1848 = vunpack.c.l.b16 %v1782
        %v1849 = vunpack.c.l.b16 %v1783
        %v1850 = vunpack.c.l.b16 %v1784
        %v1851 = vunpack.c.l.b16 %v1785
        %v1852 = vunpack.c.l.b16 %v1786
        %v1853 = vunpack.c.l.b16 %v1787
        %v1854 = vunpack.c.l.b16 %v1788
        %v1855 = vunpack.c.l.b16 %v1789
        %v1856 = vunpack.c.l.b16 %v1790
        %v1857 = vunpack.c.l.b16 %v1791
        %v1858 = vunpack.c.l.b16 %v1792
        %v1859 = vunpack.c.l.b16 %v1793
        %v1860 = vunpack.c.l.b16 %v1794
        %v1861 = vunpack.c.l.b16 %v1795
        %v1862 = vunpack.c.l.b16 %v1796
        %v1863 = vunpack.c.l.b16 %v1797
        %v1864 = vpack.c.b16 %v1833, %v1832
        %v1865 = vpack.c.b16 %v1835, %v1834
        %v1866 = vpack.c.b16 %v1837, %v1836
        %v1867 = vpack.c.b16 %v1839, %v1838
        %v1868 = vpack.c.b16 %v1841, %v1840
        %v1869 = vpack.c.b16 %v1843, %v1842
        %v1870 = vpack.c.b16 %v1845, %v1844
        %v1871 = vpack.c.b16 %v1847, %v1846
        %v1872 = vpack.c.b16 %v1849, %v1848
        %v1873 = vpack.c.b16 %v1851, %v1850
        %v1874 = vpack.c.b16 %v1853, %v1852
        %v1875 = vpack.c.b16 %v1855, %v1854
        %v1876 = vpack.c.b16 %v1857, %v1856
        %v1877 = vpack.c.b16 %v1859, %v1858
        %v1878 = vpack.c.b16 %v1861, %v1860
        %v1879 = vpack.c.b16 %v1863, %v1862
        %v1881 = vsel %vm458, %v1864, 0
        %v1884 = vsel %vm458, %v1865, 0
        %v1887 = vsel %vm458, %v1866, 0
        %v1890 = vsel %vm458, %v1867, 0
        %v1893 = vsel %vm458, %v1868, 0
        %v1896 = vsel %vm458, %v1869, 0
        %v1899 = vsel %vm458, %v1870, 0
        %v1902 = vsel %vm458, %v1871, 0
        %v1905 = vsel %vm458, %v1872, 0
        %v1908 = vsel %vm458, %v1873, 0
        %v1911 = vsel %vm458, %v1874, 0
        %v1914 = vsel %vm458, %v1875, 0
        %v1917 = vsel %vm458, %v1876, 0
        %v1920 = vsel %vm458, %v1877, 0
        %v1923 = vsel %vm458, %v1878, 0
        %v1926 = vsel %vm458, %v1879, 0
        %v1929 = vand.u32 %v1799, %v510
        %1931 = vmatpush.bf16.msra.mxu0 0
        %1932 = vmatpush.bf16.msra.mxu0 0
        %1933 = vmatpush.bf16.msra.mxu0 0
        %1934 = vmatpush.bf16.msra.mxu0 0
        %1935 = vmatpush.bf16.msra.mxu0 0
        %1936 = vmatpush.bf16.msra.mxu0 0
        %1937 = vmatpush.bf16.msra.mxu0 0
        %1938 = vmatpush.bf16.msra.mxu0 %v1929
        %1939 = vmatmul.bf16.gmra.mxu0 %v1881
        %v1940 = vpop.f32.mrf.mxu0
        %v1941 = vadd.f32 0.0, %v1940
        %v1942 = vpop.f32.mrf.mxu0
        %v1943 = vadd.f32 0.0, %v1942
        %1944 = vmatmul.bf16.gmra.mxu0 %v1884
        %v1945 = vpop.f32.mrf.mxu0
        %v1946 = vadd.f32 0.0, %v1945
        %v1947 = vpop.f32.mrf.mxu0
        %v1948 = vadd.f32 0.0, %v1947
        %1949 = vmatmul.bf16.gmra.mxu0 %v1887
        %v1950 = vpop.f32.mrf.mxu0
        %v1951 = vadd.f32 0.0, %v1950
        %v1952 = vpop.f32.mrf.mxu0
        %v1953 = vadd.f32 0.0, %v1952
        %1954 = vmatmul.bf16.gmra.mxu0 %v1890
        %v1955 = vpop.f32.mrf.mxu0
        %v1956 = vadd.f32 0.0, %v1955
        %v1957 = vpop.f32.mrf.mxu0
        %v1958 = vadd.f32 0.0, %v1957
        %1959 = vmatmul.bf16.gmra.mxu0 %v1893
        %v1960 = vpop.f32.mrf.mxu0
        %v1961 = vadd.f32 0.0, %v1960
        %v1962 = vpop.f32.mrf.mxu0
        %v1963 = vadd.f32 0.0, %v1962
        %1964 = vmatmul.bf16.gmra.mxu0 %v1896
        %v1965 = vpop.f32.mrf.mxu0
        %v1966 = vadd.f32 0.0, %v1965
        %v1967 = vpop.f32.mrf.mxu0
        %v1968 = vadd.f32 0.0, %v1967
        %1969 = vmatmul.bf16.gmra.mxu0 %v1899
        %v1970 = vpop.f32.mrf.mxu0
        %v1971 = vadd.f32 0.0, %v1970
        %v1972 = vpop.f32.mrf.mxu0
        %v1973 = vadd.f32 0.0, %v1972
        %1974 = vmatmul.bf16.gmra.mxu0 %v1902
        %v1975 = vpop.f32.mrf.mxu0
        %v1976 = vadd.f32 0.0, %v1975
        %v1977 = vpop.f32.mrf.mxu0
        %v1978 = vadd.f32 0.0, %v1977
        %1979 = vmatmul.bf16.gmra.mxu0 %v1905
        %v1980 = vpop.f32.mrf.mxu0
        %v1981 = vadd.f32 0.0, %v1980
        %v1982 = vpop.f32.mrf.mxu0
        %v1983 = vadd.f32 0.0, %v1982
        %1984 = vmatmul.bf16.gmra.mxu0 %v1908
        %v1985 = vpop.f32.mrf.mxu0
        %v1986 = vadd.f32 0.0, %v1985
        %v1987 = vpop.f32.mrf.mxu0
        %v1988 = vadd.f32 0.0, %v1987
        %1989 = vmatmul.bf16.gmra.mxu0 %v1911
        %v1990 = vpop.f32.mrf.mxu0
        %v1991 = vadd.f32 0.0, %v1990
        %v1992 = vpop.f32.mrf.mxu0
        %v1993 = vadd.f32 0.0, %v1992
        %1994 = vmatmul.bf16.gmra.mxu0 %v1914
        %v1995 = vpop.f32.mrf.mxu0
        %v1996 = vadd.f32 0.0, %v1995
        %v1997 = vpop.f32.mrf.mxu0
        %v1998 = vadd.f32 0.0, %v1997
        %1999 = vmatmul.bf16.gmra.mxu0 %v1917
        %v2000 = vpop.f32.mrf.mxu0
        %v2001 = vadd.f32 0.0, %v2000
        %v2002 = vpop.f32.mrf.mxu0
        %v2003 = vadd.f32 0.0, %v2002
        %2004 = vmatmul.bf16.gmra.mxu0 %v1920
        %v2005 = vpop.f32.mrf.mxu0
        %v2006 = vadd.f32 0.0, %v2005
        %v2007 = vpop.f32.mrf.mxu0
        %v2008 = vadd.f32 0.0, %v2007
        %2009 = vmatmul.bf16.gmra.mxu0 %v1923
        %v2010 = vpop.f32.mrf.mxu0
        %v2011 = vadd.f32 0.0, %v2010
        %v2012 = vpop.f32.mrf.mxu0
        %v2013 = vadd.f32 0.0, %v2012
        %2014 = vmatmul.bf16.gmra.mxu0 %v1926
        %v2015 = vpop.f32.mrf.mxu0
        %v2016 = vadd.f32 0.0, %v2015
        %v2017 = vpop.f32.mrf.mxu0
        %v2018 = vadd.f32 0.0, %v2017
        %2019 = vdwg.mxu0
        %v2020 = vadd.f32 %v1734, %v1941
        %v2021 = vadd.f32 %v1735, %v1943
        %v2022 = vadd.f32 %v1736, %v1946
        %v2023 = vadd.f32 %v1737, %v1948
        %v2024 = vadd.f32 %v1738, %v1951
        %v2025 = vadd.f32 %v1739, %v1953
        %v2026 = vadd.f32 %v1740, %v1956
        %v2027 = vadd.f32 %v1741, %v1958
        %v2028 = vadd.f32 %v1742, %v1961
        %v2029 = vadd.f32 %v1743, %v1963
        %v2030 = vadd.f32 %v1744, %v1966
        %v2031 = vadd.f32 %v1745, %v1968
        %v2032 = vadd.f32 %v1746, %v1971
        %v2033 = vadd.f32 %v1747, %v1973
        %v2034 = vadd.f32 %v1748, %v1976
        %v2035 = vadd.f32 %v1749, %v1978
        %v2036 = vadd.f32 %v1750, %v1981
        %v2037 = vadd.f32 %v1751, %v1983
        %v2038 = vadd.f32 %v1752, %v1986
        %v2039 = vadd.f32 %v1753, %v1988
        %v2040 = vadd.f32 %v1754, %v1991
        %v2041 = vadd.f32 %v1755, %v1993
        %v2042 = vadd.f32 %v1756, %v1996
        %v2043 = vadd.f32 %v1757, %v1998
        %v2044 = vadd.f32 %v1758, %v2001
        %v2045 = vadd.f32 %v1759, %v2003
        %v2046 = vadd.f32 %v1760, %v2006
        %v2047 = vadd.f32 %v1761, %v2008
        %v2048 = vadd.f32 %v1762, %v2011
        %v2049 = vadd.f32 %v1763, %v2013
        %v2050 = vadd.f32 %v1764, %v2016
        %v2051 = vadd.f32 %v1765, %v2018
        %v2052 = vld [vmem:[%s304] sm:$0xf]
        %v2053 = vld [vmem:[%s304 + $0x4] sm:$0xf]
        %v2054 = vld [vmem:[%s304 + $0x8] sm:$0x1]
        %v2055 = vld [vmem:[%s304 + $0xc] sm:$0xf]
        %v2056 = vld [vmem:[%s304 + $0x10] sm:$0xf]
        %v2057 = vld [vmem:[%s304 + $0x14] sm:$0x1]
        %v2058 = vld [vmem:[%s304 + $0x18] sm:$0xf]
        %v2059 = vld [vmem:[%s304 + $0x1c] sm:$0xf]
        %v2060 = vld [vmem:[%s304 + $0x20] sm:$0x1]
        %v2061 = vld [vmem:[%s304 + $0x24] sm:$0xf]
        %v2062 = vld [vmem:[%s304 + $0x28] sm:$0xf]
        %v2063 = vld [vmem:[%s304 + $0x2c] sm:$0x1]
        %v2064 = vld [vmem:[%s304 + $0x30] sm:$0xf]
        %v2065 = vld [vmem:[%s304 + $0x34] sm:$0xf]
        %v2066 = vld [vmem:[%s304 + $0x38] sm:$0x1]
        %v2067 = vld [vmem:[%s304 + $0x3c] sm:$0xf]
        %v2068 = vld [vmem:[%s304 + $0x40] sm:$0xf]
        %v2069 = vld [vmem:[%s304 + $0x44] sm:$0x1]
        %v2070 = vld [vmem:[%s304 + $0x48] sm:$0xf]
        %v2071 = vld [vmem:[%s304 + $0x4c] sm:$0xf]
        %v2072 = vld [vmem:[%s304 + $0x50] sm:$0x1]
        %v2073 = vld [vmem:[%s304 + $0x54] sm:$0xf]
        %v2074 = vld [vmem:[%s304 + $0x58] sm:$0xf]
        %v2075 = vld [vmem:[%s304 + $0x5c] sm:$0x1]
        %v2076 = vld [vmem:[%s304 + $0x60] sm:$0xf]
        %v2077 = vld [vmem:[%s304 + $0x64] sm:$0xf]
        %v2078 = vld [vmem:[%s304 + $0x68] sm:$0x1]
        %v2079 = vld [vmem:[%s304 + $0x6c] sm:$0xf]
        %v2080 = vld [vmem:[%s304 + $0x70] sm:$0xf]
        %v2081 = vld [vmem:[%s304 + $0x74] sm:$0x1]
        %v2082 = vld [vmem:[%s304 + $0x78] sm:$0xf]
        %v2083 = vld [vmem:[%s304 + $0x7c] sm:$0xf]
        %v2084 = vld [vmem:[%s304 + $0x80] sm:$0x1]
        %v2085 = vld [vmem:[%s304 + $0x84] sm:$0xf]
        %v2086 = vld [vmem:[%s304 + $0x88] sm:$0xf]
        %v2087 = vld [vmem:[%s304 + $0x8c] sm:$0x1]
        %v2088 = vld [vmem:[%s304 + $0x90] sm:$0xf]
        %v2089 = vld [vmem:[%s304 + $0x94] sm:$0xf]
        %v2090 = vld [vmem:[%s304 + $0x98] sm:$0x1]
        %v2091 = vld [vmem:[%s304 + $0x9c] sm:$0xf]
        %v2092 = vld [vmem:[%s304 + $0xa0] sm:$0xf]
        %v2093 = vld [vmem:[%s304 + $0xa4] sm:$0x1]
        %v2094 = vld [vmem:[%s304 + $0xa8] sm:$0xf]
        %v2095 = vld [vmem:[%s304 + $0xac] sm:$0xf]
        %v2096 = vld [vmem:[%s304 + $0xb0] sm:$0x1]
        %v2097 = vld [vmem:[%s304 + $0xb4] sm:$0xf]
        %v2098 = vld [vmem:[%s304 + $0xb8] sm:$0xf]
        %v2099 = vld [vmem:[%s304 + $0xbc] sm:$0x1]
        %v2101 = vshrl.u32 %v2052, 16
        %v2103 = vrot.slane %v2101, 4
        %v2104 = vshll.u32 %v2052, 16
        %v2106 = vrot.slane %v2104, 5
        %v2107 = vor.u32 %v2103, %v2106
        %v2108 = vrot.slane %v2107, 4
        %v2110 = vshll.u32 %v2053, 16
        %v2112 = vrot.slane %v2110, 5
        %v2113 = vsel %vm873, %v2108, %v2112
        %v2114 = vshrl.u32 %v2053, 16
        %v2116 = vrot.slane %v2114, 4
        %v2117 = vor.u32 %v2116, %v2112
        %v2118 = vrot.slane %v2117, 4
        %v2120 = vshll.u32 %v2054, 16
        %v2122 = vrot.slane %v2120, 5
        %v2123 = vsel %vm873, %v2118, %v2122
        %v2125 = vshrl.u32 %v2055, 16
        %v2127 = vrot.slane %v2125, 4
        %v2128 = vshll.u32 %v2055, 16
        %v2130 = vrot.slane %v2128, 5
        %v2131 = vor.u32 %v2127, %v2130
        %v2132 = vrot.slane %v2131, 4
        %v2134 = vshll.u32 %v2056, 16
        %v2136 = vrot.slane %v2134, 5
        %v2137 = vsel %vm873, %v2132, %v2136
        %v2138 = vshrl.u32 %v2056, 16
        %v2140 = vrot.slane %v2138, 4
        %v2141 = vor.u32 %v2140, %v2136
        %v2142 = vrot.slane %v2141, 4
        %v2144 = vshll.u32 %v2057, 16
        %v2146 = vrot.slane %v2144, 5
        %v2147 = vsel %vm873, %v2142, %v2146
        %v2149 = vshrl.u32 %v2058, 16
        %v2151 = vrot.slane %v2149, 4
        %v2152 = vshll.u32 %v2058, 16
        %v2154 = vrot.slane %v2152, 5
        %v2155 = vor.u32 %v2151, %v2154
        %v2156 = vrot.slane %v2155, 4
        %v2158 = vshll.u32 %v2059, 16
        %v2160 = vrot.slane %v2158, 5
        %v2161 = vsel %vm873, %v2156, %v2160
        %v2162 = vshrl.u32 %v2059, 16
        %v2164 = vrot.slane %v2162, 4
        %v2165 = vor.u32 %v2164, %v2160
        %v2166 = vrot.slane %v2165, 4
        %v2168 = vshll.u32 %v2060, 16
        %v2170 = vrot.slane %v2168, 5
        %v2171 = vsel %vm873, %v2166, %v2170
        %v2173 = vshrl.u32 %v2061, 16
        %v2175 = vrot.slane %v2173, 4
        %v2176 = vshll.u32 %v2061, 16
        %v2178 = vrot.slane %v2176, 5
        %v2179 = vor.u32 %v2175, %v2178
        %v2180 = vrot.slane %v2179, 4
        %v2182 = vshll.u32 %v2062, 16
        %v2184 = vrot.slane %v2182, 5
        %v2185 = vsel %vm873, %v2180, %v2184
        %v2186 = vshrl.u32 %v2062, 16
        %v2188 = vrot.slane %v2186, 4
        %v2189 = vor.u32 %v2188, %v2184
        %v2190 = vrot.slane %v2189, 4
        %v2192 = vshll.u32 %v2063, 16
        %v2194 = vrot.slane %v2192, 5
        %v2195 = vsel %vm873, %v2190, %v2194
        %v2197 = vshrl.u32 %v2064, 16
        %v2199 = vrot.slane %v2197, 4
        %v2200 = vshll.u32 %v2064, 16
        %v2202 = vrot.slane %v2200, 5
        %v2203 = vor.u32 %v2199, %v2202
        %v2204 = vrot.slane %v2203, 4
        %v2206 = vshll.u32 %v2065, 16
        %v2208 = vrot.slane %v2206, 5
        %v2209 = vsel %vm873, %v2204, %v2208
        %v2210 = vshrl.u32 %v2065, 16
        %v2212 = vrot.slane %v2210, 4
        %v2213 = vor.u32 %v2212, %v2208
        %v2214 = vrot.slane %v2213, 4
        %v2216 = vshll.u32 %v2066, 16
        %v2218 = vrot.slane %v2216, 5
        %v2219 = vsel %vm873, %v2214, %v2218
        %v2221 = vshrl.u32 %v2067, 16
        %v2223 = vrot.slane %v2221, 4
        %v2224 = vshll.u32 %v2067, 16
        %v2226 = vrot.slane %v2224, 5
        %v2227 = vor.u32 %v2223, %v2226
        %v2228 = vrot.slane %v2227, 4
        %v2230 = vshll.u32 %v2068, 16
        %v2232 = vrot.slane %v2230, 5
        %v2233 = vsel %vm873, %v2228, %v2232
        %v2234 = vshrl.u32 %v2068, 16
        %v2236 = vrot.slane %v2234, 4
        %v2237 = vor.u32 %v2236, %v2232
        %v2238 = vrot.slane %v2237, 4
        %v2240 = vshll.u32 %v2069, 16
        %v2242 = vrot.slane %v2240, 5
        %v2243 = vsel %vm873, %v2238, %v2242
        %v2245 = vshrl.u32 %v2070, 16
        %v2247 = vrot.slane %v2245, 4
        %v2248 = vshll.u32 %v2070, 16
        %v2250 = vrot.slane %v2248, 5
        %v2251 = vor.u32 %v2247, %v2250
        %v2252 = vrot.slane %v2251, 4
        %v2254 = vshll.u32 %v2071, 16
        %v2256 = vrot.slane %v2254, 5
        %v2257 = vsel %vm873, %v2252, %v2256
        %v2258 = vshrl.u32 %v2071, 16
        %v2260 = vrot.slane %v2258, 4
        %v2261 = vor.u32 %v2260, %v2256
        %v2262 = vrot.slane %v2261, 4
        %v2264 = vshll.u32 %v2072, 16
        %v2266 = vrot.slane %v2264, 5
        %v2267 = vsel %vm873, %v2262, %v2266
        %v2269 = vshrl.u32 %v2073, 16
        %v2271 = vrot.slane %v2269, 4
        %v2272 = vshll.u32 %v2073, 16
        %v2274 = vrot.slane %v2272, 5
        %v2275 = vor.u32 %v2271, %v2274
        %v2276 = vrot.slane %v2275, 4
        %v2278 = vshll.u32 %v2074, 16
        %v2280 = vrot.slane %v2278, 5
        %v2281 = vsel %vm873, %v2276, %v2280
        %v2282 = vshrl.u32 %v2074, 16
        %v2284 = vrot.slane %v2282, 4
        %v2285 = vor.u32 %v2284, %v2280
        %v2286 = vrot.slane %v2285, 4
        %v2288 = vshll.u32 %v2075, 16
        %v2290 = vrot.slane %v2288, 5
        %v2291 = vsel %vm873, %v2286, %v2290
        %v2293 = vshrl.u32 %v2076, 16
        %v2295 = vrot.slane %v2293, 4
        %v2296 = vshll.u32 %v2076, 16
        %v2298 = vrot.slane %v2296, 5
        %v2299 = vor.u32 %v2295, %v2298
        %v2300 = vrot.slane %v2299, 4
        %v2302 = vshll.u32 %v2077, 16
        %v2304 = vrot.slane %v2302, 5
        %v2305 = vsel %vm873, %v2300, %v2304
        %v2306 = vshrl.u32 %v2077, 16
        %v2308 = vrot.slane %v2306, 4
        %v2309 = vor.u32 %v2308, %v2304
        %v2310 = vrot.slane %v2309, 4
        %v2312 = vshll.u32 %v2078, 16
        %v2314 = vrot.slane %v2312, 5
        %v2315 = vsel %vm873, %v2310, %v2314
        %v2317 = vshrl.u32 %v2079, 16
        %v2319 = vrot.slane %v2317, 4
        %v2320 = vshll.u32 %v2079, 16
        %v2322 = vrot.slane %v2320, 5
        %v2323 = vor.u32 %v2319, %v2322
        %v2324 = vrot.slane %v2323, 4
        %v2326 = vshll.u32 %v2080, 16
        %v2328 = vrot.slane %v2326, 5
        %v2329 = vsel %vm873, %v2324, %v2328
        %v2330 = vshrl.u32 %v2080, 16
        %v2332 = vrot.slane %v2330, 4
        %v2333 = vor.u32 %v2332, %v2328
        %v2334 = vrot.slane %v2333, 4
        %v2336 = vshll.u32 %v2081, 16
        %v2338 = vrot.slane %v2336, 5
        %v2339 = vsel %vm873, %v2334, %v2338
        %v2341 = vshrl.u32 %v2082, 16
        %v2343 = vrot.slane %v2341, 4
        %v2344 = vshll.u32 %v2082, 16
        %v2346 = vrot.slane %v2344, 5
        %v2347 = vor.u32 %v2343, %v2346
        %v2348 = vrot.slane %v2347, 4
        %v2350 = vshll.u32 %v2083, 16
        %v2352 = vrot.slane %v2350, 5
        %v2353 = vsel %vm873, %v2348, %v2352
        %v2354 = vshrl.u32 %v2083, 16
        %v2356 = vrot.slane %v2354, 4
        %v2357 = vor.u32 %v2356, %v2352
        %v2358 = vrot.slane %v2357, 4
        %v2360 = vshll.u32 %v2084, 16
        %v2362 = vrot.slane %v2360, 5
        %v2363 = vsel %vm873, %v2358, %v2362
        %v2365 = vshrl.u32 %v2085, 16
        %v2367 = vrot.slane %v2365, 4
        %v2368 = vshll.u32 %v2085, 16
        %v2370 = vrot.slane %v2368, 5
        %v2371 = vor.u32 %v2367, %v2370
        %v2372 = vrot.slane %v2371, 4
        %v2374 = vshll.u32 %v2086, 16
        %v2376 = vrot.slane %v2374, 5
        %v2377 = vsel %vm873, %v2372, %v2376
        %v2378 = vshrl.u32 %v2086, 16
        %v2380 = vrot.slane %v2378, 4
        %v2381 = vor.u32 %v2380, %v2376
        %v2382 = vrot.slane %v2381, 4
        %v2384 = vshll.u32 %v2087, 16
        %v2386 = vrot.slane %v2384, 5
        %v2387 = vsel %vm873, %v2382, %v2386
        %v2389 = vshrl.u32 %v2088, 16
        %v2391 = vrot.slane %v2389, 4
        %v2392 = vshll.u32 %v2088, 16
        %v2394 = vrot.slane %v2392, 5
        %v2395 = vor.u32 %v2391, %v2394
        %v2396 = vrot.slane %v2395, 4
        %v2398 = vshll.u32 %v2089, 16
        %v2400 = vrot.slane %v2398, 5
        %v2401 = vsel %vm873, %v2396, %v2400
        %v2402 = vshrl.u32 %v2089, 16
        %v2404 = vrot.slane %v2402, 4
        %v2405 = vor.u32 %v2404, %v2400
        %v2406 = vrot.slane %v2405, 4
        %v2408 = vshll.u32 %v2090, 16
        %v2410 = vrot.slane %v2408, 5
        %v2411 = vsel %vm873, %v2406, %v2410
        %v2413 = vshrl.u32 %v2091, 16
        %v2415 = vrot.slane %v2413, 4
        %v2416 = vshll.u32 %v2091, 16
        %v2418 = vrot.slane %v2416, 5
        %v2419 = vor.u32 %v2415, %v2418
        %v2420 = vrot.slane %v2419, 4
        %v2422 = vshll.u32 %v2092, 16
        %v2424 = vrot.slane %v2422, 5
        %v2425 = vsel %vm873, %v2420, %v2424
        %v2426 = vshrl.u32 %v2092, 16
        %v2428 = vrot.slane %v2426, 4
        %v2429 = vor.u32 %v2428, %v2424
        %v2430 = vrot.slane %v2429, 4
        %v2432 = vshll.u32 %v2093, 16
        %v2434 = vrot.slane %v2432, 5
        %v2435 = vsel %vm873, %v2430, %v2434
        %v2437 = vshrl.u32 %v2094, 16
        %v2439 = vrot.slane %v2437, 4
        %v2440 = vshll.u32 %v2094, 16
        %v2442 = vrot.slane %v2440, 5
        %v2443 = vor.u32 %v2439, %v2442
        %v2444 = vrot.slane %v2443, 4
        %v2446 = vshll.u32 %v2095, 16
        %v2448 = vrot.slane %v2446, 5
        %v2449 = vsel %vm873, %v2444, %v2448
        %v2450 = vshrl.u32 %v2095, 16
        %v2452 = vrot.slane %v2450, 4
        %v2453 = vor.u32 %v2452, %v2448
        %v2454 = vrot.slane %v2453, 4
        %v2456 = vshll.u32 %v2096, 16
        %v2458 = vrot.slane %v2456, 5
        %v2459 = vsel %vm873, %v2454, %v2458
        %v2461 = vshrl.u32 %v2097, 16
        %v2463 = vrot.slane %v2461, 4
        %v2464 = vshll.u32 %v2097, 16
        %v2466 = vrot.slane %v2464, 5
        %v2467 = vor.u32 %v2463, %v2466
        %v2468 = vrot.slane %v2467, 4
        %v2470 = vshll.u32 %v2098, 16
        %v2472 = vrot.slane %v2470, 5
        %v2473 = vsel %vm873, %v2468, %v2472
        %v2474 = vshrl.u32 %v2098, 16
        %v2476 = vrot.slane %v2474, 4
        %v2477 = vor.u32 %v2476, %v2472
        %v2478 = vrot.slane %v2477, 4
        %v2480 = vshll.u32 %v2099, 16
        %v2482 = vrot.slane %v2480, 5
        %v2483 = vsel %vm873, %v2478, %v2482
        %s2484 = scalar_lea.vmem %s4, 10
        %v2485 = vld [vmem:[%s2484] sm:$0x3]
        %v2486 = vunpack.c.l.b16 %v2113
        %v2487 = vunpack.c.l.b16 %v2123
        %v2488 = vunpack.c.l.b16 %v2137
        %v2489 = vunpack.c.l.b16 %v2147
        %v2490 = vunpack.c.l.b16 %v2161
        %v2491 = vunpack.c.l.b16 %v2171
        %v2492 = vunpack.c.l.b16 %v2185
        %v2493 = vunpack.c.l.b16 %v2195
        %v2494 = vunpack.c.l.b16 %v2209
        %v2495 = vunpack.c.l.b16 %v2219
        %v2496 = vunpack.c.l.b16 %v2233
        %v2497 = vunpack.c.l.b16 %v2243
        %v2498 = vunpack.c.l.b16 %v2257
        %v2499 = vunpack.c.l.b16 %v2267
        %v2500 = vunpack.c.l.b16 %v2281
        %v2501 = vunpack.c.l.b16 %v2291
        %v2502 = vunpack.c.l.b16 %v2305
        %v2503 = vunpack.c.l.b16 %v2315
        %v2504 = vunpack.c.l.b16 %v2329
        %v2505 = vunpack.c.l.b16 %v2339
        %v2506 = vunpack.c.l.b16 %v2353
        %v2507 = vunpack.c.l.b16 %v2363
        %v2508 = vunpack.c.l.b16 %v2377
        %v2509 = vunpack.c.l.b16 %v2387
        %v2510 = vunpack.c.l.b16 %v2401
        %v2511 = vunpack.c.l.b16 %v2411
        %v2512 = vunpack.c.l.b16 %v2425
        %v2513 = vunpack.c.l.b16 %v2435
        %v2514 = vunpack.c.l.b16 %v2449
        %v2515 = vunpack.c.l.b16 %v2459
        %v2516 = vunpack.c.l.b16 %v2473
        %v2517 = vunpack.c.l.b16 %v2483
        %v2518 = vpack.c.b16 %v2487, %v2486
        %v2519 = vpack.c.b16 %v2489, %v2488
        %v2520 = vpack.c.b16 %v2491, %v2490
        %v2521 = vpack.c.b16 %v2493, %v2492
        %v2522 = vpack.c.b16 %v2495, %v2494
        %v2523 = vpack.c.b16 %v2497, %v2496
        %v2524 = vpack.c.b16 %v2499, %v2498
        %v2525 = vpack.c.b16 %v2501, %v2500
        %v2526 = vpack.c.b16 %v2503, %v2502
        %v2527 = vpack.c.b16 %v2505, %v2504
        %v2528 = vpack.c.b16 %v2507, %v2506
        %v2529 = vpack.c.b16 %v2509, %v2508
        %v2530 = vpack.c.b16 %v2511, %v2510
        %v2531 = vpack.c.b16 %v2513, %v2512
        %v2532 = vpack.c.b16 %v2515, %v2514
        %v2533 = vpack.c.b16 %v2517, %v2516
        %v2535 = vsel %vm458, %v2518, 0
        %v2538 = vsel %vm458, %v2519, 0
        %v2541 = vsel %vm458, %v2520, 0
        %v2544 = vsel %vm458, %v2521, 0
        %v2547 = vsel %vm458, %v2522, 0
        %v2550 = vsel %vm458, %v2523, 0
        %v2553 = vsel %vm458, %v2524, 0
        %v2556 = vsel %vm458, %v2525, 0
        %v2559 = vsel %vm458, %v2526, 0
        %v2562 = vsel %vm458, %v2527, 0
        %v2565 = vsel %vm458, %v2528, 0
        %v2568 = vsel %vm458, %v2529, 0
        %v2571 = vsel %vm458, %v2530, 0
        %v2574 = vsel %vm458, %v2531, 0
        %v2577 = vsel %vm458, %v2532, 0
        %v2580 = vsel %vm458, %v2533, 0
        %v2583 = vand.u32 %v2485, %v510
        %2585 = vmatpush.bf16.msra.mxu0 0
        %2586 = vmatpush.bf16.msra.mxu0 0
        %2587 = vmatpush.bf16.msra.mxu0 0
        %2588 = vmatpush.bf16.msra.mxu0 0
        %2589 = vmatpush.bf16.msra.mxu0 0
        %2590 = vmatpush.bf16.msra.mxu0 0
        %2591 = vmatpush.bf16.msra.mxu0 0
        %2592 = vmatpush.bf16.msra.mxu0 %v2583
        %2593 = vmatmul.bf16.gmra.mxu0 %v2535
        %v2594 = vpop.f32.mrf.mxu0
        %v2595 = vadd.f32 0.0, %v2594
        %v2596 = vpop.f32.mrf.mxu0
        %v2597 = vadd.f32 0.0, %v2596
        %2598 = vmatmul.bf16.gmra.mxu0 %v2538
        %v2599 = vpop.f32.mrf.mxu0
        %v2600 = vadd.f32 0.0, %v2599
        %v2601 = vpop.f32.mrf.mxu0
        %v2602 = vadd.f32 0.0, %v2601
        %2603 = vmatmul.bf16.gmra.mxu0 %v2541
        %v2604 = vpop.f32.mrf.mxu0
        %v2605 = vadd.f32 0.0, %v2604
        %v2606 = vpop.f32.mrf.mxu0
        %v2607 = vadd.f32 0.0, %v2606
        %2608 = vmatmul.bf16.gmra.mxu0 %v2544
        %v2609 = vpop.f32.mrf.mxu0
        %v2610 = vadd.f32 0.0, %v2609
        %v2611 = vpop.f32.mrf.mxu0
        %v2612 = vadd.f32 0.0, %v2611
        %2613 = vmatmul.bf16.gmra.mxu0 %v2547
        %v2614 = vpop.f32.mrf.mxu0
        %v2615 = vadd.f32 0.0, %v2614
        %v2616 = vpop.f32.mrf.mxu0
        %v2617 = vadd.f32 0.0, %v2616
        %2618 = vmatmul.bf16.gmra.mxu0 %v2550
        %v2619 = vpop.f32.mrf.mxu0
        %v2620 = vadd.f32 0.0, %v2619
        %v2621 = vpop.f32.mrf.mxu0
        %v2622 = vadd.f32 0.0, %v2621
        %2623 = vmatmul.bf16.gmra.mxu0 %v2553
        %v2624 = vpop.f32.mrf.mxu0
        %v2625 = vadd.f32 0.0, %v2624
        %v2626 = vpop.f32.mrf.mxu0
        %v2627 = vadd.f32 0.0, %v2626
        %2628 = vmatmul.bf16.gmra.mxu0 %v2556
        %v2629 = vpop.f32.mrf.mxu0
        %v2630 = vadd.f32 0.0, %v2629
        %v2631 = vpop.f32.mrf.mxu0
        %v2632 = vadd.f32 0.0, %v2631
        %2633 = vmatmul.bf16.gmra.mxu0 %v2559
        %v2634 = vpop.f32.mrf.mxu0
        %v2635 = vadd.f32 0.0, %v2634
        %v2636 = vpop.f32.mrf.mxu0
        %v2637 = vadd.f32 0.0, %v2636
        %2638 = vmatmul.bf16.gmra.mxu0 %v2562
        %v2639 = vpop.f32.mrf.mxu0
        %v2640 = vadd.f32 0.0, %v2639
        %v2641 = vpop.f32.mrf.mxu0
        %v2642 = vadd.f32 0.0, %v2641
        %2643 = vmatmul.bf16.gmra.mxu0 %v2565
        %v2644 = vpop.f32.mrf.mxu0
        %v2645 = vadd.f32 0.0, %v2644
        %v2646 = vpop.f32.mrf.mxu0
        %v2647 = vadd.f32 0.0, %v2646
        %2648 = vmatmul.bf16.gmra.mxu0 %v2568
        %v2649 = vpop.f32.mrf.mxu0
        %v2650 = vadd.f32 0.0, %v2649
        %v2651 = vpop.f32.mrf.mxu0
        %v2652 = vadd.f32 0.0, %v2651
        %2653 = vmatmul.bf16.gmra.mxu0 %v2571
        %v2654 = vpop.f32.mrf.mxu0
        %v2655 = vadd.f32 0.0, %v2654
        %v2656 = vpop.f32.mrf.mxu0
        %v2657 = vadd.f32 0.0, %v2656
        %2658 = vmatmul.bf16.gmra.mxu0 %v2574
        %v2659 = vpop.f32.mrf.mxu0
        %v2660 = vadd.f32 0.0, %v2659
        %v2661 = vpop.f32.mrf.mxu0
        %v2662 = vadd.f32 0.0, %v2661
        %2663 = vmatmul.bf16.gmra.mxu0 %v2577
        %v2664 = vpop.f32.mrf.mxu0
        %v2665 = vadd.f32 0.0, %v2664
        %v2666 = vpop.f32.mrf.mxu0
        %v2667 = vadd.f32 0.0, %v2666
        %2668 = vmatmul.bf16.gmra.mxu0 %v2580
        %v2669 = vpop.f32.mrf.mxu0
        %v2670 = vadd.f32 0.0, %v2669
        %v2671 = vpop.f32.mrf.mxu0
        %v2672 = vadd.f32 0.0, %v2671
        %2673 = vdwg.mxu0
        %v2674 = vadd.f32 %v2020, %v2595
        %v2675 = vadd.f32 %v2021, %v2597
        %v2676 = vadd.f32 %v2022, %v2600
        %v2677 = vadd.f32 %v2023, %v2602
        %v2678 = vadd.f32 %v2024, %v2605
        %v2679 = vadd.f32 %v2025, %v2607
        %v2680 = vadd.f32 %v2026, %v2610
        %v2681 = vadd.f32 %v2027, %v2612
        %v2682 = vadd.f32 %v2028, %v2615
        %v2683 = vadd.f32 %v2029, %v2617
        %v2684 = vadd.f32 %v2030, %v2620
        %v2685 = vadd.f32 %v2031, %v2622
        %v2686 = vadd.f32 %v2032, %v2625
        %v2687 = vadd.f32 %v2033, %v2627
        %v2688 = vadd.f32 %v2034, %v2630
        %v2689 = vadd.f32 %v2035, %v2632
        %v2690 = vadd.f32 %v2036, %v2635
        %v2691 = vadd.f32 %v2037, %v2637
        %v2692 = vadd.f32 %v2038, %v2640
        %v2693 = vadd.f32 %v2039, %v2642
        %v2694 = vadd.f32 %v2040, %v2645
        %v2695 = vadd.f32 %v2041, %v2647
        %v2696 = vadd.f32 %v2042, %v2650
        %v2697 = vadd.f32 %v2043, %v2652
        %v2698 = vadd.f32 %v2044, %v2655
        %v2699 = vadd.f32 %v2045, %v2657
        %v2700 = vadd.f32 %v2046, %v2660
        %v2701 = vadd.f32 %v2047, %v2662
        %v2702 = vadd.f32 %v2048, %v2665
        %v2703 = vadd.f32 %v2049, %v2667
        %v2704 = vadd.f32 %v2050, %v2670
        %v2705 = vadd.f32 %v2051, %v2672
        %s2706 = scalar_lea.vmem %s294, 12
        %v2707 = vld [vmem:[%s2706] sm:$0xf]
        %v2708 = vld [vmem:[%s2706 + $0x4] sm:$0xf]
        %v2709 = vld [vmem:[%s2706 + $0xc] sm:$0xf]
        %v2710 = vld [vmem:[%s2706 + $0x10] sm:$0xf]
        %v2711 = vld [vmem:[%s2706 + $0x18] sm:$0xf]
        %v2712 = vld [vmem:[%s2706 + $0x1c] sm:$0xf]
        %v2713 = vld [vmem:[%s2706 + $0x24] sm:$0xf]
        %v2714 = vld [vmem:[%s2706 + $0x28] sm:$0xf]
        %v2715 = vld [vmem:[%s2706 + $0x30] sm:$0xf]
        %v2716 = vld [vmem:[%s2706 + $0x34] sm:$0xf]
        %v2717 = vld [vmem:[%s2706 + $0x3c] sm:$0xf]
        %v2718 = vld [vmem:[%s2706 + $0x40] sm:$0xf]
        %v2719 = vld [vmem:[%s2706 + $0x48] sm:$0xf]
        %v2720 = vld [vmem:[%s2706 + $0x4c] sm:$0xf]
        %v2721 = vld [vmem:[%s2706 + $0x54] sm:$0xf]
        %v2722 = vld [vmem:[%s2706 + $0x58] sm:$0xf]
        %v2723 = vld [vmem:[%s2706 + $0x60] sm:$0xf]
        %v2724 = vld [vmem:[%s2706 + $0x64] sm:$0xf]
        %v2725 = vld [vmem:[%s2706 + $0x6c] sm:$0xf]
        %v2726 = vld [vmem:[%s2706 + $0x70] sm:$0xf]
        %v2727 = vld [vmem:[%s2706 + $0x78] sm:$0xf]
        %v2728 = vld [vmem:[%s2706 + $0x7c] sm:$0xf]
        %v2729 = vld [vmem:[%s2706 + $0x84] sm:$0xf]
        %v2730 = vld [vmem:[%s2706 + $0x88] sm:$0xf]
        %v2731 = vld [vmem:[%s2706 + $0x90] sm:$0xf]
        %v2732 = vld [vmem:[%s2706 + $0x94] sm:$0xf]
        %v2733 = vld [vmem:[%s2706 + $0x9c] sm:$0xf]
        %v2734 = vld [vmem:[%s2706 + $0xa0] sm:$0xf]
        %v2735 = vld [vmem:[%s2706 + $0xa8] sm:$0xf]
        %v2736 = vld [vmem:[%s2706 + $0xac] sm:$0xf]
        %v2737 = vld [vmem:[%s2706 + $0xb4] sm:$0xf]
        %v2738 = vld [vmem:[%s2706 + $0xb8] sm:$0xf]
        %s2739 = scalar_lea.vmem %s4, 12
        %v2740 = vld [vmem:[%s2739] sm:$0x3]
        %v2773 = vunpack.c.l.b16 %v2707
        %v2774 = vunpack.c.l.b16 %v2708
        %v2775 = vunpack.c.l.b16 %v2709
        %v2776 = vunpack.c.l.b16 %v2710
        %v2777 = vunpack.c.l.b16 %v2711
        %v2778 = vunpack.c.l.b16 %v2712
        %v2779 = vunpack.c.l.b16 %v2713
        %v2780 = vunpack.c.l.b16 %v2714
        %v2781 = vunpack.c.l.b16 %v2715
        %v2782 = vunpack.c.l.b16 %v2716
        %v2783 = vunpack.c.l.b16 %v2717
        %v2784 = vunpack.c.l.b16 %v2718
        %v2785 = vunpack.c.l.b16 %v2719
        %v2786 = vunpack.c.l.b16 %v2720
        %v2787 = vunpack.c.l.b16 %v2721
        %v2788 = vunpack.c.l.b16 %v2722
        %v2789 = vunpack.c.l.b16 %v2723
        %v2790 = vunpack.c.l.b16 %v2724
        %v2791 = vunpack.c.l.b16 %v2725
        %v2792 = vunpack.c.l.b16 %v2726
        %v2793 = vunpack.c.l.b16 %v2727
        %v2794 = vunpack.c.l.b16 %v2728
        %v2795 = vunpack.c.l.b16 %v2729
        %v2796 = vunpack.c.l.b16 %v2730
        %v2797 = vunpack.c.l.b16 %v2731
        %v2798 = vunpack.c.l.b16 %v2732
        %v2799 = vunpack.c.l.b16 %v2733
        %v2800 = vunpack.c.l.b16 %v2734
        %v2801 = vunpack.c.l.b16 %v2735
        %v2802 = vunpack.c.l.b16 %v2736
        %v2803 = vunpack.c.l.b16 %v2737
        %v2804 = vunpack.c.l.b16 %v2738
        %v2805 = vpack.c.b16 %v2774, %v2773
        %v2806 = vpack.c.b16 %v2776, %v2775
        %v2807 = vpack.c.b16 %v2778, %v2777
        %v2808 = vpack.c.b16 %v2780, %v2779
        %v2809 = vpack.c.b16 %v2782, %v2781
        %v2810 = vpack.c.b16 %v2784, %v2783
        %v2811 = vpack.c.b16 %v2786, %v2785
        %v2812 = vpack.c.b16 %v2788, %v2787
        %v2813 = vpack.c.b16 %v2790, %v2789
        %v2814 = vpack.c.b16 %v2792, %v2791
        %v2815 = vpack.c.b16 %v2794, %v2793
        %v2816 = vpack.c.b16 %v2796, %v2795
        %v2817 = vpack.c.b16 %v2798, %v2797
        %v2818 = vpack.c.b16 %v2800, %v2799
        %v2819 = vpack.c.b16 %v2802, %v2801
        %v2820 = vpack.c.b16 %v2804, %v2803
        %v2822 = vsel %vm458, %v2805, 0
        %v2825 = vsel %vm458, %v2806, 0
        %v2828 = vsel %vm458, %v2807, 0
        %v2831 = vsel %vm458, %v2808, 0
        %v2834 = vsel %vm458, %v2809, 0
        %v2837 = vsel %vm458, %v2810, 0
        %v2840 = vsel %vm458, %v2811, 0
        %v2843 = vsel %vm458, %v2812, 0
        %v2846 = vsel %vm458, %v2813, 0
        %v2849 = vsel %vm458, %v2814, 0
        %v2852 = vsel %vm458, %v2815, 0
        %v2855 = vsel %vm458, %v2816, 0
        %v2858 = vsel %vm458, %v2817, 0
        %v2861 = vsel %vm458, %v2818, 0
        %v2864 = vsel %vm458, %v2819, 0
        %v2867 = vsel %vm458, %v2820, 0
        %v2870 = vand.u32 %v2740, %v510
        %2872 = vmatpush.bf16.msra.mxu0 0
        %2873 = vmatpush.bf16.msra.mxu0 0
        %2874 = vmatpush.bf16.msra.mxu0 0
        %2875 = vmatpush.bf16.msra.mxu0 0
        %2876 = vmatpush.bf16.msra.mxu0 0
        %2877 = vmatpush.bf16.msra.mxu0 0
        %2878 = vmatpush.bf16.msra.mxu0 0
        %2879 = vmatpush.bf16.msra.mxu0 %v2870
        %2880 = vmatmul.bf16.gmra.mxu0 %v2822
        %v2881 = vpop.f32.mrf.mxu0
        %v2882 = vadd.f32 0.0, %v2881
        %v2883 = vpop.f32.mrf.mxu0
        %v2884 = vadd.f32 0.0, %v2883
        %2885 = vmatmul.bf16.gmra.mxu0 %v2825
        %v2886 = vpop.f32.mrf.mxu0
        %v2887 = vadd.f32 0.0, %v2886
        %v2888 = vpop.f32.mrf.mxu0
        %v2889 = vadd.f32 0.0, %v2888
        %2890 = vmatmul.bf16.gmra.mxu0 %v2828
        %v2891 = vpop.f32.mrf.mxu0
        %v2892 = vadd.f32 0.0, %v2891
        %v2893 = vpop.f32.mrf.mxu0
        %v2894 = vadd.f32 0.0, %v2893
        %2895 = vmatmul.bf16.gmra.mxu0 %v2831
        %v2896 = vpop.f32.mrf.mxu0
        %v2897 = vadd.f32 0.0, %v2896
        %v2898 = vpop.f32.mrf.mxu0
        %v2899 = vadd.f32 0.0, %v2898
        %2900 = vmatmul.bf16.gmra.mxu0 %v2834
        %v2901 = vpop.f32.mrf.mxu0
        %v2902 = vadd.f32 0.0, %v2901
        %v2903 = vpop.f32.mrf.mxu0
        %v2904 = vadd.f32 0.0, %v2903
        %2905 = vmatmul.bf16.gmra.mxu0 %v2837
        %v2906 = vpop.f32.mrf.mxu0
        %v2907 = vadd.f32 0.0, %v2906
        %v2908 = vpop.f32.mrf.mxu0
        %v2909 = vadd.f32 0.0, %v2908
        %2910 = vmatmul.bf16.gmra.mxu0 %v2840
        %v2911 = vpop.f32.mrf.mxu0
        %v2912 = vadd.f32 0.0, %v2911
        %v2913 = vpop.f32.mrf.mxu0
        %v2914 = vadd.f32 0.0, %v2913
        %2915 = vmatmul.bf16.gmra.mxu0 %v2843
        %v2916 = vpop.f32.mrf.mxu0
        %v2917 = vadd.f32 0.0, %v2916
        %v2918 = vpop.f32.mrf.mxu0
        %v2919 = vadd.f32 0.0, %v2918
        %2920 = vmatmul.bf16.gmra.mxu0 %v2846
        %v2921 = vpop.f32.mrf.mxu0
        %v2922 = vadd.f32 0.0, %v2921
        %v2923 = vpop.f32.mrf.mxu0
        %v2924 = vadd.f32 0.0, %v2923
        %2925 = vmatmul.bf16.gmra.mxu0 %v2849
        %v2926 = vpop.f32.mrf.mxu0
        %v2927 = vadd.f32 0.0, %v2926
        %v2928 = vpop.f32.mrf.mxu0
        %v2929 = vadd.f32 0.0, %v2928
        %2930 = vmatmul.bf16.gmra.mxu0 %v2852
        %v2931 = vpop.f32.mrf.mxu0
        %v2932 = vadd.f32 0.0, %v2931
        %v2933 = vpop.f32.mrf.mxu0
        %v2934 = vadd.f32 0.0, %v2933
        %2935 = vmatmul.bf16.gmra.mxu0 %v2855
        %v2936 = vpop.f32.mrf.mxu0
        %v2937 = vadd.f32 0.0, %v2936
        %v2938 = vpop.f32.mrf.mxu0
        %v2939 = vadd.f32 0.0, %v2938
        %2940 = vmatmul.bf16.gmra.mxu0 %v2858
        %v2941 = vpop.f32.mrf.mxu0
        %v2942 = vadd.f32 0.0, %v2941
        %v2943 = vpop.f32.mrf.mxu0
        %v2944 = vadd.f32 0.0, %v2943
        %2945 = vmatmul.bf16.gmra.mxu0 %v2861
        %v2946 = vpop.f32.mrf.mxu0
        %v2947 = vadd.f32 0.0, %v2946
        %v2948 = vpop.f32.mrf.mxu0
        %v2949 = vadd.f32 0.0, %v2948
        %2950 = vmatmul.bf16.gmra.mxu0 %v2864
        %v2951 = vpop.f32.mrf.mxu0
        %v2952 = vadd.f32 0.0, %v2951
        %v2953 = vpop.f32.mrf.mxu0
        %v2954 = vadd.f32 0.0, %v2953
        %2955 = vmatmul.bf16.gmra.mxu0 %v2867
        %v2956 = vpop.f32.mrf.mxu0
        %v2957 = vadd.f32 0.0, %v2956
        %v2958 = vpop.f32.mrf.mxu0
        %v2959 = vadd.f32 0.0, %v2958
        %2960 = vdwg.mxu0
        %v2961 = vadd.f32 %v2674, %v2882
        %v2962 = vadd.f32 %v2675, %v2884
        %v2963 = vadd.f32 %v2676, %v2887
        %v2964 = vadd.f32 %v2677, %v2889
        %v2965 = vadd.f32 %v2678, %v2892
        %v2966 = vadd.f32 %v2679, %v2894
        %v2967 = vadd.f32 %v2680, %v2897
        %v2968 = vadd.f32 %v2681, %v2899
        %v2969 = vadd.f32 %v2682, %v2902
        %v2970 = vadd.f32 %v2683, %v2904
        %v2971 = vadd.f32 %v2684, %v2907
        %v2972 = vadd.f32 %v2685, %v2909
        %v2973 = vadd.f32 %v2686, %v2912
        %v2974 = vadd.f32 %v2687, %v2914
        %v2975 = vadd.f32 %v2688, %v2917
        %v2976 = vadd.f32 %v2689, %v2919
        %v2977 = vadd.f32 %v2690, %v2922
        %v2978 = vadd.f32 %v2691, %v2924
        %v2979 = vadd.f32 %v2692, %v2927
        %v2980 = vadd.f32 %v2693, %v2929
        %v2981 = vadd.f32 %v2694, %v2932
        %v2982 = vadd.f32 %v2695, %v2934
        %v2983 = vadd.f32 %v2696, %v2937
        %v2984 = vadd.f32 %v2697, %v2939
        %v2985 = vadd.f32 %v2698, %v2942
        %v2986 = vadd.f32 %v2699, %v2944
        %v2987 = vadd.f32 %v2700, %v2947
        %v2988 = vadd.f32 %v2701, %v2949
        %v2989 = vadd.f32 %v2702, %v2952
        %v2990 = vadd.f32 %v2703, %v2954
        %v2991 = vadd.f32 %v2704, %v2957
        %v2992 = vadd.f32 %v2705, %v2959
        %s2993 = scalar_lea.vmem %s299, 12
        %v2994 = vld [vmem:[%s2993] sm:$0xf]
        %v2995 = vld [vmem:[%s2993 + $0x4] sm:$0xf]
        %v2996 = vld [vmem:[%s2993 + $0xc] sm:$0xf]
        %v2997 = vld [vmem:[%s2993 + $0x10] sm:$0xf]
        %v2998 = vld [vmem:[%s2993 + $0x18] sm:$0xf]
        %v2999 = vld [vmem:[%s2993 + $0x1c] sm:$0xf]
        %v3000 = vld [vmem:[%s2993 + $0x24] sm:$0xf]
        %v3001 = vld [vmem:[%s2993 + $0x28] sm:$0xf]
        %v3002 = vld [vmem:[%s2993 + $0x30] sm:$0xf]
        %v3003 = vld [vmem:[%s2993 + $0x34] sm:$0xf]
        %v3004 = vld [vmem:[%s2993 + $0x3c] sm:$0xf]
        %v3005 = vld [vmem:[%s2993 + $0x40] sm:$0xf]
        %v3006 = vld [vmem:[%s2993 + $0x48] sm:$0xf]
        %v3007 = vld [vmem:[%s2993 + $0x4c] sm:$0xf]
        %v3008 = vld [vmem:[%s2993 + $0x54] sm:$0xf]
        %v3009 = vld [vmem:[%s2993 + $0x58] sm:$0xf]
        %v3010 = vld [vmem:[%s2993 + $0x60] sm:$0xf]
        %v3011 = vld [vmem:[%s2993 + $0x64] sm:$0xf]
        %v3012 = vld [vmem:[%s2993 + $0x6c] sm:$0xf]
        %v3013 = vld [vmem:[%s2993 + $0x70] sm:$0xf]
        %v3014 = vld [vmem:[%s2993 + $0x78] sm:$0xf]
        %v3015 = vld [vmem:[%s2993 + $0x7c] sm:$0xf]
        %v3016 = vld [vmem:[%s2993 + $0x84] sm:$0xf]
        %v3017 = vld [vmem:[%s2993 + $0x88] sm:$0xf]
        %v3018 = vld [vmem:[%s2993 + $0x90] sm:$0xf]
        %v3019 = vld [vmem:[%s2993 + $0x94] sm:$0xf]
        %v3020 = vld [vmem:[%s2993 + $0x9c] sm:$0xf]
        %v3021 = vld [vmem:[%s2993 + $0xa0] sm:$0xf]
        %v3022 = vld [vmem:[%s2993 + $0xa8] sm:$0xf]
        %v3023 = vld [vmem:[%s2993 + $0xac] sm:$0xf]
        %v3024 = vld [vmem:[%s2993 + $0xb4] sm:$0xf]
        %v3025 = vld [vmem:[%s2993 + $0xb8] sm:$0xf]
        %s3026 = scalar_lea.vmem %s4, 14
        %v3027 = vld [vmem:[%s3026] sm:$0x3]
        %v3060 = vunpack.c.l.b16 %v2994
        %v3061 = vunpack.c.l.b16 %v2995
        %v3062 = vunpack.c.l.b16 %v2996
        %v3063 = vunpack.c.l.b16 %v2997
        %v3064 = vunpack.c.l.b16 %v2998
        %v3065 = vunpack.c.l.b16 %v2999
        %v3066 = vunpack.c.l.b16 %v3000
        %v3067 = vunpack.c.l.b16 %v3001
        %v3068 = vunpack.c.l.b16 %v3002
        %v3069 = vunpack.c.l.b16 %v3003
        %v3070 = vunpack.c.l.b16 %v3004
        %v3071 = vunpack.c.l.b16 %v3005
        %v3072 = vunpack.c.l.b16 %v3006
        %v3073 = vunpack.c.l.b16 %v3007
        %v3074 = vunpack.c.l.b16 %v3008
        %v3075 = vunpack.c.l.b16 %v3009
        %v3076 = vunpack.c.l.b16 %v3010
        %v3077 = vunpack.c.l.b16 %v3011
        %v3078 = vunpack.c.l.b16 %v3012
        %v3079 = vunpack.c.l.b16 %v3013
        %v3080 = vunpack.c.l.b16 %v3014
        %v3081 = vunpack.c.l.b16 %v3015
        %v3082 = vunpack.c.l.b16 %v3016
        %v3083 = vunpack.c.l.b16 %v3017
        %v3084 = vunpack.c.l.b16 %v3018
        %v3085 = vunpack.c.l.b16 %v3019
        %v3086 = vunpack.c.l.b16 %v3020
        %v3087 = vunpack.c.l.b16 %v3021
        %v3088 = vunpack.c.l.b16 %v3022
        %v3089 = vunpack.c.l.b16 %v3023
        %v3090 = vunpack.c.l.b16 %v3024
        %v3091 = vunpack.c.l.b16 %v3025
        %v3092 = vpack.c.b16 %v3061, %v3060
        %v3093 = vpack.c.b16 %v3063, %v3062
        %v3094 = vpack.c.b16 %v3065, %v3064
        %v3095 = vpack.c.b16 %v3067, %v3066
        %v3096 = vpack.c.b16 %v3069, %v3068
        %v3097 = vpack.c.b16 %v3071, %v3070
        %v3098 = vpack.c.b16 %v3073, %v3072
        %v3099 = vpack.c.b16 %v3075, %v3074
        %v3100 = vpack.c.b16 %v3077, %v3076
        %v3101 = vpack.c.b16 %v3079, %v3078
        %v3102 = vpack.c.b16 %v3081, %v3080
        %v3103 = vpack.c.b16 %v3083, %v3082
        %v3104 = vpack.c.b16 %v3085, %v3084
        %v3105 = vpack.c.b16 %v3087, %v3086
        %v3106 = vpack.c.b16 %v3089, %v3088
        %v3107 = vpack.c.b16 %v3091, %v3090
        %v3109 = vsel %vm458, %v3092, 0
        %v3112 = vsel %vm458, %v3093, 0
        %v3115 = vsel %vm458, %v3094, 0
        %v3118 = vsel %vm458, %v3095, 0
        %v3121 = vsel %vm458, %v3096, 0
        %v3124 = vsel %vm458, %v3097, 0
        %v3127 = vsel %vm458, %v3098, 0
        %v3130 = vsel %vm458, %v3099, 0
        %v3133 = vsel %vm458, %v3100, 0
        %v3136 = vsel %vm458, %v3101, 0
        %v3139 = vsel %vm458, %v3102, 0
        %v3142 = vsel %vm458, %v3103, 0
        %v3145 = vsel %vm458, %v3104, 0
        %v3148 = vsel %vm458, %v3105, 0
        %v3151 = vsel %vm458, %v3106, 0
        %v3154 = vsel %vm458, %v3107, 0
        %v3157 = vand.u32 %v3027, %v510
        %3159 = vmatpush.bf16.msra.mxu0 0
        %3160 = vmatpush.bf16.msra.mxu0 0
        %3161 = vmatpush.bf16.msra.mxu0 0
        %3162 = vmatpush.bf16.msra.mxu0 0
        %3163 = vmatpush.bf16.msra.mxu0 0
        %3164 = vmatpush.bf16.msra.mxu0 0
        %3165 = vmatpush.bf16.msra.mxu0 0
        %3166 = vmatpush.bf16.msra.mxu0 %v3157
        %3167 = vmatmul.bf16.gmra.mxu0 %v3109
        %v3168 = vpop.f32.mrf.mxu0
        %v3169 = vadd.f32 0.0, %v3168
        %v3170 = vpop.f32.mrf.mxu0
        %v3171 = vadd.f32 0.0, %v3170
        %3172 = vmatmul.bf16.gmra.mxu0 %v3112
        %v3173 = vpop.f32.mrf.mxu0
        %v3174 = vadd.f32 0.0, %v3173
        %v3175 = vpop.f32.mrf.mxu0
        %v3176 = vadd.f32 0.0, %v3175
        %3177 = vmatmul.bf16.gmra.mxu0 %v3115
        %v3178 = vpop.f32.mrf.mxu0
        %v3179 = vadd.f32 0.0, %v3178
        %v3180 = vpop.f32.mrf.mxu0
        %v3181 = vadd.f32 0.0, %v3180
        %3182 = vmatmul.bf16.gmra.mxu0 %v3118
        %v3183 = vpop.f32.mrf.mxu0
        %v3184 = vadd.f32 0.0, %v3183
        %v3185 = vpop.f32.mrf.mxu0
        %v3186 = vadd.f32 0.0, %v3185
        %3187 = vmatmul.bf16.gmra.mxu0 %v3121
        %v3188 = vpop.f32.mrf.mxu0
        %v3189 = vadd.f32 0.0, %v3188
        %v3190 = vpop.f32.mrf.mxu0
        %v3191 = vadd.f32 0.0, %v3190
        %3192 = vmatmul.bf16.gmra.mxu0 %v3124
        %v3193 = vpop.f32.mrf.mxu0
        %v3194 = vadd.f32 0.0, %v3193
        %v3195 = vpop.f32.mrf.mxu0
        %v3196 = vadd.f32 0.0, %v3195
        %3197 = vmatmul.bf16.gmra.mxu0 %v3127
        %v3198 = vpop.f32.mrf.mxu0
        %v3199 = vadd.f32 0.0, %v3198
        %v3200 = vpop.f32.mrf.mxu0
        %v3201 = vadd.f32 0.0, %v3200
        %3202 = vmatmul.bf16.gmra.mxu0 %v3130
        %v3203 = vpop.f32.mrf.mxu0
        %v3204 = vadd.f32 0.0, %v3203
        %v3205 = vpop.f32.mrf.mxu0
        %v3206 = vadd.f32 0.0, %v3205
        %3207 = vmatmul.bf16.gmra.mxu0 %v3133
        %v3208 = vpop.f32.mrf.mxu0
        %v3209 = vadd.f32 0.0, %v3208
        %v3210 = vpop.f32.mrf.mxu0
        %v3211 = vadd.f32 0.0, %v3210
        %3212 = vmatmul.bf16.gmra.mxu0 %v3136
        %v3213 = vpop.f32.mrf.mxu0
        %v3214 = vadd.f32 0.0, %v3213
        %v3215 = vpop.f32.mrf.mxu0
        %v3216 = vadd.f32 0.0, %v3215
        %3217 = vmatmul.bf16.gmra.mxu0 %v3139
        %v3218 = vpop.f32.mrf.mxu0
        %v3219 = vadd.f32 0.0, %v3218
        %v3220 = vpop.f32.mrf.mxu0
        %v3221 = vadd.f32 0.0, %v3220
        %3222 = vmatmul.bf16.gmra.mxu0 %v3142
        %v3223 = vpop.f32.mrf.mxu0
        %v3224 = vadd.f32 0.0, %v3223
        %v3225 = vpop.f32.mrf.mxu0
        %v3226 = vadd.f32 0.0, %v3225
        %3227 = vmatmul.bf16.gmra.mxu0 %v3145
        %v3228 = vpop.f32.mrf.mxu0
        %v3229 = vadd.f32 0.0, %v3228
        %v3230 = vpop.f32.mrf.mxu0
        %v3231 = vadd.f32 0.0, %v3230
        %3232 = vmatmul.bf16.gmra.mxu0 %v3148
        %v3233 = vpop.f32.mrf.mxu0
        %v3234 = vadd.f32 0.0, %v3233
        %v3235 = vpop.f32.mrf.mxu0
        %v3236 = vadd.f32 0.0, %v3235
        %3237 = vmatmul.bf16.gmra.mxu0 %v3151
        %v3238 = vpop.f32.mrf.mxu0
        %v3239 = vadd.f32 0.0, %v3238
        %v3240 = vpop.f32.mrf.mxu0
        %v3241 = vadd.f32 0.0, %v3240
        %3242 = vmatmul.bf16.gmra.mxu0 %v3154
        %v3243 = vpop.f32.mrf.mxu0
        %v3244 = vadd.f32 0.0, %v3243
        %v3245 = vpop.f32.mrf.mxu0
        %v3246 = vadd.f32 0.0, %v3245
        %3247 = vdwg.mxu0
        %v3248 = vadd.f32 %v2961, %v3169
        %v3249 = vadd.f32 %v2962, %v3171
        %v3250 = vadd.f32 %v2963, %v3174
        %v3251 = vadd.f32 %v2964, %v3176
        %v3252 = vadd.f32 %v2965, %v3179
        %v3253 = vadd.f32 %v2966, %v3181
        %v3254 = vadd.f32 %v2967, %v3184
        %v3255 = vadd.f32 %v2968, %v3186
        %v3256 = vadd.f32 %v2969, %v3189
        %v3257 = vadd.f32 %v2970, %v3191
        %v3258 = vadd.f32 %v2971, %v3194
        %v3259 = vadd.f32 %v2972, %v3196
        %v3260 = vadd.f32 %v2973, %v3199
        %v3261 = vadd.f32 %v2974, %v3201
        %v3262 = vadd.f32 %v2975, %v3204
        %v3263 = vadd.f32 %v2976, %v3206
        %v3264 = vadd.f32 %v2977, %v3209
        %v3265 = vadd.f32 %v2978, %v3211
        %v3266 = vadd.f32 %v2979, %v3214
        %v3267 = vadd.f32 %v2980, %v3216
        %v3268 = vadd.f32 %v2981, %v3219
        %v3269 = vadd.f32 %v2982, %v3221
        %v3270 = vadd.f32 %v2983, %v3224
        %v3271 = vadd.f32 %v2984, %v3226
        %v3272 = vadd.f32 %v2985, %v3229
        %v3273 = vadd.f32 %v2986, %v3231
        %v3274 = vadd.f32 %v2987, %v3234
        %v3275 = vadd.f32 %v2988, %v3236
        %v3276 = vadd.f32 %v2989, %v3239
        %v3277 = vadd.f32 %v2990, %v3241
        %v3278 = vadd.f32 %v2991, %v3244
        %v3279 = vadd.f32 %v2992, %v3246
        %v3280 = vld [vmem:[%s2706] sm:$0xf]
        %v3281 = vld [vmem:[%s2706 + $0x4] sm:$0xf]
        %v3282 = vld [vmem:[%s2706 + $0x8] sm:$0x1]
        %v3283 = vld [vmem:[%s2706 + $0xc] sm:$0xf]
        %v3284 = vld [vmem:[%s2706 + $0x10] sm:$0xf]
        %v3285 = vld [vmem:[%s2706 + $0x14] sm:$0x1]
        %v3286 = vld [vmem:[%s2706 + $0x18] sm:$0xf]
        %v3287 = vld [vmem:[%s2706 + $0x1c] sm:$0xf]
        %v3288 = vld [vmem:[%s2706 + $0x20] sm:$0x1]
        %v3289 = vld [vmem:[%s2706 + $0x24] sm:$0xf]
        %v3290 = vld [vmem:[%s2706 + $0x28] sm:$0xf]
        %v3291 = vld [vmem:[%s2706 + $0x2c] sm:$0x1]
        %v3292 = vld [vmem:[%s2706 + $0x30] sm:$0xf]
        %v3293 = vld [vmem:[%s2706 + $0x34] sm:$0xf]
        %v3294 = vld [vmem:[%s2706 + $0x38] sm:$0x1]
        %v3295 = vld [vmem:[%s2706 + $0x3c] sm:$0xf]
        %v3296 = vld [vmem:[%s2706 + $0x40] sm:$0xf]
        %v3297 = vld [vmem:[%s2706 + $0x44] sm:$0x1]
        %v3298 = vld [vmem:[%s2706 + $0x48] sm:$0xf]
        %v3299 = vld [vmem:[%s2706 + $0x4c] sm:$0xf]
        %v3300 = vld [vmem:[%s2706 + $0x50] sm:$0x1]
        %v3301 = vld [vmem:[%s2706 + $0x54] sm:$0xf]
        %v3302 = vld [vmem:[%s2706 + $0x58] sm:$0xf]
        %v3303 = vld [vmem:[%s2706 + $0x5c] sm:$0x1]
        %v3304 = vld [vmem:[%s2706 + $0x60] sm:$0xf]
        %v3305 = vld [vmem:[%s2706 + $0x64] sm:$0xf]
        %v3306 = vld [vmem:[%s2706 + $0x68] sm:$0x1]
        %v3307 = vld [vmem:[%s2706 + $0x6c] sm:$0xf]
        %v3308 = vld [vmem:[%s2706 + $0x70] sm:$0xf]
        %v3309 = vld [vmem:[%s2706 + $0x74] sm:$0x1]
        %v3310 = vld [vmem:[%s2706 + $0x78] sm:$0xf]
        %v3311 = vld [vmem:[%s2706 + $0x7c] sm:$0xf]
        %v3312 = vld [vmem:[%s2706 + $0x80] sm:$0x1]
        %v3313 = vld [vmem:[%s2706 + $0x84] sm:$0xf]
        %v3314 = vld [vmem:[%s2706 + $0x88] sm:$0xf]
        %v3315 = vld [vmem:[%s2706 + $0x8c] sm:$0x1]
        %v3316 = vld [vmem:[%s2706 + $0x90] sm:$0xf]
        %v3317 = vld [vmem:[%s2706 + $0x94] sm:$0xf]
        %v3318 = vld [vmem:[%s2706 + $0x98] sm:$0x1]
        %v3319 = vld [vmem:[%s2706 + $0x9c] sm:$0xf]
        %v3320 = vld [vmem:[%s2706 + $0xa0] sm:$0xf]
        %v3321 = vld [vmem:[%s2706 + $0xa4] sm:$0x1]
        %v3322 = vld [vmem:[%s2706 + $0xa8] sm:$0xf]
        %v3323 = vld [vmem:[%s2706 + $0xac] sm:$0xf]
        %v3324 = vld [vmem:[%s2706 + $0xb0] sm:$0x1]
        %v3325 = vld [vmem:[%s2706 + $0xb4] sm:$0xf]
        %v3326 = vld [vmem:[%s2706 + $0xb8] sm:$0xf]
        %v3327 = vld [vmem:[%s2706 + $0xbc] sm:$0x1]
        %v3329 = vshrl.u32 %v3280, 16
        %v3331 = vrot.slane %v3329, 4
        %v3332 = vshll.u32 %v3280, 16
        %v3334 = vrot.slane %v3332, 5
        %v3335 = vor.u32 %v3331, %v3334
        %v3336 = vrot.slane %v3335, 4
        %v3338 = vshll.u32 %v3281, 16
        %v3340 = vrot.slane %v3338, 5
        %v3341 = vsel %vm873, %v3336, %v3340
        %v3342 = vshrl.u32 %v3281, 16
        %v3344 = vrot.slane %v3342, 4
        %v3345 = vor.u32 %v3344, %v3340
        %v3346 = vrot.slane %v3345, 4
        %v3348 = vshll.u32 %v3282, 16
        %v3350 = vrot.slane %v3348, 5
        %v3351 = vsel %vm873, %v3346, %v3350
        %v3353 = vshrl.u32 %v3283, 16
        %v3355 = vrot.slane %v3353, 4
        %v3356 = vshll.u32 %v3283, 16
        %v3358 = vrot.slane %v3356, 5
        %v3359 = vor.u32 %v3355, %v3358
        %v3360 = vrot.slane %v3359, 4
        %v3362 = vshll.u32 %v3284, 16
        %v3364 = vrot.slane %v3362, 5
        %v3365 = vsel %vm873, %v3360, %v3364
        %v3366 = vshrl.u32 %v3284, 16
        %v3368 = vrot.slane %v3366, 4
        %v3369 = vor.u32 %v3368, %v3364
        %v3370 = vrot.slane %v3369, 4
        %v3372 = vshll.u32 %v3285, 16
        %v3374 = vrot.slane %v3372, 5
        %v3375 = vsel %vm873, %v3370, %v3374
        %v3377 = vshrl.u32 %v3286, 16
        %v3379 = vrot.slane %v3377, 4
        %v3380 = vshll.u32 %v3286, 16
        %v3382 = vrot.slane %v3380, 5
        %v3383 = vor.u32 %v3379, %v3382
        %v3384 = vrot.slane %v3383, 4
        %v3386 = vshll.u32 %v3287, 16
        %v3388 = vrot.slane %v3386, 5
        %v3389 = vsel %vm873, %v3384, %v3388
        %v3390 = vshrl.u32 %v3287, 16
        %v3392 = vrot.slane %v3390, 4
        %v3393 = vor.u32 %v3392, %v3388
        %v3394 = vrot.slane %v3393, 4
        %v3396 = vshll.u32 %v3288, 16
        %v3398 = vrot.slane %v3396, 5
        %v3399 = vsel %vm873, %v3394, %v3398
        %v3401 = vshrl.u32 %v3289, 16
        %v3403 = vrot.slane %v3401, 4
        %v3404 = vshll.u32 %v3289, 16
        %v3406 = vrot.slane %v3404, 5
        %v3407 = vor.u32 %v3403, %v3406
        %v3408 = vrot.slane %v3407, 4
        %v3410 = vshll.u32 %v3290, 16
        %v3412 = vrot.slane %v3410, 5
        %v3413 = vsel %vm873, %v3408, %v3412
        %v3414 = vshrl.u32 %v3290, 16
        %v3416 = vrot.slane %v3414, 4
        %v3417 = vor.u32 %v3416, %v3412
        %v3418 = vrot.slane %v3417, 4
        %v3420 = vshll.u32 %v3291, 16
        %v3422 = vrot.slane %v3420, 5
        %v3423 = vsel %vm873, %v3418, %v3422
        %v3425 = vshrl.u32 %v3292, 16
        %v3427 = vrot.slane %v3425, 4
        %v3428 = vshll.u32 %v3292, 16
        %v3430 = vrot.slane %v3428, 5
        %v3431 = vor.u32 %v3427, %v3430
        %v3432 = vrot.slane %v3431, 4
        %v3434 = vshll.u32 %v3293, 16
        %v3436 = vrot.slane %v3434, 5
        %v3437 = vsel %vm873, %v3432, %v3436
        %v3438 = vshrl.u32 %v3293, 16
        %v3440 = vrot.slane %v3438, 4
        %v3441 = vor.u32 %v3440, %v3436
        %v3442 = vrot.slane %v3441, 4
        %v3444 = vshll.u32 %v3294, 16
        %v3446 = vrot.slane %v3444, 5
        %v3447 = vsel %vm873, %v3442, %v3446
        %v3449 = vshrl.u32 %v3295, 16
        %v3451 = vrot.slane %v3449, 4
        %v3452 = vshll.u32 %v3295, 16
        %v3454 = vrot.slane %v3452, 5
        %v3455 = vor.u32 %v3451, %v3454
        %v3456 = vrot.slane %v3455, 4
        %v3458 = vshll.u32 %v3296, 16
        %v3460 = vrot.slane %v3458, 5
        %v3461 = vsel %vm873, %v3456, %v3460
        %v3462 = vshrl.u32 %v3296, 16
        %v3464 = vrot.slane %v3462, 4
        %v3465 = vor.u32 %v3464, %v3460
        %v3466 = vrot.slane %v3465, 4
        %v3468 = vshll.u32 %v3297, 16
        %v3470 = vrot.slane %v3468, 5
        %v3471 = vsel %vm873, %v3466, %v3470
        %v3473 = vshrl.u32 %v3298, 16
        %v3475 = vrot.slane %v3473, 4
        %v3476 = vshll.u32 %v3298, 16
        %v3478 = vrot.slane %v3476, 5
        %v3479 = vor.u32 %v3475, %v3478
        %v3480 = vrot.slane %v3479, 4
        %v3482 = vshll.u32 %v3299, 16
        %v3484 = vrot.slane %v3482, 5
        %v3485 = vsel %vm873, %v3480, %v3484
        %v3486 = vshrl.u32 %v3299, 16
        %v3488 = vrot.slane %v3486, 4
        %v3489 = vor.u32 %v3488, %v3484
        %v3490 = vrot.slane %v3489, 4
        %v3492 = vshll.u32 %v3300, 16
        %v3494 = vrot.slane %v3492, 5
        %v3495 = vsel %vm873, %v3490, %v3494
        %v3497 = vshrl.u32 %v3301, 16
        %v3499 = vrot.slane %v3497, 4
        %v3500 = vshll.u32 %v3301, 16
        %v3502 = vrot.slane %v3500, 5
        %v3503 = vor.u32 %v3499, %v3502
        %v3504 = vrot.slane %v3503, 4
        %v3506 = vshll.u32 %v3302, 16
        %v3508 = vrot.slane %v3506, 5
        %v3509 = vsel %vm873, %v3504, %v3508
        %v3510 = vshrl.u32 %v3302, 16
        %v3512 = vrot.slane %v3510, 4
        %v3513 = vor.u32 %v3512, %v3508
        %v3514 = vrot.slane %v3513, 4
        %v3516 = vshll.u32 %v3303, 16
        %v3518 = vrot.slane %v3516, 5
        %v3519 = vsel %vm873, %v3514, %v3518
        %v3521 = vshrl.u32 %v3304, 16
        %v3523 = vrot.slane %v3521, 4
        %v3524 = vshll.u32 %v3304, 16
        %v3526 = vrot.slane %v3524, 5
        %v3527 = vor.u32 %v3523, %v3526
        %v3528 = vrot.slane %v3527, 4
        %v3530 = vshll.u32 %v3305, 16
        %v3532 = vrot.slane %v3530, 5
        %v3533 = vsel %vm873, %v3528, %v3532
        %v3534 = vshrl.u32 %v3305, 16
        %v3536 = vrot.slane %v3534, 4
        %v3537 = vor.u32 %v3536, %v3532
        %v3538 = vrot.slane %v3537, 4
        %v3540 = vshll.u32 %v3306, 16
        %v3542 = vrot.slane %v3540, 5
        %v3543 = vsel %vm873, %v3538, %v3542
        %v3545 = vshrl.u32 %v3307, 16
        %v3547 = vrot.slane %v3545, 4
        %v3548 = vshll.u32 %v3307, 16
        %v3550 = vrot.slane %v3548, 5
        %v3551 = vor.u32 %v3547, %v3550
        %v3552 = vrot.slane %v3551, 4
        %v3554 = vshll.u32 %v3308, 16
        %v3556 = vrot.slane %v3554, 5
        %v3557 = vsel %vm873, %v3552, %v3556
        %v3558 = vshrl.u32 %v3308, 16
        %v3560 = vrot.slane %v3558, 4
        %v3561 = vor.u32 %v3560, %v3556
        %v3562 = vrot.slane %v3561, 4
        %v3564 = vshll.u32 %v3309, 16
        %v3566 = vrot.slane %v3564, 5
        %v3567 = vsel %vm873, %v3562, %v3566
        %v3569 = vshrl.u32 %v3310, 16
        %v3571 = vrot.slane %v3569, 4
        %v3572 = vshll.u32 %v3310, 16
        %v3574 = vrot.slane %v3572, 5
        %v3575 = vor.u32 %v3571, %v3574
        %v3576 = vrot.slane %v3575, 4
        %v3578 = vshll.u32 %v3311, 16
        %v3580 = vrot.slane %v3578, 5
        %v3581 = vsel %vm873, %v3576, %v3580
        %v3582 = vshrl.u32 %v3311, 16
        %v3584 = vrot.slane %v3582, 4
        %v3585 = vor.u32 %v3584, %v3580
        %v3586 = vrot.slane %v3585, 4
        %v3588 = vshll.u32 %v3312, 16
        %v3590 = vrot.slane %v3588, 5
        %v3591 = vsel %vm873, %v3586, %v3590
        %v3593 = vshrl.u32 %v3313, 16
        %v3595 = vrot.slane %v3593, 4
        %v3596 = vshll.u32 %v3313, 16
        %v3598 = vrot.slane %v3596, 5
        %v3599 = vor.u32 %v3595, %v3598
        %v3600 = vrot.slane %v3599, 4
        %v3602 = vshll.u32 %v3314, 16
        %v3604 = vrot.slane %v3602, 5
        %v3605 = vsel %vm873, %v3600, %v3604
        %v3606 = vshrl.u32 %v3314, 16
        %v3608 = vrot.slane %v3606, 4
        %v3609 = vor.u32 %v3608, %v3604
        %v3610 = vrot.slane %v3609, 4
        %v3612 = vshll.u32 %v3315, 16
        %v3614 = vrot.slane %v3612, 5
        %v3615 = vsel %vm873, %v3610, %v3614
        %v3617 = vshrl.u32 %v3316, 16
        %v3619 = vrot.slane %v3617, 4
        %v3620 = vshll.u32 %v3316, 16
        %v3622 = vrot.slane %v3620, 5
        %v3623 = vor.u32 %v3619, %v3622
        %v3624 = vrot.slane %v3623, 4
        %v3626 = vshll.u32 %v3317, 16
        %v3628 = vrot.slane %v3626, 5
        %v3629 = vsel %vm873, %v3624, %v3628
        %v3630 = vshrl.u32 %v3317, 16
        %v3632 = vrot.slane %v3630, 4
        %v3633 = vor.u32 %v3632, %v3628
        %v3634 = vrot.slane %v3633, 4
        %v3636 = vshll.u32 %v3318, 16
        %v3638 = vrot.slane %v3636, 5
        %v3639 = vsel %vm873, %v3634, %v3638
        %v3641 = vshrl.u32 %v3319, 16
        %v3643 = vrot.slane %v3641, 4
        %v3644 = vshll.u32 %v3319, 16
        %v3646 = vrot.slane %v3644, 5
        %v3647 = vor.u32 %v3643, %v3646
        %v3648 = vrot.slane %v3647, 4
        %v3650 = vshll.u32 %v3320, 16
        %v3652 = vrot.slane %v3650, 5
        %v3653 = vsel %vm873, %v3648, %v3652
        %v3654 = vshrl.u32 %v3320, 16
        %v3656 = vrot.slane %v3654, 4
        %v3657 = vor.u32 %v3656, %v3652
        %v3658 = vrot.slane %v3657, 4
        %v3660 = vshll.u32 %v3321, 16
        %v3662 = vrot.slane %v3660, 5
        %v3663 = vsel %vm873, %v3658, %v3662
        %v3665 = vshrl.u32 %v3322, 16
        %v3667 = vrot.slane %v3665, 4
        %v3668 = vshll.u32 %v3322, 16
        %v3670 = vrot.slane %v3668, 5
        %v3671 = vor.u32 %v3667, %v3670
        %v3672 = vrot.slane %v3671, 4
        %v3674 = vshll.u32 %v3323, 16
        %v3676 = vrot.slane %v3674, 5
        %v3677 = vsel %vm873, %v3672, %v3676
        %v3678 = vshrl.u32 %v3323, 16
        %v3680 = vrot.slane %v3678, 4
        %v3681 = vor.u32 %v3680, %v3676
        %v3682 = vrot.slane %v3681, 4
        %v3684 = vshll.u32 %v3324, 16
        %v3686 = vrot.slane %v3684, 5
        %v3687 = vsel %vm873, %v3682, %v3686
        %v3689 = vshrl.u32 %v3325, 16
        %v3691 = vrot.slane %v3689, 4
        %v3692 = vshll.u32 %v3325, 16
        %v3694 = vrot.slane %v3692, 5
        %v3695 = vor.u32 %v3691, %v3694
        %v3696 = vrot.slane %v3695, 4
        %v3698 = vshll.u32 %v3326, 16
        %v3700 = vrot.slane %v3698, 5
        %v3701 = vsel %vm873, %v3696, %v3700
        %v3702 = vshrl.u32 %v3326, 16
        %v3704 = vrot.slane %v3702, 4
        %v3705 = vor.u32 %v3704, %v3700
        %v3706 = vrot.slane %v3705, 4
        %v3708 = vshll.u32 %v3327, 16
        %v3710 = vrot.slane %v3708, 5
        %v3711 = vsel %vm873, %v3706, %v3710
        %s3712 = scalar_lea.vmem %s4, 16
        %v3713 = vld [vmem:[%s3712] sm:$0x3]
        %v3714 = vunpack.c.l.b16 %v3341
        %v3715 = vunpack.c.l.b16 %v3351
        %v3716 = vunpack.c.l.b16 %v3365
        %v3717 = vunpack.c.l.b16 %v3375
        %v3718 = vunpack.c.l.b16 %v3389
        %v3719 = vunpack.c.l.b16 %v3399
        %v3720 = vunpack.c.l.b16 %v3413
        %v3721 = vunpack.c.l.b16 %v3423
        %v3722 = vunpack.c.l.b16 %v3437
        %v3723 = vunpack.c.l.b16 %v3447
        %v3724 = vunpack.c.l.b16 %v3461
        %v3725 = vunpack.c.l.b16 %v3471
        %v3726 = vunpack.c.l.b16 %v3485
        %v3727 = vunpack.c.l.b16 %v3495
        %v3728 = vunpack.c.l.b16 %v3509
        %v3729 = vunpack.c.l.b16 %v3519
        %v3730 = vunpack.c.l.b16 %v3533
        %v3731 = vunpack.c.l.b16 %v3543
        %v3732 = vunpack.c.l.b16 %v3557
        %v3733 = vunpack.c.l.b16 %v3567
        %v3734 = vunpack.c.l.b16 %v3581
        %v3735 = vunpack.c.l.b16 %v3591
        %v3736 = vunpack.c.l.b16 %v3605
        %v3737 = vunpack.c.l.b16 %v3615
        %v3738 = vunpack.c.l.b16 %v3629
        %v3739 = vunpack.c.l.b16 %v3639
        %v3740 = vunpack.c.l.b16 %v3653
        %v3741 = vunpack.c.l.b16 %v3663
        %v3742 = vunpack.c.l.b16 %v3677
        %v3743 = vunpack.c.l.b16 %v3687
        %v3744 = vunpack.c.l.b16 %v3701
        %v3745 = vunpack.c.l.b16 %v3711
        %v3746 = vpack.c.b16 %v3715, %v3714
        %v3747 = vpack.c.b16 %v3717, %v3716
        %v3748 = vpack.c.b16 %v3719, %v3718
        %v3749 = vpack.c.b16 %v3721, %v3720
        %v3750 = vpack.c.b16 %v3723, %v3722
        %v3751 = vpack.c.b16 %v3725, %v3724
        %v3752 = vpack.c.b16 %v3727, %v3726
        %v3753 = vpack.c.b16 %v3729, %v3728
        %v3754 = vpack.c.b16 %v3731, %v3730
        %v3755 = vpack.c.b16 %v3733, %v3732
        %v3756 = vpack.c.b16 %v3735, %v3734
        %v3757 = vpack.c.b16 %v3737, %v3736
        %v3758 = vpack.c.b16 %v3739, %v3738
        %v3759 = vpack.c.b16 %v3741, %v3740
        %v3760 = vpack.c.b16 %v3743, %v3742
        %v3761 = vpack.c.b16 %v3745, %v3744
        %v3763 = vsel %vm458, %v3746, 0
        %v3766 = vsel %vm458, %v3747, 0
        %v3769 = vsel %vm458, %v3748, 0
        %v3772 = vsel %vm458, %v3749, 0
        %v3775 = vsel %vm458, %v3750, 0
        %v3778 = vsel %vm458, %v3751, 0
        %v3781 = vsel %vm458, %v3752, 0
        %v3784 = vsel %vm458, %v3753, 0
        %v3787 = vsel %vm458, %v3754, 0
        %v3790 = vsel %vm458, %v3755, 0
        %v3793 = vsel %vm458, %v3756, 0
        %v3796 = vsel %vm458, %v3757, 0
        %v3799 = vsel %vm458, %v3758, 0
        %v3802 = vsel %vm458, %v3759, 0
        %v3805 = vsel %vm458, %v3760, 0
        %v3808 = vsel %vm458, %v3761, 0
        %v3811 = vand.u32 %v3713, %v510
        %3813 = vmatpush.bf16.msra.mxu0 0
        %3814 = vmatpush.bf16.msra.mxu0 0
        %3815 = vmatpush.bf16.msra.mxu0 0
        %3816 = vmatpush.bf16.msra.mxu0 0
        %3817 = vmatpush.bf16.msra.mxu0 0
        %3818 = vmatpush.bf16.msra.mxu0 0
        %3819 = vmatpush.bf16.msra.mxu0 0
        %3820 = vmatpush.bf16.msra.mxu0 %v3811
        %3821 = vmatmul.bf16.gmra.mxu0 %v3763
        %v3822 = vpop.f32.mrf.mxu0
        %v3823 = vadd.f32 0.0, %v3822
        %v3824 = vpop.f32.mrf.mxu0
        %v3825 = vadd.f32 0.0, %v3824
        %3826 = vmatmul.bf16.gmra.mxu0 %v3766
        %v3827 = vpop.f32.mrf.mxu0
        %v3828 = vadd.f32 0.0, %v3827
        %v3829 = vpop.f32.mrf.mxu0
        %v3830 = vadd.f32 0.0, %v3829
        %3831 = vmatmul.bf16.gmra.mxu0 %v3769
        %v3832 = vpop.f32.mrf.mxu0
        %v3833 = vadd.f32 0.0, %v3832
        %v3834 = vpop.f32.mrf.mxu0
        %v3835 = vadd.f32 0.0, %v3834
        %3836 = vmatmul.bf16.gmra.mxu0 %v3772
        %v3837 = vpop.f32.mrf.mxu0
        %v3838 = vadd.f32 0.0, %v3837
        %v3839 = vpop.f32.mrf.mxu0
        %v3840 = vadd.f32 0.0, %v3839
        %3841 = vmatmul.bf16.gmra.mxu0 %v3775
        %v3842 = vpop.f32.mrf.mxu0
        %v3843 = vadd.f32 0.0, %v3842
        %v3844 = vpop.f32.mrf.mxu0
        %v3845 = vadd.f32 0.0, %v3844
        %3846 = vmatmul.bf16.gmra.mxu0 %v3778
        %v3847 = vpop.f32.mrf.mxu0
        %v3848 = vadd.f32 0.0, %v3847
        %v3849 = vpop.f32.mrf.mxu0
        %v3850 = vadd.f32 0.0, %v3849
        %3851 = vmatmul.bf16.gmra.mxu0 %v3781
        %v3852 = vpop.f32.mrf.mxu0
        %v3853 = vadd.f32 0.0, %v3852
        %v3854 = vpop.f32.mrf.mxu0
        %v3855 = vadd.f32 0.0, %v3854
        %3856 = vmatmul.bf16.gmra.mxu0 %v3784
        %v3857 = vpop.f32.mrf.mxu0
        %v3858 = vadd.f32 0.0, %v3857
        %v3859 = vpop.f32.mrf.mxu0
        %v3860 = vadd.f32 0.0, %v3859
        %3861 = vmatmul.bf16.gmra.mxu0 %v3787
        %v3862 = vpop.f32.mrf.mxu0
        %v3863 = vadd.f32 0.0, %v3862
        %v3864 = vpop.f32.mrf.mxu0
        %v3865 = vadd.f32 0.0, %v3864
        %3866 = vmatmul.bf16.gmra.mxu0 %v3790
        %v3867 = vpop.f32.mrf.mxu0
        %v3868 = vadd.f32 0.0, %v3867
        %v3869 = vpop.f32.mrf.mxu0
        %v3870 = vadd.f32 0.0, %v3869
        %3871 = vmatmul.bf16.gmra.mxu0 %v3793
        %v3872 = vpop.f32.mrf.mxu0
        %v3873 = vadd.f32 0.0, %v3872
        %v3874 = vpop.f32.mrf.mxu0
        %v3875 = vadd.f32 0.0, %v3874
        %3876 = vmatmul.bf16.gmra.mxu0 %v3796
        %v3877 = vpop.f32.mrf.mxu0
        %v3878 = vadd.f32 0.0, %v3877
        %v3879 = vpop.f32.mrf.mxu0
        %v3880 = vadd.f32 0.0, %v3879
        %3881 = vmatmul.bf16.gmra.mxu0 %v3799
        %v3882 = vpop.f32.mrf.mxu0
        %v3883 = vadd.f32 0.0, %v3882
        %v3884 = vpop.f32.mrf.mxu0
        %v3885 = vadd.f32 0.0, %v3884
        %3886 = vmatmul.bf16.gmra.mxu0 %v3802
        %v3887 = vpop.f32.mrf.mxu0
        %v3888 = vadd.f32 0.0, %v3887
        %v3889 = vpop.f32.mrf.mxu0
        %v3890 = vadd.f32 0.0, %v3889
        %3891 = vmatmul.bf16.gmra.mxu0 %v3805
        %v3892 = vpop.f32.mrf.mxu0
        %v3893 = vadd.f32 0.0, %v3892
        %v3894 = vpop.f32.mrf.mxu0
        %v3895 = vadd.f32 0.0, %v3894
        %3896 = vmatmul.bf16.gmra.mxu0 %v3808
        %v3897 = vpop.f32.mrf.mxu0
        %v3898 = vadd.f32 0.0, %v3897
        %v3899 = vpop.f32.mrf.mxu0
        %v3900 = vadd.f32 0.0, %v3899
        %3901 = vdwg.mxu0
        %v3902 = vadd.f32 %v3248, %v3823
        %v3903 = vadd.f32 %v3249, %v3825
        %v3904 = vadd.f32 %v3250, %v3828
        %v3905 = vadd.f32 %v3251, %v3830
        %v3906 = vadd.f32 %v3252, %v3833
        %v3907 = vadd.f32 %v3253, %v3835
        %v3908 = vadd.f32 %v3254, %v3838
        %v3909 = vadd.f32 %v3255, %v3840
        %v3910 = vadd.f32 %v3256, %v3843
        %v3911 = vadd.f32 %v3257, %v3845
        %v3912 = vadd.f32 %v3258, %v3848
        %v3913 = vadd.f32 %v3259, %v3850
        %v3914 = vadd.f32 %v3260, %v3853
        %v3915 = vadd.f32 %v3261, %v3855
        %v3916 = vadd.f32 %v3262, %v3858
        %v3917 = vadd.f32 %v3263, %v3860
        %v3918 = vadd.f32 %v3264, %v3863
        %v3919 = vadd.f32 %v3265, %v3865
        %v3920 = vadd.f32 %v3266, %v3868
        %v3921 = vadd.f32 %v3267, %v3870
        %v3922 = vadd.f32 %v3268, %v3873
        %v3923 = vadd.f32 %v3269, %v3875
        %v3924 = vadd.f32 %v3270, %v3878
        %v3925 = vadd.f32 %v3271, %v3880
        %v3926 = vadd.f32 %v3272, %v3883
        %v3927 = vadd.f32 %v3273, %v3885
        %v3928 = vadd.f32 %v3274, %v3888
        %v3929 = vadd.f32 %v3275, %v3890
        %v3930 = vadd.f32 %v3276, %v3893
        %v3931 = vadd.f32 %v3277, %v3895
        %v3932 = vadd.f32 %v3278, %v3898
        %v3933 = vadd.f32 %v3279, %v3900
        %v3934 = vld [vmem:[%s5] sm:$0x1]
        %v3936 = vperm.slane %v3934, 0
        %v3938 = vadd.f32 %v3902, %v3936
        %v3939 = vadd.f32 %v3903, %v3936
        %v3940 = vadd.f32 %v3904, %v3936
        %v3941 = vadd.f32 %v3905, %v3936
        %v3942 = vadd.f32 %v3906, %v3936
        %v3943 = vadd.f32 %v3907, %v3936
        %v3944 = vadd.f32 %v3908, %v3936
        %v3945 = vadd.f32 %v3909, %v3936
        %v3946 = vadd.f32 %v3910, %v3936
        %v3947 = vadd.f32 %v3911, %v3936
        %v3948 = vadd.f32 %v3912, %v3936
        %v3949 = vadd.f32 %v3913, %v3936
        %v3950 = vadd.f32 %v3914, %v3936
        %v3951 = vadd.f32 %v3915, %v3936
        %v3952 = vadd.f32 %v3916, %v3936
        %v3953 = vadd.f32 %v3917, %v3936
        %v3954 = vadd.f32 %v3918, %v3936
        %v3955 = vadd.f32 %v3919, %v3936
        %v3956 = vadd.f32 %v3920, %v3936
        %v3957 = vadd.f32 %v3921, %v3936
        %v3958 = vadd.f32 %v3922, %v3936
        %v3959 = vadd.f32 %v3923, %v3936
        %v3960 = vadd.f32 %v3924, %v3936
        %v3961 = vadd.f32 %v3925, %v3936
        %v3962 = vadd.f32 %v3926, %v3936
        %v3963 = vadd.f32 %v3927, %v3936
        %v3964 = vadd.f32 %v3928, %v3936
        %v3965 = vadd.f32 %v3929, %v3936
        %v3966 = vadd.f32 %v3930, %v3936
        %v3967 = vadd.f32 %v3931, %v3936
        %v3968 = vadd.f32 %v3932, %v3936
        %v3969 = vadd.f32 %v3933, %v3936
        %v3970 = vmax.f32 %v3938, 0.0
        %v3971 = vmax.f32 %v3939, 0.0
        %v3972 = vmax.f32 %v3940, 0.0
        %v3973 = vmax.f32 %v3941, 0.0
        %v3974 = vmax.f32 %v3942, 0.0
        %v3975 = vmax.f32 %v3943, 0.0
        %v3976 = vmax.f32 %v3944, 0.0
        %v3977 = vmax.f32 %v3945, 0.0
        %v3978 = vmax.f32 %v3946, 0.0
        %v3979 = vmax.f32 %v3947, 0.0
        %v3980 = vmax.f32 %v3948, 0.0
        %v3981 = vmax.f32 %v3949, 0.0
        %v3982 = vmax.f32 %v3950, 0.0
        %v3983 = vmax.f32 %v3951, 0.0
        %v3984 = vmax.f32 %v3952, 0.0
        %v3985 = vmax.f32 %v3953, 0.0
        %v3986 = vmax.f32 %v3954, 0.0
        %v3987 = vmax.f32 %v3955, 0.0
        %v3988 = vmax.f32 %v3956, 0.0
        %v3989 = vmax.f32 %v3957, 0.0
        %v3990 = vmax.f32 %v3958, 0.0
        %v3991 = vmax.f32 %v3959, 0.0
        %v3992 = vmax.f32 %v3960, 0.0
        %v3993 = vmax.f32 %v3961, 0.0
        %v3994 = vmax.f32 %v3962, 0.0
        %v3995 = vmax.f32 %v3963, 0.0
        %v3996 = vmax.f32 %v3964, 0.0
        %v3997 = vmax.f32 %v3965, 0.0
        %v3998 = vmax.f32 %v3966, 0.0
        %v3999 = vmax.f32 %v3967, 0.0
        %v4000 = vmax.f32 %v3968, 0.0
        %v4001 = vmax.f32 %v3969, 0.0
        %v4002 = vpack.c.bf16 %v3970, %v3970
        %v4003 = vpack.c.bf16 %v3971, %v3971
        %v4004 = vpack.c.bf16 %v3972, %v3972
        %v4005 = vpack.c.bf16 %v3973, %v3973
        %v4006 = vpack.c.bf16 %v3974, %v3974
        %v4007 = vpack.c.bf16 %v3975, %v3975
        %v4008 = vpack.c.bf16 %v3976, %v3976
        %v4009 = vpack.c.bf16 %v3977, %v3977
        %v4010 = vpack.c.bf16 %v3978, %v3978
        %v4011 = vpack.c.bf16 %v3979, %v3979
        %v4012 = vpack.c.bf16 %v3980, %v3980
        %v4013 = vpack.c.bf16 %v3981, %v3981
        %v4014 = vpack.c.bf16 %v3982, %v3982
        %v4015 = vpack.c.bf16 %v3983, %v3983
        %v4016 = vpack.c.bf16 %v3984, %v3984
        %v4017 = vpack.c.bf16 %v3985, %v3985
        %v4018 = vpack.c.bf16 %v3986, %v3986
        %v4019 = vpack.c.bf16 %v3987, %v3987
        %v4020 = vpack.c.bf16 %v3988, %v3988
        %v4021 = vpack.c.bf16 %v3989, %v3989
        %v4022 = vpack.c.bf16 %v3990, %v3990
        %v4023 = vpack.c.bf16 %v3991, %v3991
        %v4024 = vpack.c.bf16 %v3992, %v3992
        %v4025 = vpack.c.bf16 %v3993, %v3993
        %v4026 = vpack.c.bf16 %v3994, %v3994
        %v4027 = vpack.c.bf16 %v3995, %v3995
        %v4028 = vpack.c.bf16 %v3996, %v3996
        %v4029 = vpack.c.bf16 %v3997, %v3997
        %v4030 = vpack.c.bf16 %v3998, %v3998
        %v4031 = vpack.c.bf16 %v3999, %v3999
        %v4032 = vpack.c.bf16 %v4000, %v4000
        %v4033 = vpack.c.bf16 %v4001, %v4001
        %4034 = vst [vmem:[%s289] sm:$0xf] %v4002
        %4035 = vst [vmem:[%s289 + $0x4] sm:$0xf] %v4003
        %4036 = vst [vmem:[%s289 + $0x8] sm:$0xf] %v4004
        %4037 = vst [vmem:[%s289 + $0xc] sm:$0xf] %v4005
        %4038 = vst [vmem:[%s289 + $0x10] sm:$0xf] %v4006
        %4039 = vst [vmem:[%s289 + $0x14] sm:$0xf] %v4007
        %4040 = vst [vmem:[%s289 + $0x18] sm:$0xf] %v4008
        %4041 = vst [vmem:[%s289 + $0x1c] sm:$0xf] %v4009
        %4042 = vst [vmem:[%s289 + $0x20] sm:$0xf] %v4010
        %4043 = vst [vmem:[%s289 + $0x24] sm:$0xf] %v4011
        %4044 = vst [vmem:[%s289 + $0x28] sm:$0xf] %v4012
        %4045 = vst [vmem:[%s289 + $0x2c] sm:$0xf] %v4013
        %4046 = vst [vmem:[%s289 + $0x30] sm:$0xf] %v4014
        %4047 = vst [vmem:[%s289 + $0x34] sm:$0xf] %v4015
        %4048 = vst [vmem:[%s289 + $0x38] sm:$0xf] %v4016
        %4049 = vst [vmem:[%s289 + $0x3c] sm:$0xf] %v4017
        %4050 = vst [vmem:[%s289 + $0x40] sm:$0xf] %v4018
        %4051 = vst [vmem:[%s289 + $0x44] sm:$0xf] %v4019
        %4052 = vst [vmem:[%s289 + $0x48] sm:$0xf] %v4020
        %4053 = vst [vmem:[%s289 + $0x4c] sm:$0xf] %v4021
        %4054 = vst [vmem:[%s289 + $0x50] sm:$0xf] %v4022
        %4055 = vst [vmem:[%s289 + $0x54] sm:$0xf] %v4023
        %4056 = vst [vmem:[%s289 + $0x58] sm:$0xf] %v4024
        %4057 = vst [vmem:[%s289 + $0x5c] sm:$0xf] %v4025
        %4058 = vst [vmem:[%s289 + $0x60] sm:$0xf] %v4026
        %4059 = vst [vmem:[%s289 + $0x64] sm:$0xf] %v4027
        %4060 = vst [vmem:[%s289 + $0x68] sm:$0xf] %v4028
        %4061 = vst [vmem:[%s289 + $0x6c] sm:$0xf] %v4029
        %4062 = vst [vmem:[%s289 + $0x70] sm:$0xf] %v4030
        %4063 = vst [vmem:[%s289 + $0x74] sm:$0xf] %v4031
        %4064 = vst [vmem:[%s289 + $0x78] sm:$0xf] %v4032
        %4065 = vst [vmem:[%s289 + $0x7c] sm:$0xf] %v4033
        %s4066 = sand.u32 %s174, 1
        %s4067 = scalar_lea.sflag [#allocation3], %s4066
        %s4068 = sand.u32 %s174, 1
        %s4069 = smul.addr %s4068, 128
        %s4070 = scalar_lea.vmem [#allocation2], %s4069
        // Predicated region
        $region45: #{tpu_custom_call.1} parent=43 // pred_check
          %p4071 = pneg %p184
        $region46: #{tpu_custom_call.1} parent=43 // pred_check_branch
          %4073 = sbr.rel (%p4071) target = $region48
        $region47: #{tpu_custom_call.1} parent=43 // pred_region
          %4075 = vsyncadd %s4067, 0
          %s4076 = smul.addr %s20, 32
          %s4077 = smul.addr %s4076, 4
          %s4078 = scalar_lea.hbm %s6, %s4077
          %s4079 = sshll.u32 %s4070, 4
          %s4080 = int_to_ptr.vmem [resolvable:$true] %s4079
          %s4081 = sshll.u32 %s4078, 4
          %s4082 = int_to_ptr.hbm [resolvable:$true] %s4081
          %4087 = dma.vmem_to_hbm [thread:$0]  %s4080, 2048, %s4082, %s4067, 64, 64, 4
        $region48: #{tpu_custom_call.1} parent=43 // pred_fallthru
          _
      $region44: #{tpu_custom_call.1} parent=5 // pred_fallthru
        _
      %p4088 = scmp.le.s32.totalorder 2, %s15
      // Predicated region
      $region49: #{tpu_custom_call.1} parent=5 // pred_check
        %p4089 = pneg %p4088
      $region50: #{tpu_custom_call.1} parent=5 // pred_check_branch
        %4091 = sbr.rel (%p4089) target = $region52
      $region51: #{tpu_custom_call.1} parent=5 // pred_region
        %s4092 = ssub.s32 %s15, 2
        // Predicated region
        $region53: #{tpu_custom_call.1} parent=51 // pred_check
          %p4093 = pneg %p190
        $region54: #{tpu_custom_call.1} parent=51 // pred_check_branch
          %4095 = sbr.rel (%p4093) target = $region56
        $region55: #{tpu_custom_call.1} parent=51 // pred_region
          %s4096 = sand.u32 %s175, 1
          %s4097 = scalar_lea.sflag [#allocation3], %s4096
          %s4098 = sand.u32 %s175, 1
          %s4099 = smul.addr %s4098, 128
          %s4100 = scalar_lea.vmem [#allocation2], %s4099
          %4102 = dma.done %s4097, 2048
        $region56: #{tpu_custom_call.1} parent=51 // pred_fallthru
          _
      $region52: #{tpu_custom_call.1} parent=5 // pred_fallthru
        _
    $region6: #{tpu_custom_call.1} parent=1 // loop_footer
      %s19 = sadd.s32 1, %s15
    $region7: #{tpu_custom_call.1} parent=1 // loop_footer_branch
      %14 = sbr.rel target = $region3
    $region8: #{tpu_custom_call.1} parent=1 // loop_exit
      _
    %4103 = vsyncpa [#allocation3], 1
    %s4104 = scalar_lea.sflag [#allocation3], 1
    %4105 = vsyncpa %s4104, 1

</llo_original>
